<compile_context>
chip_gen: v6e
topology: v6e:2x2x1
jax: 0.10.0
libtpu: 0.0.40
codegen_flags: <defaults>
</compile_context>

<pallas_src>
import functools
import math

import jax
import jax.numpy as jnp
from jax import lax
from jax.experimental import pallas as pl
from jax.experimental.pallas import tpu as pltpu

# ----------------------------- config -----------------------------
NUM_CLASSES = 1
NUM_INSTANCES = 8          # small instead of 100 for the demo
NUM_FEATURES = 32
NUM_BINS = 11
SIGMA = 0.05
BAG_BATCH = 2              # number of bags
IMG_C, IMG_H, IMG_W = 3, 16, 16
CHW = IMG_C * IMG_H * IMG_W
STEM_FEATURES = 512                     # resnet18 fc.in_features
FK = NUM_FEATURES * NUM_BINS            # 352 (lane axis of the pooled representation)
HEAD_PAD = 128                          # lane-dense padding for the num_classes=1 head
H1, H2 = 384, 192                       # MLP hidden sizes


# -------------------------- fused kernel ---------------------------
def _fused_forward_kernel(x_ref, stem_wq_ref, consts_ref, fc_w_ref,
                          l1_w_ref, l2_w_ref, l3_w_ref, out_ref, *, beta):
    f32 = jnp.float32
    bf16 = jnp.bfloat16

    # One packed (8, 512) f32 block holds every small row constant (1 DMA).
    consts = consts_ref[...]
    stem_b = consts[0:1, :]                     # (1, 512)
    stem_s = consts[1:2, :]                     # (1, 512) int8 dequant scale (per out col)
    fc_b   = consts[2:3, :NUM_FEATURES]         # (1, 32)
    sp     = consts[3:4, :FK]                   # (1, 352) sample points, f-major
    l1_b   = consts[4:5, :H1]                   # (1, 384)
    l2_b   = consts[5:6, :H2]                   # (1, 192)
    l3_b   = consts[6:7, :HEAD_PAD]             # (1, 128)

    # ---- FeatureExtractor (resnet18 stand-in stem + fc head) ----
    # int8 stem weight -> bf16 (exact) -> native bf16 MXU on all generations;
    # per-output-channel dequant applied after the dot.
    xb = x_ref[0]                                                     # (NI, CHW) bf16
    wq = stem_wq_ref[...].astype(bf16)                                # (CHW, 512)
    h = jnp.dot(xb, wq, preferred_element_type=f32) * stem_s + stem_b
    h = jnp.maximum(h, 0.0)                                           # (NI, 512) f32
    feats = jnp.dot(h.astype(bf16), fc_w_ref[...], preferred_element_type=f32) + fc_b
    feats = jnp.maximum(feats, 0.0)                                   # (NI, F) f32

    # ---- DistributionPoolingFilter for this bag, lane-dense on the F*K axis ----
    # 0/1 constants generated in-kernel (no HBM traffic).  Group id of each of
    # the F*K lanes is lane // NUM_BINS, computed with a safe float floor trick.
    inv_k = 1.0 / NUM_BINS
    gc = jnp.floor((lax.broadcasted_iota(jnp.int32, (1, FK), 1).astype(f32) + 0.5) * inv_k)
    fr = lax.broadcasted_iota(jnp.int32, (NUM_FEATURES, 1), 0).astype(f32)
    expand = (fr == gc).astype(f32)                                   # (F, F*K) 0/1 broadcast mask
    gr = jnp.floor((lax.broadcasted_iota(jnp.int32, (FK, 1), 0).astype(f32) + 0.5) * inv_k)
    blockones = (gr == gc).astype(f32)                                # (F*K, F*K) block-diag ones
                                                                      # == collapse @ expand (fused)

    feats_fk = jnp.dot(feats, expand, preferred_element_type=f32)     # (NI, F*K)
    diff = sp - feats_fk
    # `alfa` scale dropped: it cancels exactly in the per-feature normalization.
    kd = jnp.exp(beta * (diff * diff))                                # (NI, F*K) f32
    pooled = jnp.sum(kd, axis=0, keepdims=True)                       # (1, F*K) sum over instances
    # bin-sum + broadcast-back fused into one block-diagonal matmul
    norm_fk = jnp.dot(pooled, blockones, preferred_element_type=f32)  # (1, F*K)
    flat = pooled / (norm_fk + 1e-12)      # exact divide + eps; f-major == torch.flatten order

    # ---- RepresentationTransformation (Dropout = identity in eval) ----
    h1 = jnp.maximum(jnp.dot(flat.astype(bf16), l1_w_ref[...],
                             preferred_element_type=f32) + l1_b, 0.0)     # (1, 384)
    h2 = jnp.maximum(jnp.dot(h1.astype(bf16), l2_w_ref[...],
                             preferred_element_type=f32) + l2_b, 0.0)     # (1, 192)
    out = jnp.dot(h2.astype(bf16), l3_w_ref[...],
                  preferred_element_type=f32) + l3_b                      # (1, 128)
    out_ref[0, :, :] = out.astype(out_ref.dtype)                          # lane-dense store


# --------------------------- parameters ----------------------------
def _init_linear(key, fan_in, fan_out):
    """PyTorch-style uniform(-1/sqrt(fan_in), 1/sqrt(fan_in)) init (f32)."""
    kw, kb = jax.random.split(key)
    bound = 1.0 / math.sqrt(fan_in)
    w = jax.random.uniform(kw, (fan_in, fan_out), jnp.float32, -bound, bound)
    b = jax.random.uniform(kb, (1, fan_out), jnp.float32, -bound, bound)
    return w, b


def _pad_row(v, width=STEM_FEATURES):
    v = jnp.asarray(v, jnp.float32).reshape(-1)
    return jnp.zeros((width,), jnp.float32).at[: v.shape[0]].set(v)


def init_params(key):
    keys = jax.random.split(key, 5)
    p = {}
    # synthetic backbone stem: flatten(C*H*W) -> 512, stored int8 + per-col f32 scale
    stem_w, stem_b = _init_linear(keys[0], CHW, STEM_FEATURES)
    stem_scale = jnp.maximum(jnp.max(jnp.abs(stem_w), axis=0, keepdims=True), 1e-8) / 127.0
    p["stem_wq"] = jnp.clip(jnp.round(stem_w / stem_scale), -127, 127).astype(jnp.int8)
    # resnet18.fc replacement: Linear(512, num_features)
    fc_w, fc_b = _init_linear(keys[1], STEM_FEATURES, NUM_FEATURES)
    p["fc_w"] = fc_w.astype(jnp.bfloat16)
    # representation transformation MLP: (F*K) -> 384 -> 192 -> num_classes
    l1_w, l1_b = _init_linear(keys[2], FK, H1)
    l2_w, l2_b = _init_linear(keys[3], H1, H2)
    l3_w, l3_b = _init_linear(keys[4], H2, NUM_CLASSES)
    p["l1_w"] = l1_w.astype(jnp.bfloat16)
    p["l2_w"] = l2_w.astype(jnp.bfloat16)
    # pad the 1-wide head to a full 128-lane block (sliced back in the wrapper)
    p["l3_w"] = (jnp.zeros((H2, HEAD_PAD), jnp.float32)
                 .at[:, :NUM_CLASSES].set(l3_w)).astype(jnp.bfloat16)
    l3_b_pad = jnp.zeros((1, HEAD_PAD), jnp.float32).at[:, :NUM_CLASSES].set(l3_b)
    # DistributionPoolingFilter sample points, laid out f-major on the F*K lane axis
    sp = jnp.linspace(0.0, 1.0, NUM_BINS, dtype=jnp.float32)
    sp_flat = jnp.tile(sp, NUM_FEATURES)                              # sp_flat[f*K+k] = sp[k]
    # pack all small row constants into a single (8, 512) f32 block -> one DMA
    p["consts"] = jnp.stack([
        _pad_row(stem_b), _pad_row(stem_scale), _pad_row(fc_b), _pad_row(sp_flat),
        _pad_row(l1_b), _pad_row(l2_b), _pad_row(l3_b_pad),
        jnp.zeros((STEM_FEATURES,), jnp.float32)])
    return p


# --------------------------- full model ----------------------------
def _cost_estimate(args, out_shape):
    per_bag_flops = 2 * (NUM_INSTANCES * CHW * STEM_FEATURES
                         + NUM_INSTANCES * STEM_FEATURES * NUM_FEATURES
                         + NUM_INSTANCES * NUM_FEATURES * FK
                         + FK * FK
                         + FK * H1 + H1 * H2 + H2 * HEAD_PAD)
    flops = BAG_BATCH * per_bag_flops
    transcendentals = BAG_BATCH * NUM_INSTANCES * FK
    nbytes = sum(math.prod(a.shape) * jnp.dtype(a.dtype).itemsize for a in args)
    nbytes += math.prod(out_shape) * 4
    return pl.CostEstimate(flops=flops, transcendentals=transcendentals,
                           bytes_accessed=nbytes)


@jax.jit
def model_forward(x, params):
    # bf16 activations at the call boundary: halves the x DMA bytes.
    x_b = x.reshape(BAG_BATCH, NUM_INSTANCES, CHW).astype(jnp.bfloat16)
    beta = -1.0 / (2.0 * SIGMA ** 2)
    args = (x_b, params["stem_wq"], params["consts"], params["fc_w"],
            params["l1_w"], params["l2_w"], params["l3_w"])
    out_shape = (BAG_BATCH, 1, HEAD_PAD)
    grid_spec = pltpu.PrefetchScalarGridSpec(
        num_scalar_prefetch=0,
        grid=(BAG_BATCH,),                      # one bag per grid step (shards over v7x TCs)
        in_specs=[
            pl.BlockSpec((1, NUM_INSTANCES, CHW), lambda b: (b, 0, 0)),
            # weights / constants: constant block index -> stay resident, no re-DMA
            pl.BlockSpec((CHW, STEM_FEATURES), lambda b: (0, 0)),
            pl.BlockSpec((8, STEM_FEATURES), lambda b: (0, 0)),
            pl.BlockSpec((STEM_FEATURES, NUM_FEATURES), lambda b: (0, 0)),
            pl.BlockSpec((FK, H1), lambda b: (0, 0)),
            pl.BlockSpec((H1, H2), lambda b: (0, 0)),
            pl.BlockSpec((H2, HEAD_PAD), lambda b: (0, 0)),
        ],
        out_specs=pl.BlockSpec((1, 1, HEAD_PAD), lambda b: (b, 0, 0)),
    )
    out_pad = pl.pallas_call(
        functools.partial(_fused_forward_kernel, beta=beta),
        out_shape=jax.ShapeDtypeStruct(out_shape, jnp.float32),
        grid_spec=grid_spec,
        cost_estimate=_cost_estimate(args, out_shape),
        compiler_params=pltpu.CompilerParams(
            dimension_semantics=("parallel",),
            vmem_limit_bytes=8 * 1024 * 1024),
    )(*args)
    return out_pad[:, 0, :NUM_CLASSES]                                # (B, num_classes)


# ------------------------------ main -------------------------------
if __name__ == "__main__":
    key = jax.random.PRNGKey(0)
    k_param, k_x = jax.random.split(key)
    params = init_params(k_param)

    x = jax.random.normal(
        k_x, (BAG_BATCH * NUM_INSTANCES, IMG_C, IMG_H, IMG_W), jnp.float32)

    out = jax.block_until_ready(model_forward(x, params))

    assert out.shape == (BAG_BATCH, NUM_CLASSES), out.shape
    assert bool(jnp.all(jnp.isfinite(out)))
    print("KERNEL_OK")
</pallas_src>

<mosaic_0001>
module attributes {stable_mosaic.version = 11 : i64} {
  func.func @_fused_forward_kernel(%arg0: i32, %arg1: memref<1x8x768xbf16, #tpu.memory_space<vmem>>, %arg2: memref<768x512xi8, #tpu.memory_space<vmem>>, %arg3: memref<8x512xf32, #tpu.memory_space<vmem>>, %arg4: memref<512x32xbf16, #tpu.memory_space<vmem>>, %arg5: memref<352x384xbf16, #tpu.memory_space<vmem>>, %arg6: memref<384x192xbf16, #tpu.memory_space<vmem>>, %arg7: memref<192x128xbf16, #tpu.memory_space<vmem>>, %arg8: memref<1x1x128xf32, #tpu.memory_space<vmem>>) attributes {dimension_semantics = [#tpu.dimension_semantics<parallel>], iteration_bounds = array<i64: 2>, scalar_prefetch = 0 : i64, scratch_operands = 0 : i64, tpu.core_type = #tpu.core_type<tc>, window_params = [{transform_indices = @transform_0, window_bounds = array<i64: 1, 8, 768>}, {pipeline_mode = #tpu.pipeline_mode<synchronous>, transform_indices = @transform_1, window_bounds = array<i64: 768, 512>}, {pipeline_mode = #tpu.pipeline_mode<synchronous>, transform_indices = @transform_2, window_bounds = array<i64: 8, 512>}, {pipeline_mode = #tpu.pipeline_mode<synchronous>, transform_indices = @transform_3, window_bounds = array<i64: 512, 32>}, {pipeline_mode = #tpu.pipeline_mode<synchronous>, transform_indices = @transform_4, window_bounds = array<i64: 352, 384>}, {pipeline_mode = #tpu.pipeline_mode<synchronous>, transform_indices = @transform_5, window_bounds = array<i64: 384, 192>}, {pipeline_mode = #tpu.pipeline_mode<synchronous>, transform_indices = @transform_6, window_bounds = array<i64: 192, 128>}, {transform_indices = @transform_7, window_bounds = array<i64: 1, 1, 128>}]} {
    %c0 = arith.constant 0 : index
    %c0_0 = arith.constant 0 : index
    %0 = vector.load %arg3[%c0, %c0_0] : memref<8x512xf32, #tpu.memory_space<vmem>>, vector<8x512xf32>
    %1 = vector.extract_strided_slice %0 {offsets = [0, 0], sizes = [1, 512], strides = [1, 1]} : vector<8x512xf32> to vector<1x512xf32>
    %2 = vector.extract_strided_slice %0 {offsets = [1, 0], sizes = [1, 512], strides = [1, 1]} : vector<8x512xf32> to vector<1x512xf32>
    %3 = vector.extract_strided_slice %0 {offsets = [2, 0], sizes = [1, 32], strides = [1, 1]} : vector<8x512xf32> to vector<1x32xf32>
    %4 = vector.extract_strided_slice %0 {offsets = [3, 0], sizes = [1, 352], strides = [1, 1]} : vector<8x512xf32> to vector<1x352xf32>
    %5 = vector.extract_strided_slice %0 {offsets = [4, 0], sizes = [1, 384], strides = [1, 1]} : vector<8x512xf32> to vector<1x384xf32>
    %6 = vector.extract_strided_slice %0 {offsets = [5, 0], sizes = [1, 192], strides = [1, 1]} : vector<8x512xf32> to vector<1x192xf32>
    %7 = vector.extract_strided_slice %0 {offsets = [6, 0], sizes = [1, 128], strides = [1, 1]} : vector<8x512xf32> to vector<1x128xf32>
    %c0_1 = arith.constant 0 : index
    %c0_2 = arith.constant 0 : index
    %c0_3 = arith.constant 0 : index
    %8 = vector.load %arg1[%c0_1, %c0_2, %c0_3] : memref<1x8x768xbf16, #tpu.memory_space<vmem>>, vector<1x8x768xbf16>
    %9 = vector.shape_cast %8 : vector<1x8x768xbf16> to vector<8x768xbf16>
    %c0_4 = arith.constant 0 : index
    %c0_5 = arith.constant 0 : index
    %10 = vector.load %arg2[%c0_4, %c0_5] : memref<768x512xi8, #tpu.memory_space<vmem>>, vector<768x512xi8>
    %11 = arith.sitofp %10 : vector<768x512xi8> to vector<768x512xbf16>
    %cst = arith.constant dense<0.000000e+00> : vector<8x512xf32>
    %12 = tpu.matmul %9, %11, %cst {dimension_numbers = #tpu.dot_dimension_numbers<[1], [0], [0], [1], [0, 0, 1, 1], [], []>} : vector<8x768xbf16>, vector<768x512xbf16>, vector<8x512xf32> -> vector<8x512xf32>
    %13 = vector.broadcast %2 : vector<1x512xf32> to vector<8x512xf32>
    %14 = arith.mulf %12, %13 : vector<8x512xf32>
    %15 = vector.broadcast %1 : vector<1x512xf32> to vector<8x512xf32>
    %16 = arith.addf %14, %15 : vector<8x512xf32>
    %cst_6 = arith.constant 0.000000e+00 : f32
    %17 = vector.broadcast %cst_6 : f32 to vector<8x512xf32>
    %18 = arith.maximumf %16, %17 : vector<8x512xf32>
    %19 = arith.truncf %18 : vector<8x512xf32> to vector<8x512xbf16>
    %c0_7 = arith.constant 0 : index
    %c0_8 = arith.constant 0 : index
    %20 = vector.load %arg4[%c0_7, %c0_8] : memref<512x32xbf16, #tpu.memory_space<vmem>>, vector<512x32xbf16>
    %cst_9 = arith.constant dense<0.000000e+00> : vector<8x32xf32>
    %21 = tpu.matmul %19, %20, %cst_9 {dimension_numbers = #tpu.dot_dimension_numbers<[1], [0], [0], [1], [0, 0, 1, 1], [], []>} : vector<8x512xbf16>, vector<512x32xbf16>, vector<8x32xf32> -> vector<8x32xf32>
    %22 = vector.broadcast %3 : vector<1x32xf32> to vector<8x32xf32>
    %23 = arith.addf %21, %22 : vector<8x32xf32>
    %cst_10 = arith.constant 0.000000e+00 : f32
    %24 = vector.broadcast %cst_10 : f32 to vector<8x32xf32>
    %25 = arith.maximumf %23, %24 : vector<8x32xf32>
    %26 = tpu.iota {dimensions = array<i32: 1>} : vector<1x352xi32>
    %27 = arith.sitofp %26 : vector<1x352xi32> to vector<1x352xf32>
    %cst_11 = arith.constant 5.000000e-01 : f32
    %28 = vector.broadcast %cst_11 : f32 to vector<1x352xf32>
    %29 = arith.addf %27, %28 : vector<1x352xf32>
    %cst_12 = arith.constant 0.0909090936 : f32
    %30 = vector.broadcast %cst_12 : f32 to vector<1x352xf32>
    %31 = arith.mulf %29, %30 : vector<1x352xf32>
    %32 = math.floor %31 : vector<1x352xf32>
    %33 = tpu.iota {dimensions = array<i32: 0>} : vector<32x1xi32>
    %34 = arith.sitofp %33 : vector<32x1xi32> to vector<32x1xf32>
    %35 = vector.broadcast %34 : vector<32x1xf32> to vector<32x352xf32>
    %36 = vector.broadcast %32 : vector<1x352xf32> to vector<32x352xf32>
    %37 = arith.cmpf oeq, %35, %36 : vector<32x352xf32>
    %38 = arith.extui %37 : vector<32x352xi1> to vector<32x352xi32>
    %39 = arith.sitofp %38 : vector<32x352xi32> to vector<32x352xf32>
    %40 = tpu.iota {dimensions = array<i32: 0>} : vector<352x1xi32>
    %41 = arith.sitofp %40 : vector<352x1xi32> to vector<352x1xf32>
    %cst_13 = arith.constant 5.000000e-01 : f32
    %42 = vector.broadcast %cst_13 : f32 to vector<352x1xf32>
    %43 = arith.addf %41, %42 : vector<352x1xf32>
    %cst_14 = arith.constant 0.0909090936 : f32
    %44 = vector.broadcast %cst_14 : f32 to vector<352x1xf32>
    %45 = arith.mulf %43, %44 : vector<352x1xf32>
    %46 = math.floor %45 : vector<352x1xf32>
    %47 = vector.broadcast %46 : vector<352x1xf32> to vector<352x352xf32>
    %48 = vector.broadcast %32 : vector<1x352xf32> to vector<352x352xf32>
    %49 = arith.cmpf oeq, %47, %48 : vector<352x352xf32>
    %50 = arith.extui %49 : vector<352x352xi1> to vector<352x352xi32>
    %51 = arith.sitofp %50 : vector<352x352xi32> to vector<352x352xf32>
    %cst_15 = arith.constant dense<0.000000e+00> : vector<8x352xf32>
    %52 = tpu.matmul %25, %39, %cst_15 {dimension_numbers = #tpu.dot_dimension_numbers<[1], [0], [0], [1], [0, 0, 1, 1], [], []>} : vector<8x32xf32>, vector<32x352xf32>, vector<8x352xf32> -> vector<8x352xf32>
    %53 = vector.broadcast %4 : vector<1x352xf32> to vector<8x352xf32>
    %54 = arith.subf %53, %52 : vector<8x352xf32>
    %55 = arith.mulf %54, %54 : vector<8x352xf32>
    %cst_16 = arith.constant -2.000000e+02 : f32
    %56 = vector.broadcast %cst_16 : f32 to vector<8x352xf32>
    %57 = arith.mulf %56, %55 : vector<8x352xf32>
    %58 = math.exp %57 : vector<8x352xf32>
    %cst_17 = arith.constant dense<0.000000e+00> : vector<352xf32>
    %59 = vector.multi_reduction <add>, %58, %cst_17 [0] : vector<8x352xf32> to vector<352xf32>
    %60 = vector.shape_cast %59 : vector<352xf32> to vector<1x352xf32>
    %cst_18 = arith.constant dense<0.000000e+00> : vector<1x352xf32>
    %61 = tpu.matmul %60, %51, %cst_18 {dimension_numbers = #tpu.dot_dimension_numbers<[1], [0], [0], [1], [0, 0, 1, 1], [], []>} : vector<1x352xf32>, vector<352x352xf32>, vector<1x352xf32> -> vector<1x352xf32>
    %cst_19 = arith.constant 9.99999996E-13 : f32
    %62 = vector.broadcast %cst_19 : f32 to vector<1x352xf32>
    %63 = arith.addf %61, %62 : vector<1x352xf32>
    %64 = arith.divf %60, %63 : vector<1x352xf32>
    %65 = arith.truncf %64 : vector<1x352xf32> to vector<1x352xbf16>
    %c0_20 = arith.constant 0 : index
    %c0_21 = arith.constant 0 : index
    %66 = vector.load %arg5[%c0_20, %c0_21] : memref<352x384xbf16, #tpu.memory_space<vmem>>, vector<352x384xbf16>
    %cst_22 = arith.constant dense<0.000000e+00> : vector<1x384xf32>
    %67 = tpu.matmul %65, %66, %cst_22 {dimension_numbers = #tpu.dot_dimension_numbers<[1], [0], [0], [1], [0, 0, 1, 1], [], []>} : vector<1x352xbf16>, vector<352x384xbf16>, vector<1x384xf32> -> vector<1x384xf32>
    %68 = arith.addf %67, %5 : vector<1x384xf32>
    %cst_23 = arith.constant 0.000000e+00 : f32
    %69 = vector.broadcast %cst_23 : f32 to vector<1x384xf32>
    %70 = arith.maximumf %68, %69 : vector<1x384xf32>
    %71 = arith.truncf %70 : vector<1x384xf32> to vector<1x384xbf16>
    %c0_24 = arith.constant 0 : index
    %c0_25 = arith.constant 0 : index
    %72 = vector.load %arg6[%c0_24, %c0_25] : memref<384x192xbf16, #tpu.memory_space<vmem>>, vector<384x192xbf16>
    %cst_26 = arith.constant dense<0.000000e+00> : vector<1x192xf32>
    %73 = tpu.matmul %71, %72, %cst_26 {dimension_numbers = #tpu.dot_dimension_numbers<[1], [0], [0], [1], [0, 0, 1, 1], [], []>} : vector<1x384xbf16>, vector<384x192xbf16>, vector<1x192xf32> -> vector<1x192xf32>
    %74 = arith.addf %73, %6 : vector<1x192xf32>
    %cst_27 = arith.constant 0.000000e+00 : f32
    %75 = vector.broadcast %cst_27 : f32 to vector<1x192xf32>
    %76 = arith.maximumf %74, %75 : vector<1x192xf32>
    %77 = arith.truncf %76 : vector<1x192xf32> to vector<1x192xbf16>
    %c0_28 = arith.constant 0 : index
    %c0_29 = arith.constant 0 : index
    %78 = vector.load %arg7[%c0_28, %c0_29] : memref<192x128xbf16, #tpu.memory_space<vmem>>, vector<192x128xbf16>
    %cst_30 = arith.constant dense<0.000000e+00> : vector<1x128xf32>
    %79 = tpu.matmul %77, %78, %cst_30 {dimension_numbers = #tpu.dot_dimension_numbers<[1], [0], [0], [1], [0, 0, 1, 1], [], []>} : vector<1x192xbf16>, vector<192x128xbf16>, vector<1x128xf32> -> vector<1x128xf32>
    %80 = arith.addf %79, %7 : vector<1x128xf32>
    %c0_31 = arith.constant 0 : index
    %c0_32 = arith.constant 0 : index
    %c0_33 = arith.constant 0 : index
    %81 = vector.load %arg8[%c0_31, %c0_32, %c0_33] : memref<1x1x128xf32, #tpu.memory_space<vmem>>, vector<1x1x128xf32>
    %82 = vector.shape_cast %81 : vector<1x1x128xf32> to vector<1x128xf32>
    %83 = vector.shape_cast %80 : vector<1x128xf32> to vector<1x1x128xf32>
    tpu.vector_store %arg8[%c0_31, %c0_32, %c0_33], %83 {strides = array<i32>} : memref<1x1x128xf32, #tpu.memory_space<vmem>>, vector<1x1x128xf32>,
    return
  }
  func.func @transform_0(%arg0: i32) -> (i32, i32, i32) {
    %c0_i32 = arith.constant 0 : i32
    %c0_i32_0 = arith.constant 0 : i32
    %c0_i32_1 = arith.constant 0 : i32
    return %arg0, %c0_i32, %c0_i32_0 : i32, i32, i32
  }
  func.func @transform_1(%arg0: i32) -> (i32, i32) {
    %c0_i32 = arith.constant 0 : i32
    %c0_i32_0 = arith.constant 0 : i32
    %c0_i32_1 = arith.constant 0 : i32
    return %c0_i32, %c0_i32_0 : i32, i32
  }
  func.func @transform_2(%arg0: i32) -> (i32, i32) {
    %c0_i32 = arith.constant 0 : i32
    %c0_i32_0 = arith.constant 0 : i32
    %c0_i32_1 = arith.constant 0 : i32
    return %c0_i32, %c0_i32_0 : i32, i32
  }
  func.func @transform_3(%arg0: i32) -> (i32, i32) {
    %c0_i32 = arith.constant 0 : i32
    %c0_i32_0 = arith.constant 0 : i32
    %c0_i32_1 = arith.constant 0 : i32
    return %c0_i32, %c0_i32_0 : i32, i32
  }
  func.func @transform_4(%arg0: i32) -> (i32, i32) {
    %c0_i32 = arith.constant 0 : i32
    %c0_i32_0 = arith.constant 0 : i32
    %c0_i32_1 = arith.constant 0 : i32
    return %c0_i32, %c0_i32_0 : i32, i32
  }
  func.func @transform_5(%arg0: i32) -> (i32, i32) {
    %c0_i32 = arith.constant 0 : i32
    %c0_i32_0 = arith.constant 0 : i32
    %c0_i32_1 = arith.constant 0 : i32
    return %c0_i32, %c0_i32_0 : i32, i32
  }
  func.func @transform_6(%arg0: i32) -> (i32, i32) {
    %c0_i32 = arith.constant 0 : i32
    %c0_i32_0 = arith.constant 0 : i32
    %c0_i32_1 = arith.constant 0 : i32
    return %c0_i32, %c0_i32_0 : i32, i32
  }
  func.func @transform_7(%arg0: i32) -> (i32, i32, i32) {
    %c0_i32 = arith.constant 0 : i32
    %c0_i32_0 = arith.constant 0 : i32
    %c0_i32_1 = arith.constant 0 : i32
    return %arg0, %c0_i32, %c0_i32_0 : i32, i32, i32
  }
}

</mosaic_0001>

<llo_original>
// kernel: model_forward.1
$region0: #{model_forward.1}
  #allocation0 [shape = 'u32[]', space=smem, size = 0x4, offset = 0x4, fixed_abs, tag = 'smem constant byte address 0x4 - core index']
  #allocation1 [shape = 'u32[144,128]{1,0:T(1,128)}', space=vmem, size = 0x12000, scoped, tag = 'internal scratch']
  %s0 = inlined_call_operand.vmem [shape: bf16[2,8,768], index: 0, kind: input, shape index: {}]
  %s1 = inlined_call_operand.vmem [shape: s8[768,512], index: 1, kind: input, shape index: {}]
  %s2 = inlined_call_operand.vmem [shape: f32[8,512], index: 2, kind: input, shape index: {}]
  %s3 = inlined_call_operand.vmem [shape: bf16[512,32], index: 3, kind: input, shape index: {}]
  %s4 = inlined_call_operand.vmem [shape: bf16[352,384], index: 4, kind: input, shape index: {}]
  %s5 = inlined_call_operand.vmem [shape: bf16[384,192], index: 5, kind: input, shape index: {}]
  %s6 = inlined_call_operand.vmem [shape: bf16[192,128], index: 6, kind: input, shape index: {}]
  %s7 = inlined_call_operand.vmem [shape: f32[2,1,128], index: 7, kind: output, shape index: {}]
  %s8 = sld [smem:[#allocation0]]
  $region61: #{model_forward.1} parent=0
    _
  %s10 = ssub.s32 1, %s8
  %s11 = scalar_select 0, %s10, %s8
  loop: start=0, step=1, limit=4
  $region2: #{model_forward.1} parent=0 // loop_pre_header
    _
  $region3: #{model_forward.1} parent=0 // loop_header
    %s13 = sphi 0, %s17
    %p14 = scmp.ge.s32.totalorder %s13, 4
    %s23 = sphi 0, %s25
    %s26 = sphi 0, %s23
    %s27 = sphi 0, %s26
    %s43 = sphi 0, %s27
    %s47 = sphi 0, %s47
    %s49 = sphi 0, %s47
    %s50 = sphi 0, %s49
    %s64 = sphi 0, %s50
    %s68 = sphi 0, %s68
    %s70 = sphi 0, %s68
    %s71 = sphi 0, %s70
    %s85 = sphi 0, %s71
    %s89 = sphi 0, %s89
    %s91 = sphi 0, %s89
    %s92 = sphi 0, %s91
    %s106 = sphi 0, %s92
    %s110 = sphi 0, %s110
    %s112 = sphi 0, %s110
    %s113 = sphi 0, %s112
    %s127 = sphi 0, %s113
    %s131 = sphi 0, %s131
    %s133 = sphi 0, %s131
    %s134 = sphi 0, %s133
    %s148 = sphi 0, %s134
    %s152 = sphi 0, %s152
    %s154 = sphi 0, %s152
    %s155 = sphi 0, %s154
    %s169 = sphi 0, %s155
    %s175 = sphi 0, %s177
    %s178 = sphi 0, %s175
    %s179 = sphi 0, %s178
    %s195 = sphi 0, %s179
  $region4: #{model_forward.1} parent=0 // loop_header_branch
    %16 = sbr.rel (%p14) target = $region8
  $region5: #{model_forward.1} parent=0 // loop_body
    %s18 = ssub.s32 %s13, 1
    %s19 = ssub.s32 %s13, 2
    %s20 = sadd.s32 %s13, 1
    %s21 = ssub.s32 %s13, %s20
    %p22 = scmp.eq.s32.totalorder %s21, 0
    %s24 = sadd.s32 %s23, 1
    %s25 = scalar_select %p22, %s23, %s24
    %p28 = pneg %p22
    %p29 = scmp.eq.s32.totalorder %s13, 1
    %p30 = por %p28, %p29
    %p31 = scmp.ne.s32.totalorder %s23, %s26
    %p32 = scmp.eq.s32.totalorder %s13, 0
    %p33 = por %p31, %p32
    %p34 = scmp.ne.s32.totalorder %s23, %s26
    %p35 = scmp.eq.s32.totalorder %s18, 1
    %p36 = por %p34, %p35
    %p37 = scmp.ne.s32.totalorder %s26, %s27
    %p38 = scmp.eq.s32.totalorder %s18, 0
    %p39 = por %p37, %p38
    %p40 = scmp.ne.s32.totalorder %s26, %s27
    %p41 = scmp.eq.s32.totalorder %s19, 1
    %p42 = por %p40, %p41
    %p44 = scmp.ne.s32.totalorder %s27, %s43
    %p45 = scmp.eq.s32.totalorder %s19, 0
    %p46 = por %p44, %p45
    %s48 = sadd.s32 %s47, 1
    %p51 = scmp.eq.s32.totalorder %s13, 1
    %p52 = scmp.ne.s32.totalorder %s47, %s49
    %p53 = scmp.eq.s32.totalorder %s13, 0
    %p54 = por %p52, %p53
    %p55 = scmp.ne.s32.totalorder %s47, %s49
    %p56 = scmp.eq.s32.totalorder %s18, 1
    %p57 = por %p55, %p56
    %p58 = scmp.ne.s32.totalorder %s49, %s50
    %p59 = scmp.eq.s32.totalorder %s18, 0
    %p60 = por %p58, %p59
    %p61 = scmp.ne.s32.totalorder %s49, %s50
    %p62 = scmp.eq.s32.totalorder %s19, 1
    %p63 = por %p61, %p62
    %p65 = scmp.ne.s32.totalorder %s50, %s64
    %p66 = scmp.eq.s32.totalorder %s19, 0
    %p67 = por %p65, %p66
    %s69 = sadd.s32 %s68, 1
    %p72 = scmp.eq.s32.totalorder %s13, 1
    %p73 = scmp.ne.s32.totalorder %s68, %s70
    %p74 = scmp.eq.s32.totalorder %s13, 0
    %p75 = por %p73, %p74
    %p76 = scmp.ne.s32.totalorder %s68, %s70
    %p77 = scmp.eq.s32.totalorder %s18, 1
    %p78 = por %p76, %p77
    %p79 = scmp.ne.s32.totalorder %s70, %s71
    %p80 = scmp.eq.s32.totalorder %s18, 0
    %p81 = por %p79, %p80
    %p82 = scmp.ne.s32.totalorder %s70, %s71
    %p83 = scmp.eq.s32.totalorder %s19, 1
    %p84 = por %p82, %p83
    %p86 = scmp.ne.s32.totalorder %s71, %s85
    %p87 = scmp.eq.s32.totalorder %s19, 0
    %p88 = por %p86, %p87
    %s90 = sadd.s32 %s89, 1
    %p93 = scmp.eq.s32.totalorder %s13, 1
    %p94 = scmp.ne.s32.totalorder %s89, %s91
    %p95 = scmp.eq.s32.totalorder %s13, 0
    %p96 = por %p94, %p95
    %p97 = scmp.ne.s32.totalorder %s89, %s91
    %p98 = scmp.eq.s32.totalorder %s18, 1
    %p99 = por %p97, %p98
    %p100 = scmp.ne.s32.totalorder %s91, %s92
    %p101 = scmp.eq.s32.totalorder %s18, 0
    %p102 = por %p100, %p101
    %p103 = scmp.ne.s32.totalorder %s91, %s92
    %p104 = scmp.eq.s32.totalorder %s19, 1
    %p105 = por %p103, %p104
    %p107 = scmp.ne.s32.totalorder %s92, %s106
    %p108 = scmp.eq.s32.totalorder %s19, 0
    %p109 = por %p107, %p108
    %s111 = sadd.s32 %s110, 1
    %p114 = scmp.eq.s32.totalorder %s13, 1
    %p115 = scmp.ne.s32.totalorder %s110, %s112
    %p116 = scmp.eq.s32.totalorder %s13, 0
    %p117 = por %p115, %p116
    %p118 = scmp.ne.s32.totalorder %s110, %s112
    %p119 = scmp.eq.s32.totalorder %s18, 1
    %p120 = por %p118, %p119
    %p121 = scmp.ne.s32.totalorder %s112, %s113
    %p122 = scmp.eq.s32.totalorder %s18, 0
    %p123 = por %p121, %p122
    %p124 = scmp.ne.s32.totalorder %s112, %s113
    %p125 = scmp.eq.s32.totalorder %s19, 1
    %p126 = por %p124, %p125
    %p128 = scmp.ne.s32.totalorder %s113, %s127
    %p129 = scmp.eq.s32.totalorder %s19, 0
    %p130 = por %p128, %p129
    %s132 = sadd.s32 %s131, 1
    %p135 = scmp.eq.s32.totalorder %s13, 1
    %p136 = scmp.ne.s32.totalorder %s131, %s133
    %p137 = scmp.eq.s32.totalorder %s13, 0
    %p138 = por %p136, %p137
    %p139 = scmp.ne.s32.totalorder %s131, %s133
    %p140 = scmp.eq.s32.totalorder %s18, 1
    %p141 = por %p139, %p140
    %p142 = scmp.ne.s32.totalorder %s133, %s134
    %p143 = scmp.eq.s32.totalorder %s18, 0
    %p144 = por %p142, %p143
    %p145 = scmp.ne.s32.totalorder %s133, %s134
    %p146 = scmp.eq.s32.totalorder %s19, 1
    %p147 = por %p145, %p146
    %p149 = scmp.ne.s32.totalorder %s134, %s148
    %p150 = scmp.eq.s32.totalorder %s19, 0
    %p151 = por %p149, %p150
    %s153 = sadd.s32 %s152, 1
    %p156 = scmp.eq.s32.totalorder %s13, 1
    %p157 = scmp.ne.s32.totalorder %s152, %s154
    %p158 = scmp.eq.s32.totalorder %s13, 0
    %p159 = por %p157, %p158
    %p160 = scmp.ne.s32.totalorder %s152, %s154
    %p161 = scmp.eq.s32.totalorder %s18, 1
    %p162 = por %p160, %p161
    %p163 = scmp.ne.s32.totalorder %s154, %s155
    %p164 = scmp.eq.s32.totalorder %s18, 0
    %p165 = por %p163, %p164
    %p166 = scmp.ne.s32.totalorder %s154, %s155
    %p167 = scmp.eq.s32.totalorder %s19, 1
    %p168 = por %p166, %p167
    %p170 = scmp.ne.s32.totalorder %s155, %s169
    %p171 = scmp.eq.s32.totalorder %s19, 0
    %p172 = por %p170, %p171
    %s173 = ssub.s32 %s13, %s20
    %p174 = scmp.eq.s32.totalorder %s173, 0
    %s176 = sadd.s32 %s175, 1
    %s177 = scalar_select %p174, %s175, %s176
    %p180 = pneg %p174
    %p181 = scmp.eq.s32.totalorder %s13, 1
    %p182 = por %p180, %p181
    %p183 = scmp.ne.s32.totalorder %s175, %s178
    %p184 = scmp.eq.s32.totalorder %s13, 0
    %p185 = por %p183, %p184
    %p186 = scmp.ne.s32.totalorder %s175, %s178
    %p187 = scmp.eq.s32.totalorder %s18, 1
    %p188 = por %p186, %p187
    %p189 = scmp.ne.s32.totalorder %s178, %s179
    %p190 = scmp.eq.s32.totalorder %s18, 0
    %p191 = por %p189, %p190
    %p192 = scmp.ne.s32.totalorder %s178, %s179
    %p193 = scmp.eq.s32.totalorder %s19, 1
    %p194 = por %p192, %p193
    %p196 = scmp.ne.s32.totalorder %s179, %s195
    %p197 = scmp.eq.s32.totalorder %s19, 0
    %p198 = por %p196, %p197
    %p199 = scmp.le.s32.totalorder 1, %s13
    %p200 = scmp.lt.s32.totalorder %s13, 3
    %p201 = pnand %p199, %p200
    %p202 = pneg %p201
    // Predicated region
    $region9: #{model_forward.1} parent=5 // pred_check
      _
    $region10: #{model_forward.1} parent=5 // pred_check_branch
      %204 = sbr.rel (%p201) target = $region12
    $region11: #{model_forward.1} parent=5 // pred_region
      %s205 = ssub.s32 %s13, 1
      // Predicated region
      $region13: #{model_forward.1} parent=11 // pred_check
        %p206 = pneg %p60
      $region14: #{model_forward.1} parent=11 // pred_check_branch
        %208 = sbr.rel (%p206) target = $region16
      $region15: #{model_forward.1} parent=11 // pred_region
        _
      $region16: #{model_forward.1} parent=11 // pred_fallthru
        _
      // Predicated region
      $region17: #{model_forward.1} parent=11 // pred_check
        %p209 = pneg %p81
      $region18: #{model_forward.1} parent=11 // pred_check_branch
        %211 = sbr.rel (%p209) target = $region20
      $region19: #{model_forward.1} parent=11 // pred_region
        _
      $region20: #{model_forward.1} parent=11 // pred_fallthru
        _
      // Predicated region
      $region21: #{model_forward.1} parent=11 // pred_check
        %p212 = pneg %p102
      $region22: #{model_forward.1} parent=11 // pred_check_branch
        %214 = sbr.rel (%p212) target = $region24
      $region23: #{model_forward.1} parent=11 // pred_region
        _
      $region24: #{model_forward.1} parent=11 // pred_fallthru
        _
      // Predicated region
      $region25: #{model_forward.1} parent=11 // pred_check
        %p215 = pneg %p123
      $region26: #{model_forward.1} parent=11 // pred_check_branch
        %217 = sbr.rel (%p215) target = $region28
      $region27: #{model_forward.1} parent=11 // pred_region
        _
      $region28: #{model_forward.1} parent=11 // pred_fallthru
        _
      // Predicated region
      $region29: #{model_forward.1} parent=11 // pred_check
        %p218 = pneg %p144
      $region30: #{model_forward.1} parent=11 // pred_check_branch
        %220 = sbr.rel (%p218) target = $region32
      $region31: #{model_forward.1} parent=11 // pred_region
        _
      $region32: #{model_forward.1} parent=11 // pred_fallthru
        _
      // Predicated region
      $region33: #{model_forward.1} parent=11 // pred_check
        %p221 = pneg %p165
      $region34: #{model_forward.1} parent=11 // pred_check_branch
        %223 = sbr.rel (%p221) target = $region36
      $region35: #{model_forward.1} parent=11 // pred_region
        _
      $region36: #{model_forward.1} parent=11 // pred_fallthru
        _
    $region12: #{model_forward.1} parent=5 // pred_fallthru
      _
    %p224 = scmp.lt.s32.totalorder %s13, 2
    // Predicated region
    $region37: #{model_forward.1} parent=5 // pred_check
      %p225 = pneg %p224
    $region38: #{model_forward.1} parent=5 // pred_check_branch
      %227 = sbr.rel (%p225) target = $region40
    $region39: #{model_forward.1} parent=5 // pred_region
      // Predicated region
      $region41: #{model_forward.1} parent=39 // pred_check
        %p228 = pneg %p33
      $region42: #{model_forward.1} parent=39 // pred_check_branch
        %230 = sbr.rel (%p228) target = $region44
      $region43: #{model_forward.1} parent=39 // pred_region
        %p231 = scmp.lt.s32.totalorder %s13, 1
        %s232 = scalar_select %p231, %s13, 1
        %s233 = smul.addr %s232, 6
        %s234 = smul.addr %s233, 4
        %s235 = scalar_lea.vmem %s0, %s234
      $region44: #{model_forward.1} parent=39 // pred_fallthru
        _
    $region40: #{model_forward.1} parent=5 // pred_fallthru
      _
    %p236 = scmp.le.s32.totalorder 1, %s13
    %p237 = scmp.lt.s32.totalorder %s13, 3
    %p238 = pnand %p236, %p237
    %p239 = pneg %p238
    // Predicated region
    $region45: #{model_forward.1} parent=5 // pred_check
      _
    $region46: #{model_forward.1} parent=5 // pred_check_branch
      %241 = sbr.rel (%p238) target = $region48
    $region47: #{model_forward.1} parent=5 // pred_region
      %s242 = ssub.s32 %s13, 1
      %p243 = scmp.lt.s32.totalorder %s18, 1
      %s244 = scalar_select %p243, %s18, 1
      %s245 = smul.addr %s244, 6
      %s246 = smul.addr %s245, 4
      %s247 = scalar_lea.vmem %s0, %s246
      %p248 = pneg %p39
      %p249 = pneg %p36
      %p250 = pneg %p60
      %p251 = pneg %p57
      %p252 = pneg %p81
      %p253 = pneg %p78
      %p254 = pneg %p102
      %p255 = pneg %p99
      %p256 = pneg %p123
      %p257 = pneg %p120
      %p258 = pneg %p144
      %p259 = pneg %p141
      %p260 = pneg %p165
      %p261 = pneg %p162
      %p262 = pneg %p191
      %p263 = pneg %p188
      %p264 = scmp.lt.s32.totalorder %s18, 1
      %s265 = scalar_select %p264, %s18, 1
      %s266 = scalar_lea.vmem %s7, %s265
      %p267 = scmp.lt.s32.totalorder %s18, 1
      %s268 = scalar_select %p267, %s18, 1
      %s269 = smul.addr %s268, 6
      %s270 = smul.addr %s269, 4
      %s271 = scalar_lea.vmem %s0, %s270
      %p272 = scmp.lt.s32.totalorder %s18, 1
      %s273 = scalar_select %p272, %s18, 1
      %s274 = scalar_lea.vmem %s7, %s273
      %v276 = vld [vmem:[%s2] sm:$0xff]
      %v277 = vld [vmem:[%s2 + $0x8] sm:$0xff]
      %v278 = vld [vmem:[%s2 + $0x10] sm:$0xff]
      %v279 = vld [vmem:[%s2 + $0x18] sm:$0xff]
      %v280 = vld [vmem:[%s271] sm:$0xff]
      %v281 = vld [vmem:[%s271 + $0x8] sm:$0xff]
      %v282 = vld [vmem:[%s271 + $0x10] sm:$0xff]
      %v283 = vld [vmem:[%s1] sm:$0xff]
      %v284 = vld [vmem:[%s1 + $0x8] sm:$0xff]
      %v285 = vld [vmem:[%s1 + $0x10] sm:$0xff]
      %v286 = vld [vmem:[%s1 + $0x18] sm:$0xff]
      %v287 = vld [vmem:[%s1 + $0x20] sm:$0xff]
      %v288 = vld [vmem:[%s1 + $0x28] sm:$0xff]
      %v289 = vld [vmem:[%s1 + $0x30] sm:$0xff]
      %v290 = vld [vmem:[%s1 + $0x38] sm:$0xff]
      %v291 = vld [vmem:[%s1 + $0x40] sm:$0xff]
      %v292 = vld [vmem:[%s1 + $0x48] sm:$0xff]
      %v293 = vld [vmem:[%s1 + $0x50] sm:$0xff]
      %v294 = vld [vmem:[%s1 + $0x58] sm:$0xff]
      %v295 = vld [vmem:[%s1 + $0x60] sm:$0xff]
      %v296 = vld [vmem:[%s1 + $0x68] sm:$0xff]
      %v297 = vld [vmem:[%s1 + $0x70] sm:$0xff]
      %v298 = vld [vmem:[%s1 + $0x78] sm:$0xff]
      %v299 = vld [vmem:[%s1 + $0x80] sm:$0xff]
      %v300 = vld [vmem:[%s1 + $0x88] sm:$0xff]
      %v301 = vld [vmem:[%s1 + $0x90] sm:$0xff]
      %v302 = vld [vmem:[%s1 + $0x98] sm:$0xff]
      %v303 = vld [vmem:[%s1 + $0xa0] sm:$0xff]
      %v304 = vld [vmem:[%s1 + $0xa8] sm:$0xff]
      %v305 = vld [vmem:[%s1 + $0xb0] sm:$0xff]
      %v306 = vld [vmem:[%s1 + $0xb8] sm:$0xff]
      %v307 = vld [vmem:[%s1 + $0xc0] sm:$0xff]
      %v308 = vld [vmem:[%s1 + $0xc8] sm:$0xff]
      %v309 = vld [vmem:[%s1 + $0xd0] sm:$0xff]
      %v310 = vld [vmem:[%s1 + $0xd8] sm:$0xff]
      %v311 = vld [vmem:[%s1 + $0xe0] sm:$0xff]
      %v312 = vld [vmem:[%s1 + $0xe8] sm:$0xff]
      %v313 = vld [vmem:[%s1 + $0xf0] sm:$0xff]
      %v314 = vld [vmem:[%s1 + $0xf8] sm:$0xff]
      %v315 = vld [vmem:[%s1 + $0x100] sm:$0xff]
      %v316 = vld [vmem:[%s1 + $0x108] sm:$0xff]
      %v317 = vld [vmem:[%s1 + $0x110] sm:$0xff]
      %v318 = vld [vmem:[%s1 + $0x118] sm:$0xff]
      %v319 = vld [vmem:[%s1 + $0x120] sm:$0xff]
      %v320 = vld [vmem:[%s1 + $0x128] sm:$0xff]
      %v321 = vld [vmem:[%s1 + $0x130] sm:$0xff]
      %v322 = vld [vmem:[%s1 + $0x138] sm:$0xff]
      %v323 = vld [vmem:[%s1 + $0x140] sm:$0xff]
      %v324 = vld [vmem:[%s1 + $0x148] sm:$0xff]
      %v325 = vld [vmem:[%s1 + $0x150] sm:$0xff]
      %v326 = vld [vmem:[%s1 + $0x158] sm:$0xff]
      %v327 = vld [vmem:[%s1 + $0x160] sm:$0xff]
      %v328 = vld [vmem:[%s1 + $0x168] sm:$0xff]
      %v329 = vld [vmem:[%s1 + $0x170] sm:$0xff]
      %v330 = vld [vmem:[%s1 + $0x178] sm:$0xff]
      %v331 = vld [vmem:[%s1 + $0x180] sm:$0xff]
      %v332 = vld [vmem:[%s1 + $0x188] sm:$0xff]
      %v333 = vld [vmem:[%s1 + $0x190] sm:$0xff]
      %v334 = vld [vmem:[%s1 + $0x198] sm:$0xff]
      %v335 = vld [vmem:[%s1 + $0x1a0] sm:$0xff]
      %v336 = vld [vmem:[%s1 + $0x1a8] sm:$0xff]
      %v337 = vld [vmem:[%s1 + $0x1b0] sm:$0xff]
      %v338 = vld [vmem:[%s1 + $0x1b8] sm:$0xff]
      %v339 = vld [vmem:[%s1 + $0x1c0] sm:$0xff]
      %v340 = vld [vmem:[%s1 + $0x1c8] sm:$0xff]
      %v341 = vld [vmem:[%s1 + $0x1d0] sm:$0xff]
      %v342 = vld [vmem:[%s1 + $0x1d8] sm:$0xff]
      %v343 = vld [vmem:[%s1 + $0x1e0] sm:$0xff]
      %v344 = vld [vmem:[%s1 + $0x1e8] sm:$0xff]
      %v345 = vld [vmem:[%s1 + $0x1f0] sm:$0xff]
      %v346 = vld [vmem:[%s1 + $0x1f8] sm:$0xff]
      %v347 = vld [vmem:[%s1 + $0x200] sm:$0xff]
      %v348 = vld [vmem:[%s1 + $0x208] sm:$0xff]
      %v349 = vld [vmem:[%s1 + $0x210] sm:$0xff]
      %v350 = vld [vmem:[%s1 + $0x218] sm:$0xff]
      %v351 = vld [vmem:[%s1 + $0x220] sm:$0xff]
      %v352 = vld [vmem:[%s1 + $0x228] sm:$0xff]
      %v353 = vld [vmem:[%s1 + $0x230] sm:$0xff]
      %v354 = vld [vmem:[%s1 + $0x238] sm:$0xff]
      %v355 = vld [vmem:[%s1 + $0x240] sm:$0xff]
      %v356 = vld [vmem:[%s1 + $0x248] sm:$0xff]
      %v357 = vld [vmem:[%s1 + $0x250] sm:$0xff]
      %v358 = vld [vmem:[%s1 + $0x258] sm:$0xff]
      %v359 = vld [vmem:[%s1 + $0x260] sm:$0xff]
      %v360 = vld [vmem:[%s1 + $0x268] sm:$0xff]
      %v361 = vld [vmem:[%s1 + $0x270] sm:$0xff]
      %v362 = vld [vmem:[%s1 + $0x278] sm:$0xff]
      %v363 = vld [vmem:[%s1 + $0x280] sm:$0xff]
      %v364 = vld [vmem:[%s1 + $0x288] sm:$0xff]
      %v365 = vld [vmem:[%s1 + $0x290] sm:$0xff]
      %v366 = vld [vmem:[%s1 + $0x298] sm:$0xff]
      %v367 = vld [vmem:[%s1 + $0x2a0] sm:$0xff]
      %v368 = vld [vmem:[%s1 + $0x2a8] sm:$0xff]
      %v369 = vld [vmem:[%s1 + $0x2b0] sm:$0xff]
      %v370 = vld [vmem:[%s1 + $0x2b8] sm:$0xff]
      %v371 = vld [vmem:[%s1 + $0x2c0] sm:$0xff]
      %v372 = vld [vmem:[%s1 + $0x2c8] sm:$0xff]
      %v373 = vld [vmem:[%s1 + $0x2d0] sm:$0xff]
      %v374 = vld [vmem:[%s1 + $0x2d8] sm:$0xff]
      %v375 = vld [vmem:[%s1 + $0x2e0] sm:$0xff]
      %v376 = vld [vmem:[%s1 + $0x2e8] sm:$0xff]
      %v377 = vld [vmem:[%s1 + $0x2f0] sm:$0xff]
      %v378 = vld [vmem:[%s1 + $0x2f8] sm:$0xff]
      %v379 = vunpack.c.l.s8.bf16 %v283
      %v380 = vunpack.c.l.s8.bf16 %v284
      %v381 = vunpack.c.l.s8.bf16 %v285
      %v382 = vunpack.c.l.s8.bf16 %v286
      %v383 = vunpack.c.h.s8.bf16 %v283
      %v384 = vunpack.c.h.s8.bf16 %v284
      %v385 = vunpack.c.h.s8.bf16 %v285
      %v386 = vunpack.c.h.s8.bf16 %v286
      %v387 = vunpack.c.l.s8.bf16 %v287
      %v388 = vunpack.c.l.s8.bf16 %v288
      %v389 = vunpack.c.l.s8.bf16 %v289
      %v390 = vunpack.c.l.s8.bf16 %v290
      %v391 = vunpack.c.h.s8.bf16 %v287
      %v392 = vunpack.c.h.s8.bf16 %v288
      %v393 = vunpack.c.h.s8.bf16 %v289
      %v394 = vunpack.c.h.s8.bf16 %v290
      %v395 = vunpack.c.l.s8.bf16 %v291
      %v396 = vunpack.c.l.s8.bf16 %v292
      %v397 = vunpack.c.l.s8.bf16 %v293
      %v398 = vunpack.c.l.s8.bf16 %v294
      %v399 = vunpack.c.h.s8.bf16 %v291
      %v400 = vunpack.c.h.s8.bf16 %v292
      %v401 = vunpack.c.h.s8.bf16 %v293
      %v402 = vunpack.c.h.s8.bf16 %v294
      %v403 = vunpack.c.l.s8.bf16 %v295
      %v404 = vunpack.c.l.s8.bf16 %v296
      %v405 = vunpack.c.l.s8.bf16 %v297
      %v406 = vunpack.c.l.s8.bf16 %v298
      %v407 = vunpack.c.h.s8.bf16 %v295
      %v408 = vunpack.c.h.s8.bf16 %v296
      %v409 = vunpack.c.h.s8.bf16 %v297
      %v410 = vunpack.c.h.s8.bf16 %v298
      %v411 = vunpack.c.l.s8.bf16 %v299
      %v412 = vunpack.c.l.s8.bf16 %v300
      %v413 = vunpack.c.l.s8.bf16 %v301
      %v414 = vunpack.c.l.s8.bf16 %v302
      %v415 = vunpack.c.h.s8.bf16 %v299
      %v416 = vunpack.c.h.s8.bf16 %v300
      %v417 = vunpack.c.h.s8.bf16 %v301
      %v418 = vunpack.c.h.s8.bf16 %v302
      %v419 = vunpack.c.l.s8.bf16 %v303
      %v420 = vunpack.c.l.s8.bf16 %v304
      %v421 = vunpack.c.l.s8.bf16 %v305
      %v422 = vunpack.c.l.s8.bf16 %v306
      %v423 = vunpack.c.h.s8.bf16 %v303
      %v424 = vunpack.c.h.s8.bf16 %v304
      %v425 = vunpack.c.h.s8.bf16 %v305
      %v426 = vunpack.c.h.s8.bf16 %v306
      %v427 = vunpack.c.l.s8.bf16 %v307
      %v428 = vunpack.c.l.s8.bf16 %v308
      %v429 = vunpack.c.l.s8.bf16 %v309
      %v430 = vunpack.c.l.s8.bf16 %v310
      %v431 = vunpack.c.h.s8.bf16 %v307
      %v432 = vunpack.c.h.s8.bf16 %v308
      %v433 = vunpack.c.h.s8.bf16 %v309
      %v434 = vunpack.c.h.s8.bf16 %v310
      %v435 = vunpack.c.l.s8.bf16 %v311
      %v436 = vunpack.c.l.s8.bf16 %v312
      %v437 = vunpack.c.l.s8.bf16 %v313
      %v438 = vunpack.c.l.s8.bf16 %v314
      %v439 = vunpack.c.h.s8.bf16 %v311
      %v440 = vunpack.c.h.s8.bf16 %v312
      %v441 = vunpack.c.h.s8.bf16 %v313
      %v442 = vunpack.c.h.s8.bf16 %v314
      %v443 = vunpack.c.l.s8.bf16 %v315
      %v444 = vunpack.c.l.s8.bf16 %v316
      %v445 = vunpack.c.l.s8.bf16 %v317
      %v446 = vunpack.c.l.s8.bf16 %v318
      %v447 = vunpack.c.h.s8.bf16 %v315
      %v448 = vunpack.c.h.s8.bf16 %v316
      %v449 = vunpack.c.h.s8.bf16 %v317
      %v450 = vunpack.c.h.s8.bf16 %v318
      %v451 = vunpack.c.l.s8.bf16 %v319
      %v452 = vunpack.c.l.s8.bf16 %v320
      %v453 = vunpack.c.l.s8.bf16 %v321
      %v454 = vunpack.c.l.s8.bf16 %v322
      %v455 = vunpack.c.h.s8.bf16 %v319
      %v456 = vunpack.c.h.s8.bf16 %v320
      %v457 = vunpack.c.h.s8.bf16 %v321
      %v458 = vunpack.c.h.s8.bf16 %v322
      %v459 = vunpack.c.l.s8.bf16 %v323
      %v460 = vunpack.c.l.s8.bf16 %v324
      %v461 = vunpack.c.l.s8.bf16 %v325
      %v462 = vunpack.c.l.s8.bf16 %v326
      %v463 = vunpack.c.h.s8.bf16 %v323
      %v464 = vunpack.c.h.s8.bf16 %v324
      %v465 = vunpack.c.h.s8.bf16 %v325
      %v466 = vunpack.c.h.s8.bf16 %v326
      %v467 = vunpack.c.l.s8.bf16 %v327
      %v468 = vunpack.c.l.s8.bf16 %v328
      %v469 = vunpack.c.l.s8.bf16 %v329
      %v470 = vunpack.c.l.s8.bf16 %v330
      %v471 = vunpack.c.h.s8.bf16 %v327
      %v472 = vunpack.c.h.s8.bf16 %v328
      %v473 = vunpack.c.h.s8.bf16 %v329
      %v474 = vunpack.c.h.s8.bf16 %v330
      %v475 = vunpack.c.l.s8.bf16 %v331
      %v476 = vunpack.c.l.s8.bf16 %v332
      %v477 = vunpack.c.l.s8.bf16 %v333
      %v478 = vunpack.c.l.s8.bf16 %v334
      %v479 = vunpack.c.h.s8.bf16 %v331
      %v480 = vunpack.c.h.s8.bf16 %v332
      %v481 = vunpack.c.h.s8.bf16 %v333
      %v482 = vunpack.c.h.s8.bf16 %v334
      %v483 = vunpack.c.l.s8.bf16 %v335
      %v484 = vunpack.c.l.s8.bf16 %v336
      %v485 = vunpack.c.l.s8.bf16 %v337
      %v486 = vunpack.c.l.s8.bf16 %v338
      %v487 = vunpack.c.h.s8.bf16 %v335
      %v488 = vunpack.c.h.s8.bf16 %v336
      %v489 = vunpack.c.h.s8.bf16 %v337
      %v490 = vunpack.c.h.s8.bf16 %v338
      %v491 = vunpack.c.l.s8.bf16 %v339
      %v492 = vunpack.c.l.s8.bf16 %v340
      %v493 = vunpack.c.l.s8.bf16 %v341
      %v494 = vunpack.c.l.s8.bf16 %v342
      %v495 = vunpack.c.h.s8.bf16 %v339
      %v496 = vunpack.c.h.s8.bf16 %v340
      %v497 = vunpack.c.h.s8.bf16 %v341
      %v498 = vunpack.c.h.s8.bf16 %v342
      %v499 = vunpack.c.l.s8.bf16 %v343
      %v500 = vunpack.c.l.s8.bf16 %v344
      %v501 = vunpack.c.l.s8.bf16 %v345
      %v502 = vunpack.c.l.s8.bf16 %v346
      %v503 = vunpack.c.h.s8.bf16 %v343
      %v504 = vunpack.c.h.s8.bf16 %v344
      %v505 = vunpack.c.h.s8.bf16 %v345
      %v506 = vunpack.c.h.s8.bf16 %v346
      %v507 = vunpack.c.l.s8.bf16 %v347
      %v508 = vunpack.c.l.s8.bf16 %v348
      %v509 = vunpack.c.l.s8.bf16 %v349
      %v510 = vunpack.c.l.s8.bf16 %v350
      %v511 = vunpack.c.h.s8.bf16 %v347
      %v512 = vunpack.c.h.s8.bf16 %v348
      %v513 = vunpack.c.h.s8.bf16 %v349
      %v514 = vunpack.c.h.s8.bf16 %v350
      %v515 = vunpack.c.l.s8.bf16 %v351
      %v516 = vunpack.c.l.s8.bf16 %v352
      %v517 = vunpack.c.l.s8.bf16 %v353
      %v518 = vunpack.c.l.s8.bf16 %v354
      %v519 = vunpack.c.h.s8.bf16 %v351
      %v520 = vunpack.c.h.s8.bf16 %v352
      %v521 = vunpack.c.h.s8.bf16 %v353
      %v522 = vunpack.c.h.s8.bf16 %v354
      %v523 = vunpack.c.l.s8.bf16 %v355
      %v524 = vunpack.c.l.s8.bf16 %v356
      %v525 = vunpack.c.l.s8.bf16 %v357
      %v526 = vunpack.c.l.s8.bf16 %v358
      %v527 = vunpack.c.h.s8.bf16 %v355
      %v528 = vunpack.c.h.s8.bf16 %v356
      %v529 = vunpack.c.h.s8.bf16 %v357
      %v530 = vunpack.c.h.s8.bf16 %v358
      %v531 = vunpack.c.l.s8.bf16 %v359
      %v532 = vunpack.c.l.s8.bf16 %v360
      %v533 = vunpack.c.l.s8.bf16 %v361
      %v534 = vunpack.c.l.s8.bf16 %v362
      %v535 = vunpack.c.h.s8.bf16 %v359
      %v536 = vunpack.c.h.s8.bf16 %v360
      %v537 = vunpack.c.h.s8.bf16 %v361
      %v538 = vunpack.c.h.s8.bf16 %v362
      %v539 = vunpack.c.l.s8.bf16 %v363
      %v540 = vunpack.c.l.s8.bf16 %v364
      %v541 = vunpack.c.l.s8.bf16 %v365
      %v542 = vunpack.c.l.s8.bf16 %v366
      %v543 = vunpack.c.h.s8.bf16 %v363
      %v544 = vunpack.c.h.s8.bf16 %v364
      %v545 = vunpack.c.h.s8.bf16 %v365
      %v546 = vunpack.c.h.s8.bf16 %v366
      %v547 = vunpack.c.l.s8.bf16 %v367
      %v548 = vunpack.c.l.s8.bf16 %v368
      %v549 = vunpack.c.l.s8.bf16 %v369
      %v550 = vunpack.c.l.s8.bf16 %v370
      %v551 = vunpack.c.h.s8.bf16 %v367
      %v552 = vunpack.c.h.s8.bf16 %v368
      %v553 = vunpack.c.h.s8.bf16 %v369
      %v554 = vunpack.c.h.s8.bf16 %v370
      %v555 = vunpack.c.l.s8.bf16 %v371
      %v556 = vunpack.c.l.s8.bf16 %v372
      %v557 = vunpack.c.l.s8.bf16 %v373
      %v558 = vunpack.c.l.s8.bf16 %v374
      %v559 = vunpack.c.h.s8.bf16 %v371
      %v560 = vunpack.c.h.s8.bf16 %v372
      %v561 = vunpack.c.h.s8.bf16 %v373
      %v562 = vunpack.c.h.s8.bf16 %v374
      %v563 = vunpack.c.l.s8.bf16 %v375
      %v564 = vunpack.c.l.s8.bf16 %v376
      %v565 = vunpack.c.l.s8.bf16 %v377
      %v566 = vunpack.c.l.s8.bf16 %v378
      %v567 = vunpack.c.h.s8.bf16 %v375
      %v568 = vunpack.c.h.s8.bf16 %v376
      %v569 = vunpack.c.h.s8.bf16 %v377
      %v570 = vunpack.c.h.s8.bf16 %v378
      %v574 = vunpack.c.l.b16 %v280
      %v575 = vunpack.c.h.b16 %v280
      %v576 = vunpack.c.l.b16 %v281
      %v577 = vunpack.c.h.b16 %v281
      %v578 = vunpack.c.l.b16 %v282
      %v579 = vunpack.c.h.b16 %v282
      %v580 = vpack.c.b16 %v574, %v574
      %v581 = vpack.c.b16 %v575, %v575
      %v582 = vpack.c.b16 %v576, %v576
      %v583 = vpack.c.b16 %v577, %v577
      %v584 = vpack.c.b16 %v578, %v578
      %v585 = vpack.c.b16 %v579, %v579
      %592 = vmatprep.subr.bf16.mxu0 %v408
      %593 = vmatpush1.bf16.msra.mxu0 %v407
      %594 = vmatprep.subr.bf16.mxu0 %v404
      %595 = vmatpush1.bf16.msra.mxu0 %v403
      %596 = vmatprep.subr.bf16.mxu0 %v400
      %597 = vmatpush1.bf16.msra.mxu0 %v399
      %598 = vmatprep.subr.bf16.mxu0 %v396
      %599 = vmatpush1.bf16.msra.mxu0 %v395
      %600 = vmatprep.subr.bf16.mxu0 %v392
      %601 = vmatpush1.bf16.msra.mxu0 %v391
      %602 = vmatprep.subr.bf16.mxu0 %v388
      %603 = vmatpush1.bf16.msra.mxu0 %v387
      %604 = vmatprep.subr.bf16.mxu0 %v384
      %605 = vmatpush1.bf16.msra.mxu0 %v383
      %606 = vmatprep.subr.bf16.mxu0 %v380
      %607 = vmatpush1.bf16.msra.mxu0 %v379
      %608 = vmatprep.subr.bf16.mxu0 %v440
      %609 = vmatpush2.bf16.msra.mxu0 %v439
      %610 = vmatprep.subr.bf16.mxu0 %v436
      %611 = vmatpush2.bf16.msra.mxu0 %v435
      %612 = vmatprep.subr.bf16.mxu0 %v432
      %613 = vmatpush2.bf16.msra.mxu0 %v431
      %614 = vmatprep.subr.bf16.mxu0 %v428
      %615 = vmatpush2.bf16.msra.mxu0 %v427
      %616 = vmatprep.subr.bf16.mxu0 %v424
      %617 = vmatpush2.bf16.msra.mxu0 %v423
      %618 = vmatprep.subr.bf16.mxu0 %v420
      %619 = vmatpush2.bf16.msra.mxu0 %v419
      %620 = vmatprep.subr.bf16.mxu0 %v416
      %621 = vmatpush2.bf16.msra.mxu0 %v415
      %622 = vmatprep.subr.bf16.mxu0 %v412
      %623 = vmatpush2.bf16.msra.mxu0 %v411
      %624 = vmatprep.mubr.bf16.mxu0 %v581
      %625 = vmatmul.mubr.bf16.gmra.mxu0 %v580
      %v626 = vpop.f32.mrf.mxu0
      %v627 = vadd.f32 0.0, %v626
      %v628 = vpop.f32.mrf.mxu0
      %v629 = vadd.f32 0.0, %v628
      %v630 = vpop.f32.mrf.mxu0
      %v631 = vpop.f32.mrf.mxu0
      %632 = vdwg.mxu0
      %633 = vmatprep.subr.bf16.mxu0 %v472
      %634 = vmatpush1.bf16.msra.mxu0 %v471
      %635 = vmatprep.subr.bf16.mxu0 %v468
      %636 = vmatpush1.bf16.msra.mxu0 %v467
      %637 = vmatprep.subr.bf16.mxu0 %v464
      %638 = vmatpush1.bf16.msra.mxu0 %v463
      %639 = vmatprep.subr.bf16.mxu0 %v460
      %640 = vmatpush1.bf16.msra.mxu0 %v459
      %641 = vmatprep.subr.bf16.mxu0 %v456
      %642 = vmatpush1.bf16.msra.mxu0 %v455
      %643 = vmatprep.subr.bf16.mxu0 %v452
      %644 = vmatpush1.bf16.msra.mxu0 %v451
      %645 = vmatprep.subr.bf16.mxu0 %v448
      %646 = vmatpush1.bf16.msra.mxu0 %v447
      %647 = vmatprep.subr.bf16.mxu0 %v444
      %648 = vmatpush1.bf16.msra.mxu0 %v443
      %649 = vmatprep.subr.bf16.mxu0 %v504
      %650 = vmatpush2.bf16.msra.mxu0 %v503
      %651 = vmatprep.subr.bf16.mxu0 %v500
      %652 = vmatpush2.bf16.msra.mxu0 %v499
      %653 = vmatprep.subr.bf16.mxu0 %v496
      %654 = vmatpush2.bf16.msra.mxu0 %v495
      %655 = vmatprep.subr.bf16.mxu0 %v492
      %656 = vmatpush2.bf16.msra.mxu0 %v491
      %657 = vmatprep.subr.bf16.mxu0 %v488
      %658 = vmatpush2.bf16.msra.mxu0 %v487
      %659 = vmatprep.subr.bf16.mxu0 %v484
      %660 = vmatpush2.bf16.msra.mxu0 %v483
      %661 = vmatprep.subr.bf16.mxu0 %v480
      %662 = vmatpush2.bf16.msra.mxu0 %v479
      %663 = vmatprep.subr.bf16.mxu0 %v476
      %664 = vmatpush2.bf16.msra.mxu0 %v475
      %665 = vmatprep.mubr.bf16.mxu0 %v583
      %666 = vmatmul.mubr.bf16.gmra.mxu0 %v582
      %v667 = vpop.f32.mrf.mxu0
      %v668 = vadd.f32 %v627, %v667
      %v669 = vpop.f32.mrf.mxu0
      %v670 = vadd.f32 %v629, %v669
      %v671 = vpop.f32.mrf.mxu0
      %v672 = vpop.f32.mrf.mxu0
      %673 = vdwg.mxu0
      %674 = vmatprep.subr.bf16.mxu0 %v536
      %675 = vmatpush1.bf16.msra.mxu0 %v535
      %676 = vmatprep.subr.bf16.mxu0 %v532
      %677 = vmatpush1.bf16.msra.mxu0 %v531
      %678 = vmatprep.subr.bf16.mxu0 %v528
      %679 = vmatpush1.bf16.msra.mxu0 %v527
      %680 = vmatprep.subr.bf16.mxu0 %v524
      %681 = vmatpush1.bf16.msra.mxu0 %v523
      %682 = vmatprep.subr.bf16.mxu0 %v520
      %683 = vmatpush1.bf16.msra.mxu0 %v519
      %684 = vmatprep.subr.bf16.mxu0 %v516
      %685 = vmatpush1.bf16.msra.mxu0 %v515
      %686 = vmatprep.subr.bf16.mxu0 %v512
      %687 = vmatpush1.bf16.msra.mxu0 %v511
      %688 = vmatprep.subr.bf16.mxu0 %v508
      %689 = vmatpush1.bf16.msra.mxu0 %v507
      %690 = vmatprep.subr.bf16.mxu0 %v568
      %691 = vmatpush2.bf16.msra.mxu0 %v567
      %692 = vmatprep.subr.bf16.mxu0 %v564
      %693 = vmatpush2.bf16.msra.mxu0 %v563
      %694 = vmatprep.subr.bf16.mxu0 %v560
      %695 = vmatpush2.bf16.msra.mxu0 %v559
      %696 = vmatprep.subr.bf16.mxu0 %v556
      %697 = vmatpush2.bf16.msra.mxu0 %v555
      %698 = vmatprep.subr.bf16.mxu0 %v552
      %699 = vmatpush2.bf16.msra.mxu0 %v551
      %700 = vmatprep.subr.bf16.mxu0 %v548
      %701 = vmatpush2.bf16.msra.mxu0 %v547
      %702 = vmatprep.subr.bf16.mxu0 %v544
      %703 = vmatpush2.bf16.msra.mxu0 %v543
      %704 = vmatprep.subr.bf16.mxu0 %v540
      %705 = vmatpush2.bf16.msra.mxu0 %v539
      %706 = vmatprep.mubr.bf16.mxu0 %v585
      %707 = vmatmul.mubr.bf16.gmra.mxu0 %v584
      %v708 = vpop.f32.mrf.mxu0
      %v709 = vadd.f32 %v668, %v708
      %v710 = vpop.f32.mrf.mxu0
      %v711 = vadd.f32 %v670, %v710
      %v712 = vpop.f32.mrf.mxu0
      %v713 = vpop.f32.mrf.mxu0
      %714 = vdwg.mxu0
      %715 = vmatprep.subr.bf16.mxu0 %v410
      %716 = vmatpush1.bf16.msra.mxu0 %v409
      %717 = vmatprep.subr.bf16.mxu0 %v406
      %718 = vmatpush1.bf16.msra.mxu0 %v405
      %719 = vmatprep.subr.bf16.mxu0 %v402
      %720 = vmatpush1.bf16.msra.mxu0 %v401
      %721 = vmatprep.subr.bf16.mxu0 %v398
      %722 = vmatpush1.bf16.msra.mxu0 %v397
      %723 = vmatprep.subr.bf16.mxu0 %v394
      %724 = vmatpush1.bf16.msra.mxu0 %v393
      %725 = vmatprep.subr.bf16.mxu0 %v390
      %726 = vmatpush1.bf16.msra.mxu0 %v389
      %727 = vmatprep.subr.bf16.mxu0 %v386
      %728 = vmatpush1.bf16.msra.mxu0 %v385
      %729 = vmatprep.subr.bf16.mxu0 %v382
      %730 = vmatpush1.bf16.msra.mxu0 %v381
      %731 = vmatprep.subr.bf16.mxu0 %v442
      %732 = vmatpush2.bf16.msra.mxu0 %v441
      %733 = vmatprep.subr.bf16.mxu0 %v438
      %734 = vmatpush2.bf16.msra.mxu0 %v437
      %735 = vmatprep.subr.bf16.mxu0 %v434
      %736 = vmatpush2.bf16.msra.mxu0 %v433
      %737 = vmatprep.subr.bf16.mxu0 %v430
      %738 = vmatpush2.bf16.msra.mxu0 %v429
      %739 = vmatprep.subr.bf16.mxu0 %v426
      %740 = vmatpush2.bf16.msra.mxu0 %v425
      %741 = vmatprep.subr.bf16.mxu0 %v422
      %742 = vmatpush2.bf16.msra.mxu0 %v421
      %743 = vmatprep.subr.bf16.mxu0 %v418
      %744 = vmatpush2.bf16.msra.mxu0 %v417
      %745 = vmatprep.subr.bf16.mxu0 %v414
      %746 = vmatpush2.bf16.msra.mxu0 %v413
      %747 = vmatprep.mubr.bf16.mxu0 %v581
      %748 = vmatmul.mubr.bf16.gmra.mxu0 %v580
      %v749 = vpop.f32.mrf.mxu0
      %v750 = vadd.f32 0.0, %v749
      %v751 = vpop.f32.mrf.mxu0
      %v752 = vadd.f32 0.0, %v751
      %v753 = vpop.f32.mrf.mxu0
      %v754 = vpop.f32.mrf.mxu0
      %755 = vdwg.mxu0
      %756 = vmatprep.subr.bf16.mxu0 %v474
      %757 = vmatpush1.bf16.msra.mxu0 %v473
      %758 = vmatprep.subr.bf16.mxu0 %v470
      %759 = vmatpush1.bf16.msra.mxu0 %v469
      %760 = vmatprep.subr.bf16.mxu0 %v466
      %761 = vmatpush1.bf16.msra.mxu0 %v465
      %762 = vmatprep.subr.bf16.mxu0 %v462
      %763 = vmatpush1.bf16.msra.mxu0 %v461
      %764 = vmatprep.subr.bf16.mxu0 %v458
      %765 = vmatpush1.bf16.msra.mxu0 %v457
      %766 = vmatprep.subr.bf16.mxu0 %v454
      %767 = vmatpush1.bf16.msra.mxu0 %v453
      %768 = vmatprep.subr.bf16.mxu0 %v450
      %769 = vmatpush1.bf16.msra.mxu0 %v449
      %770 = vmatprep.subr.bf16.mxu0 %v446
      %771 = vmatpush1.bf16.msra.mxu0 %v445
      %772 = vmatprep.subr.bf16.mxu0 %v506
      %773 = vmatpush2.bf16.msra.mxu0 %v505
      %774 = vmatprep.subr.bf16.mxu0 %v502
      %775 = vmatpush2.bf16.msra.mxu0 %v501
      %776 = vmatprep.subr.bf16.mxu0 %v498
      %777 = vmatpush2.bf16.msra.mxu0 %v497
      %778 = vmatprep.subr.bf16.mxu0 %v494
      %779 = vmatpush2.bf16.msra.mxu0 %v493
      %780 = vmatprep.subr.bf16.mxu0 %v490
      %781 = vmatpush2.bf16.msra.mxu0 %v489
      %782 = vmatprep.subr.bf16.mxu0 %v486
      %783 = vmatpush2.bf16.msra.mxu0 %v485
      %784 = vmatprep.subr.bf16.mxu0 %v482
      %785 = vmatpush2.bf16.msra.mxu0 %v481
      %786 = vmatprep.subr.bf16.mxu0 %v478
      %787 = vmatpush2.bf16.msra.mxu0 %v477
      %788 = vmatprep.mubr.bf16.mxu0 %v583
      %789 = vmatmul.mubr.bf16.gmra.mxu0 %v582
      %v790 = vpop.f32.mrf.mxu0
      %v791 = vadd.f32 %v750, %v790
      %v792 = vpop.f32.mrf.mxu0
      %v793 = vadd.f32 %v752, %v792
      %v794 = vpop.f32.mrf.mxu0
      %v795 = vpop.f32.mrf.mxu0
      %796 = vdwg.mxu0
      %797 = vmatprep.subr.bf16.mxu0 %v538
      %798 = vmatpush1.bf16.msra.mxu0 %v537
      %799 = vmatprep.subr.bf16.mxu0 %v534
      %800 = vmatpush1.bf16.msra.mxu0 %v533
      %801 = vmatprep.subr.bf16.mxu0 %v530
      %802 = vmatpush1.bf16.msra.mxu0 %v529
      %803 = vmatprep.subr.bf16.mxu0 %v526
      %804 = vmatpush1.bf16.msra.mxu0 %v525
      %805 = vmatprep.subr.bf16.mxu0 %v522
      %806 = vmatpush1.bf16.msra.mxu0 %v521
      %807 = vmatprep.subr.bf16.mxu0 %v518
      %808 = vmatpush1.bf16.msra.mxu0 %v517
      %809 = vmatprep.subr.bf16.mxu0 %v514
      %810 = vmatpush1.bf16.msra.mxu0 %v513
      %811 = vmatprep.subr.bf16.mxu0 %v510
      %812 = vmatpush1.bf16.msra.mxu0 %v509
      %813 = vmatprep.subr.bf16.mxu0 %v570
      %814 = vmatpush2.bf16.msra.mxu0 %v569
      %815 = vmatprep.subr.bf16.mxu0 %v566
      %816 = vmatpush2.bf16.msra.mxu0 %v565
      %817 = vmatprep.subr.bf16.mxu0 %v562
      %818 = vmatpush2.bf16.msra.mxu0 %v561
      %819 = vmatprep.subr.bf16.mxu0 %v558
      %820 = vmatpush2.bf16.msra.mxu0 %v557
      %821 = vmatprep.subr.bf16.mxu0 %v554
      %822 = vmatpush2.bf16.msra.mxu0 %v553
      %823 = vmatprep.subr.bf16.mxu0 %v550
      %824 = vmatpush2.bf16.msra.mxu0 %v549
      %825 = vmatprep.subr.bf16.mxu0 %v546
      %826 = vmatpush2.bf16.msra.mxu0 %v545
      %827 = vmatprep.subr.bf16.mxu0 %v542
      %828 = vmatpush2.bf16.msra.mxu0 %v541
      %829 = vmatprep.mubr.bf16.mxu0 %v585
      %830 = vmatmul.mubr.bf16.gmra.mxu0 %v584
      %v831 = vpop.f32.mrf.mxu0
      %v832 = vadd.f32 %v791, %v831
      %v833 = vpop.f32.mrf.mxu0
      %v834 = vadd.f32 %v793, %v833
      %v835 = vpop.f32.mrf.mxu0
      %v836 = vpop.f32.mrf.mxu0
      %837 = vdwg.mxu0
      %v838 = vlaneseq
      %v839 = vshrl.u32 %v838, 7
      %v840 = vsub.s32 1, %v839
      %v841 = vrot.slane %v276, %v840
      %v842 = vlaneseq
      %v843 = vshrl.u32 %v842, 7
      %v844 = vsub.s32 1, %v843
      %v845 = vrot.slane %v277, %v844
      %v846 = vlaneseq
      %v847 = vshrl.u32 %v846, 7
      %v848 = vsub.s32 1, %v847
      %v849 = vrot.slane %v278, %v848
      %v850 = vlaneseq
      %v851 = vshrl.u32 %v850, 7
      %v852 = vsub.s32 1, %v851
      %v853 = vrot.slane %v279, %v852
      %v854 = vmul.f32 %v709, %v841
      %v855 = vmul.f32 %v711, %v845
      %v856 = vmul.f32 %v832, %v849
      %v857 = vmul.f32 %v834, %v853
      %v858 = vlaneseq
      %v859 = vshrl.u32 %v858, 7
      %v860 = vsub.s32 0, %v859
      %v861 = vrot.slane %v276, %v860
      %v862 = vlaneseq
      %v863 = vshrl.u32 %v862, 7
      %v864 = vsub.s32 0, %v863
      %v865 = vrot.slane %v277, %v864
      %v866 = vlaneseq
      %v867 = vshrl.u32 %v866, 7
      %v868 = vsub.s32 0, %v867
      %v869 = vrot.slane %v278, %v868
      %v870 = vlaneseq
      %v871 = vshrl.u32 %v870, 7
      %v872 = vsub.s32 0, %v871
      %v873 = vrot.slane %v279, %v872
      %v874 = vadd.f32 %v854, %v861
      %v875 = vadd.f32 %v855, %v865
      %v876 = vadd.f32 %v856, %v869
      %v877 = vadd.f32 %v857, %v873
      %v878 = vmax.f32 %v874, 0.0
      %v879 = vmax.f32 %v875, 0.0
      %v880 = vmax.f32 %v876, 0.0
      %v881 = vmax.f32 %v877, 0.0
      %v882 = vpack.c.bf16 %v878, %v878
      %v883 = vpack.c.bf16 %v879, %v879
      %v884 = vpack.c.bf16 %v880, %v880
      %v885 = vpack.c.bf16 %v881, %v881
      %v886 = vld [vmem:[%s3] sm:$0xf]
      %v887 = vld [vmem:[%s3 + $0x4] sm:$0xf]
      %v888 = vld [vmem:[%s3 + $0x8] sm:$0xf]
      %v889 = vld [vmem:[%s3 + $0xc] sm:$0xf]
      %v890 = vld [vmem:[%s3 + $0x10] sm:$0xf]
      %v891 = vld [vmem:[%s3 + $0x14] sm:$0xf]
      %v892 = vld [vmem:[%s3 + $0x18] sm:$0xf]
      %v893 = vld [vmem:[%s3 + $0x1c] sm:$0xf]
      %v894 = vld [vmem:[%s3 + $0x20] sm:$0xf]
      %v895 = vld [vmem:[%s3 + $0x24] sm:$0xf]
      %v896 = vld [vmem:[%s3 + $0x28] sm:$0xf]
      %v897 = vld [vmem:[%s3 + $0x2c] sm:$0xf]
      %v898 = vld [vmem:[%s3 + $0x30] sm:$0xf]
      %v899 = vld [vmem:[%s3 + $0x34] sm:$0xf]
      %v900 = vld [vmem:[%s3 + $0x38] sm:$0xf]
      %v901 = vld [vmem:[%s3 + $0x3c] sm:$0xf]
      %v902 = vld [vmem:[%s3 + $0x40] sm:$0xf]
      %v903 = vld [vmem:[%s3 + $0x44] sm:$0xf]
      %v904 = vld [vmem:[%s3 + $0x48] sm:$0xf]
      %v905 = vld [vmem:[%s3 + $0x4c] sm:$0xf]
      %v906 = vld [vmem:[%s3 + $0x50] sm:$0xf]
      %v907 = vld [vmem:[%s3 + $0x54] sm:$0xf]
      %v908 = vld [vmem:[%s3 + $0x58] sm:$0xf]
      %v909 = vld [vmem:[%s3 + $0x5c] sm:$0xf]
      %v910 = vld [vmem:[%s3 + $0x60] sm:$0xf]
      %v911 = vld [vmem:[%s3 + $0x64] sm:$0xf]
      %v912 = vld [vmem:[%s3 + $0x68] sm:$0xf]
      %v913 = vld [vmem:[%s3 + $0x6c] sm:$0xf]
      %v914 = vld [vmem:[%s3 + $0x70] sm:$0xf]
      %v915 = vld [vmem:[%s3 + $0x74] sm:$0xf]
      %v916 = vld [vmem:[%s3 + $0x78] sm:$0xf]
      %v917 = vld [vmem:[%s3 + $0x7c] sm:$0xf]
      %v918 = vld [vmem:[%s3 + $0x80] sm:$0xf]
      %v919 = vld [vmem:[%s3 + $0x84] sm:$0xf]
      %v920 = vld [vmem:[%s3 + $0x88] sm:$0xf]
      %v921 = vld [vmem:[%s3 + $0x8c] sm:$0xf]
      %v922 = vld [vmem:[%s3 + $0x90] sm:$0xf]
      %v923 = vld [vmem:[%s3 + $0x94] sm:$0xf]
      %v924 = vld [vmem:[%s3 + $0x98] sm:$0xf]
      %v925 = vld [vmem:[%s3 + $0x9c] sm:$0xf]
      %v926 = vld [vmem:[%s3 + $0xa0] sm:$0xf]
      %v927 = vld [vmem:[%s3 + $0xa4] sm:$0xf]
      %v928 = vld [vmem:[%s3 + $0xa8] sm:$0xf]
      %v929 = vld [vmem:[%s3 + $0xac] sm:$0xf]
      %v930 = vld [vmem:[%s3 + $0xb0] sm:$0xf]
      %v931 = vld [vmem:[%s3 + $0xb4] sm:$0xf]
      %v932 = vld [vmem:[%s3 + $0xb8] sm:$0xf]
      %v933 = vld [vmem:[%s3 + $0xbc] sm:$0xf]
      %v934 = vld [vmem:[%s3 + $0xc0] sm:$0xf]
      %v935 = vld [vmem:[%s3 + $0xc4] sm:$0xf]
      %v936 = vld [vmem:[%s3 + $0xc8] sm:$0xf]
      %v937 = vld [vmem:[%s3 + $0xcc] sm:$0xf]
      %v938 = vld [vmem:[%s3 + $0xd0] sm:$0xf]
      %v939 = vld [vmem:[%s3 + $0xd4] sm:$0xf]
      %v940 = vld [vmem:[%s3 + $0xd8] sm:$0xf]
      %v941 = vld [vmem:[%s3 + $0xdc] sm:$0xf]
      %v942 = vld [vmem:[%s3 + $0xe0] sm:$0xf]
      %v943 = vld [vmem:[%s3 + $0xe4] sm:$0xf]
      %v944 = vld [vmem:[%s3 + $0xe8] sm:$0xf]
      %v945 = vld [vmem:[%s3 + $0xec] sm:$0xf]
      %v946 = vld [vmem:[%s3 + $0xf0] sm:$0xf]
      %v947 = vld [vmem:[%s3 + $0xf4] sm:$0xf]
      %v948 = vld [vmem:[%s3 + $0xf8] sm:$0xf]
      %v949 = vld [vmem:[%s3 + $0xfc] sm:$0xf]
      %v950 = vlaneseq
      %v951 = vshrl.u32 %v950, 7
      %v952 = vsub.s32 2, %v951
      %v953 = vrot.slane %v276, %v952
      %v1018 = vunpack.c.l.b16 %v886
      %v1019 = vunpack.c.l.b16 %v887
      %v1020 = vunpack.c.l.b16 %v888
      %v1021 = vunpack.c.l.b16 %v889
      %v1022 = vunpack.c.l.b16 %v890
      %v1023 = vunpack.c.l.b16 %v891
      %v1024 = vunpack.c.l.b16 %v892
      %v1025 = vunpack.c.l.b16 %v893
      %v1026 = vunpack.c.l.b16 %v894
      %v1027 = vunpack.c.l.b16 %v895
      %v1028 = vunpack.c.l.b16 %v896
      %v1029 = vunpack.c.l.b16 %v897
      %v1030 = vunpack.c.l.b16 %v898
      %v1031 = vunpack.c.l.b16 %v899
      %v1032 = vunpack.c.l.b16 %v900
      %v1033 = vunpack.c.l.b16 %v901
      %v1034 = vunpack.c.l.b16 %v902
      %v1035 = vunpack.c.l.b16 %v903
      %v1036 = vunpack.c.l.b16 %v904
      %v1037 = vunpack.c.l.b16 %v905
      %v1038 = vunpack.c.l.b16 %v906
      %v1039 = vunpack.c.l.b16 %v907
      %v1040 = vunpack.c.l.b16 %v908
      %v1041 = vunpack.c.l.b16 %v909
      %v1042 = vunpack.c.l.b16 %v910
      %v1043 = vunpack.c.l.b16 %v911
      %v1044 = vunpack.c.l.b16 %v912
      %v1045 = vunpack.c.l.b16 %v913
      %v1046 = vunpack.c.l.b16 %v914
      %v1047 = vunpack.c.l.b16 %v915
      %v1048 = vunpack.c.l.b16 %v916
      %v1049 = vunpack.c.l.b16 %v917
      %v1050 = vunpack.c.l.b16 %v918
      %v1051 = vunpack.c.l.b16 %v919
      %v1052 = vunpack.c.l.b16 %v920
      %v1053 = vunpack.c.l.b16 %v921
      %v1054 = vunpack.c.l.b16 %v922
      %v1055 = vunpack.c.l.b16 %v923
      %v1056 = vunpack.c.l.b16 %v924
      %v1057 = vunpack.c.l.b16 %v925
      %v1058 = vunpack.c.l.b16 %v926
      %v1059 = vunpack.c.l.b16 %v927
      %v1060 = vunpack.c.l.b16 %v928
      %v1061 = vunpack.c.l.b16 %v929
      %v1062 = vunpack.c.l.b16 %v930
      %v1063 = vunpack.c.l.b16 %v931
      %v1064 = vunpack.c.l.b16 %v932
      %v1065 = vunpack.c.l.b16 %v933
      %v1066 = vunpack.c.l.b16 %v934
      %v1067 = vunpack.c.l.b16 %v935
      %v1068 = vunpack.c.l.b16 %v936
      %v1069 = vunpack.c.l.b16 %v937
      %v1070 = vunpack.c.l.b16 %v938
      %v1071 = vunpack.c.l.b16 %v939
      %v1072 = vunpack.c.l.b16 %v940
      %v1073 = vunpack.c.l.b16 %v941
      %v1074 = vunpack.c.l.b16 %v942
      %v1075 = vunpack.c.l.b16 %v943
      %v1076 = vunpack.c.l.b16 %v944
      %v1077 = vunpack.c.l.b16 %v945
      %v1078 = vunpack.c.l.b16 %v946
      %v1079 = vunpack.c.l.b16 %v947
      %v1080 = vunpack.c.l.b16 %v948
      %v1081 = vunpack.c.l.b16 %v949
      %v1082 = vpack.c.b16 %v1019, %v1018
      %v1083 = vpack.c.b16 %v1021, %v1020
      %v1084 = vpack.c.b16 %v1023, %v1022
      %v1085 = vpack.c.b16 %v1025, %v1024
      %v1086 = vpack.c.b16 %v1027, %v1026
      %v1087 = vpack.c.b16 %v1029, %v1028
      %v1088 = vpack.c.b16 %v1031, %v1030
      %v1089 = vpack.c.b16 %v1033, %v1032
      %v1090 = vpack.c.b16 %v1035, %v1034
      %v1091 = vpack.c.b16 %v1037, %v1036
      %v1092 = vpack.c.b16 %v1039, %v1038
      %v1093 = vpack.c.b16 %v1041, %v1040
      %v1094 = vpack.c.b16 %v1043, %v1042
      %v1095 = vpack.c.b16 %v1045, %v1044
      %v1096 = vpack.c.b16 %v1047, %v1046
      %v1097 = vpack.c.b16 %v1049, %v1048
      %v1098 = vpack.c.b16 %v1051, %v1050
      %v1099 = vpack.c.b16 %v1053, %v1052
      %v1100 = vpack.c.b16 %v1055, %v1054
      %v1101 = vpack.c.b16 %v1057, %v1056
      %v1102 = vpack.c.b16 %v1059, %v1058
      %v1103 = vpack.c.b16 %v1061, %v1060
      %v1104 = vpack.c.b16 %v1063, %v1062
      %v1105 = vpack.c.b16 %v1065, %v1064
      %v1106 = vpack.c.b16 %v1067, %v1066
      %v1107 = vpack.c.b16 %v1069, %v1068
      %v1108 = vpack.c.b16 %v1071, %v1070
      %v1109 = vpack.c.b16 %v1073, %v1072
      %v1110 = vpack.c.b16 %v1075, %v1074
      %v1111 = vpack.c.b16 %v1077, %v1076
      %v1112 = vpack.c.b16 %v1079, %v1078
      %v1113 = vpack.c.b16 %v1081, %v1080
      %1146 = vmatprep.subr.bf16.mxu0 0
      %1147 = vmatpush1.bf16.msra.mxu0 %v1089
      %1148 = vmatprep.subr.bf16.mxu0 0
      %1149 = vmatpush1.bf16.msra.mxu0 %v1088
      %1150 = vmatprep.subr.bf16.mxu0 0
      %1151 = vmatpush1.bf16.msra.mxu0 %v1087
      %1152 = vmatprep.subr.bf16.mxu0 0
      %1153 = vmatpush1.bf16.msra.mxu0 %v1086
      %1154 = vmatprep.subr.bf16.mxu0 0
      %1155 = vmatpush1.bf16.msra.mxu0 %v1085
      %1156 = vmatprep.subr.bf16.mxu0 0
      %1157 = vmatpush1.bf16.msra.mxu0 %v1084
      %1158 = vmatprep.subr.bf16.mxu0 0
      %1159 = vmatpush1.bf16.msra.mxu0 %v1083
      %1160 = vmatprep.subr.bf16.mxu0 0
      %1161 = vmatpush1.bf16.msra.mxu0 %v1082
      %1162 = vmatprep.subr.bf16.mxu0 0
      %1163 = vmatpush2.bf16.msra.mxu0 %v1097
      %1164 = vmatprep.subr.bf16.mxu0 0
      %1165 = vmatpush2.bf16.msra.mxu0 %v1096
      %1166 = vmatprep.subr.bf16.mxu0 0
      %1167 = vmatpush2.bf16.msra.mxu0 %v1095
      %1168 = vmatprep.subr.bf16.mxu0 0
      %1169 = vmatpush2.bf16.msra.mxu0 %v1094
      %1170 = vmatprep.subr.bf16.mxu0 0
      %1171 = vmatpush2.bf16.msra.mxu0 %v1093
      %1172 = vmatprep.subr.bf16.mxu0 0
      %1173 = vmatpush2.bf16.msra.mxu0 %v1092
      %1174 = vmatprep.subr.bf16.mxu0 0
      %1175 = vmatpush2.bf16.msra.mxu0 %v1091
      %1176 = vmatprep.subr.bf16.mxu0 0
      %1177 = vmatpush2.bf16.msra.mxu0 %v1090
      %1178 = vmatprep.mubr.bf16.mxu0 %v883
      %1179 = vmatmul.mubr.bf16.gmra.mxu0 %v882
      %v1180 = vpop.f32.mrf.mxu0
      %v1181 = vadd.f32 %v953, %v1180
      %v1182 = vpop.f32.mrf.mxu0
      %v1183 = vpop.f32.mrf.mxu0
      %v1184 = vpop.f32.mrf.mxu0
      %1185 = vdwg.mxu0
      %1186 = vmatprep.subr.bf16.mxu0 0
      %1187 = vmatpush1.bf16.msra.mxu0 %v1105
      %1188 = vmatprep.subr.bf16.mxu0 0
      %1189 = vmatpush1.bf16.msra.mxu0 %v1104
      %1190 = vmatprep.subr.bf16.mxu0 0
      %1191 = vmatpush1.bf16.msra.mxu0 %v1103
      %1192 = vmatprep.subr.bf16.mxu0 0
      %1193 = vmatpush1.bf16.msra.mxu0 %v1102
      %1194 = vmatprep.subr.bf16.mxu0 0
      %1195 = vmatpush1.bf16.msra.mxu0 %v1101
      %1196 = vmatprep.subr.bf16.mxu0 0
      %1197 = vmatpush1.bf16.msra.mxu0 %v1100
      %1198 = vmatprep.subr.bf16.mxu0 0
      %1199 = vmatpush1.bf16.msra.mxu0 %v1099
      %1200 = vmatprep.subr.bf16.mxu0 0
      %1201 = vmatpush1.bf16.msra.mxu0 %v1098
      %1202 = vmatprep.subr.bf16.mxu0 0
      %1203 = vmatpush2.bf16.msra.mxu0 %v1113
      %1204 = vmatprep.subr.bf16.mxu0 0
      %1205 = vmatpush2.bf16.msra.mxu0 %v1112
      %1206 = vmatprep.subr.bf16.mxu0 0
      %1207 = vmatpush2.bf16.msra.mxu0 %v1111
      %1208 = vmatprep.subr.bf16.mxu0 0
      %1209 = vmatpush2.bf16.msra.mxu0 %v1110
      %1210 = vmatprep.subr.bf16.mxu0 0
      %1211 = vmatpush2.bf16.msra.mxu0 %v1109
      %1212 = vmatprep.subr.bf16.mxu0 0
      %1213 = vmatpush2.bf16.msra.mxu0 %v1108
      %1214 = vmatprep.subr.bf16.mxu0 0
      %1215 = vmatpush2.bf16.msra.mxu0 %v1107
      %1216 = vmatprep.subr.bf16.mxu0 0
      %1217 = vmatpush2.bf16.msra.mxu0 %v1106
      %1218 = vmatprep.mubr.bf16.mxu0 %v885
      %1219 = vmatmul.mubr.bf16.gmra.mxu0 %v884
      %v1220 = vpop.f32.mrf.mxu0
      %v1221 = vadd.f32 %v1181, %v1220
      %v1222 = vpop.f32.mrf.mxu0
      %v1223 = vpop.f32.mrf.mxu0
      %v1224 = vpop.f32.mrf.mxu0
      %1225 = vdwg.mxu0
      %v1226 = vmax.f32 %v1221, 0.0
      %v1227 = vlaneseq
      %v1228 = vand.u32 %v1227, 127
      %v1229 = vadd.s32 %v1228, 128
      %v1230 = vadd.s32 %v1228, 256
      %v1231 = vcvt.s32.f32 %v1228
      %v1232 = vcvt.s32.f32 %v1229
      %v1233 = vcvt.s32.f32 %v1230
      %v1234 = vadd.f32 %v1231, 0.5
      %v1235 = vadd.f32 %v1232, 0.5
      %v1236 = vadd.f32 %v1233, 0.5
      %v1237 = vmul.f32 %v1234, 0.09090909
      %v1238 = vmul.f32 %v1235, 0.09090909
      %v1239 = vmul.f32 %v1236, 0.09090909
      %v1240 = vfloor.f32 %v1237
      %v1241 = vfloor.f32 %v1238
      %v1242 = vfloor.f32 %v1239
      %v1243 = vlaneseq
      %v1244 = vshrl.u32 %v1243, 7
      %v1245 = vadd.s32 %v1244, 8
      %v1246 = vadd.s32 %v1244, 16
      %v1247 = vadd.s32 %v1244, 24
      %v1248 = vcvt.s32.f32 %v1244
      %v1249 = vcvt.s32.f32 %v1245
      %v1250 = vcvt.s32.f32 %v1246
      %v1251 = vcvt.s32.f32 %v1247
      %vm1252 = vcmp.eq.f32.partialorder %v1248, %v1240
      %vm1253 = vcmp.eq.f32.partialorder %v1248, %v1241
      %vm1254 = vcmp.eq.f32.partialorder %v1248, %v1242
      %vm1255 = vcmp.eq.f32.partialorder %v1249, %v1240
      %vm1256 = vcmp.eq.f32.partialorder %v1249, %v1241
      %vm1257 = vcmp.eq.f32.partialorder %v1249, %v1242
      %vm1258 = vcmp.eq.f32.partialorder %v1250, %v1240
      %vm1259 = vcmp.eq.f32.partialorder %v1250, %v1241
      %vm1260 = vcmp.eq.f32.partialorder %v1250, %v1242
      %vm1261 = vcmp.eq.f32.partialorder %v1251, %v1240
      %vm1262 = vcmp.eq.f32.partialorder %v1251, %v1241
      %vm1263 = vcmp.eq.f32.partialorder %v1251, %v1242
      %v1264 = vsel %vm1252, 1, 0
      %v1265 = vsel %vm1253, 1, 0
      %v1266 = vsel %vm1254, 1, 0
      %v1267 = vsel %vm1255, 1, 0
      %v1268 = vsel %vm1256, 1, 0
      %v1269 = vsel %vm1257, 1, 0
      %v1270 = vsel %vm1258, 1, 0
      %v1271 = vsel %vm1259, 1, 0
      %v1272 = vsel %vm1260, 1, 0
      %v1273 = vsel %vm1261, 1, 0
      %v1274 = vsel %vm1262, 1, 0
      %v1275 = vsel %vm1263, 1, 0
      %v1276 = vcvt.s32.f32 %v1264
      %v1277 = vcvt.s32.f32 %v1265
      %v1278 = vcvt.s32.f32 %v1266
      %v1279 = vcvt.s32.f32 %v1267
      %v1280 = vcvt.s32.f32 %v1268
      %v1281 = vcvt.s32.f32 %v1269
      %v1282 = vcvt.s32.f32 %v1270
      %v1283 = vcvt.s32.f32 %v1271
      %v1284 = vcvt.s32.f32 %v1272
      %v1285 = vcvt.s32.f32 %v1273
      %v1286 = vcvt.s32.f32 %v1274
      %v1287 = vcvt.s32.f32 %v1275
      %v1288 = vadd.s32 %v1244, 32
      %v1289 = vadd.s32 %v1244, 40
      %v1290 = vadd.s32 %v1244, 48
      %v1291 = vadd.s32 %v1244, 56
      %v1292 = vadd.s32 %v1244, 64
      %v1293 = vadd.s32 %v1244, 72
      %v1294 = vadd.s32 %v1244, 80
      %v1295 = vadd.s32 %v1244, 88
      %v1296 = vadd.s32 %v1244, 96
      %v1297 = vadd.s32 %v1244, 104
      %v1298 = vadd.s32 %v1244, 112
      %v1299 = vadd.s32 %v1244, 120
      %v1300 = vadd.s32 %v1244, 128
      %v1301 = vadd.s32 %v1244, 136
      %v1302 = vadd.s32 %v1244, 144
      %v1303 = vadd.s32 %v1244, 152
      %v1304 = vadd.s32 %v1244, 160
      %v1305 = vadd.s32 %v1244, 168
      %v1306 = vadd.s32 %v1244, 176
      %v1307 = vadd.s32 %v1244, 184
      %v1308 = vadd.s32 %v1244, 192
      %v1309 = vadd.s32 %v1244, 200
      %v1310 = vadd.s32 %v1244, 208
      %v1311 = vadd.s32 %v1244, 216
      %v1312 = vadd.s32 %v1244, 224
      %v1313 = vadd.s32 %v1244, 232
      %v1314 = vadd.s32 %v1244, 240
      %v1315 = vadd.s32 %v1244, 248
      %v1316 = vadd.s32 %v1244, 256
      %v1317 = vadd.s32 %v1244, 264
      %v1318 = vadd.s32 %v1244, 272
      %v1319 = vadd.s32 %v1244, 280
      %v1320 = vadd.s32 %v1244, 288
      %v1321 = vadd.s32 %v1244, 296
      %v1322 = vadd.s32 %v1244, 304
      %v1323 = vadd.s32 %v1244, 312
      %v1324 = vadd.s32 %v1244, 320
      %v1325 = vadd.s32 %v1244, 328
      %v1326 = vadd.s32 %v1244, 336
      %v1327 = vadd.s32 %v1244, 344
      %v1328 = vcvt.s32.f32 %v1288
      %v1329 = vcvt.s32.f32 %v1289
      %v1330 = vcvt.s32.f32 %v1290
      %v1331 = vcvt.s32.f32 %v1291
      %v1332 = vcvt.s32.f32 %v1292
      %v1333 = vcvt.s32.f32 %v1293
      %v1334 = vcvt.s32.f32 %v1294
      %v1335 = vcvt.s32.f32 %v1295
      %v1336 = vcvt.s32.f32 %v1296
      %v1337 = vcvt.s32.f32 %v1297
      %v1338 = vcvt.s32.f32 %v1298
      %v1339 = vcvt.s32.f32 %v1299
      %v1340 = vcvt.s32.f32 %v1300
      %v1341 = vcvt.s32.f32 %v1301
      %v1342 = vcvt.s32.f32 %v1302
      %v1343 = vcvt.s32.f32 %v1303
      %v1344 = vcvt.s32.f32 %v1304
      %v1345 = vcvt.s32.f32 %v1305
      %v1346 = vcvt.s32.f32 %v1306
      %v1347 = vcvt.s32.f32 %v1307
      %v1348 = vcvt.s32.f32 %v1308
      %v1349 = vcvt.s32.f32 %v1309
      %v1350 = vcvt.s32.f32 %v1310
      %v1351 = vcvt.s32.f32 %v1311
      %v1352 = vcvt.s32.f32 %v1312
      %v1353 = vcvt.s32.f32 %v1313
      %v1354 = vcvt.s32.f32 %v1314
      %v1355 = vcvt.s32.f32 %v1315
      %v1356 = vcvt.s32.f32 %v1316
      %v1357 = vcvt.s32.f32 %v1317
      %v1358 = vcvt.s32.f32 %v1318
      %v1359 = vcvt.s32.f32 %v1319
      %v1360 = vcvt.s32.f32 %v1320
      %v1361 = vcvt.s32.f32 %v1321
      %v1362 = vcvt.s32.f32 %v1322
      %v1363 = vcvt.s32.f32 %v1323
      %v1364 = vcvt.s32.f32 %v1324
      %v1365 = vcvt.s32.f32 %v1325
      %v1366 = vcvt.s32.f32 %v1326
      %v1367 = vcvt.s32.f32 %v1327
      %v1368 = vadd.f32 %v1248, 0.5
      %v1369 = vadd.f32 %v1249, 0.5
      %v1370 = vadd.f32 %v1250, 0.5
      %v1371 = vadd.f32 %v1251, 0.5
      %v1372 = vadd.f32 %v1328, 0.5
      %v1373 = vadd.f32 %v1329, 0.5
      %v1374 = vadd.f32 %v1330, 0.5
      %v1375 = vadd.f32 %v1331, 0.5
      %v1376 = vadd.f32 %v1332, 0.5
      %v1377 = vadd.f32 %v1333, 0.5
      %v1378 = vadd.f32 %v1334, 0.5
      %v1379 = vadd.f32 %v1335, 0.5
      %v1380 = vadd.f32 %v1336, 0.5
      %v1381 = vadd.f32 %v1337, 0.5
      %v1382 = vadd.f32 %v1338, 0.5
      %v1383 = vadd.f32 %v1339, 0.5
      %v1384 = vadd.f32 %v1340, 0.5
      %v1385 = vadd.f32 %v1341, 0.5
      %v1386 = vadd.f32 %v1342, 0.5
      %v1387 = vadd.f32 %v1343, 0.5
      %v1388 = vadd.f32 %v1344, 0.5
      %v1389 = vadd.f32 %v1345, 0.5
      %v1390 = vadd.f32 %v1346, 0.5
      %v1391 = vadd.f32 %v1347, 0.5
      %v1392 = vadd.f32 %v1348, 0.5
      %v1393 = vadd.f32 %v1349, 0.5
      %v1394 = vadd.f32 %v1350, 0.5
      %v1395 = vadd.f32 %v1351, 0.5
      %v1396 = vadd.f32 %v1352, 0.5
      %v1397 = vadd.f32 %v1353, 0.5
      %v1398 = vadd.f32 %v1354, 0.5
      %v1399 = vadd.f32 %v1355, 0.5
      %v1400 = vadd.f32 %v1356, 0.5
      %v1401 = vadd.f32 %v1357, 0.5
      %v1402 = vadd.f32 %v1358, 0.5
      %v1403 = vadd.f32 %v1359, 0.5
      %v1404 = vadd.f32 %v1360, 0.5
      %v1405 = vadd.f32 %v1361, 0.5
      %v1406 = vadd.f32 %v1362, 0.5
      %v1407 = vadd.f32 %v1363, 0.5
      %v1408 = vadd.f32 %v1364, 0.5
      %v1409 = vadd.f32 %v1365, 0.5
      %v1410 = vadd.f32 %v1366, 0.5
      %v1411 = vadd.f32 %v1367, 0.5
      %v1412 = vmul.f32 %v1368, 0.09090909
      %v1413 = vmul.f32 %v1369, 0.09090909
      %v1414 = vmul.f32 %v1370, 0.09090909
      %v1415 = vmul.f32 %v1371, 0.09090909
      %v1416 = vmul.f32 %v1372, 0.09090909
      %v1417 = vmul.f32 %v1373, 0.09090909
      %v1418 = vmul.f32 %v1374, 0.09090909
      %v1419 = vmul.f32 %v1375, 0.09090909
      %v1420 = vmul.f32 %v1376, 0.09090909
      %v1421 = vmul.f32 %v1377, 0.09090909
      %v1422 = vmul.f32 %v1378, 0.09090909
      %v1423 = vmul.f32 %v1379, 0.09090909
      %v1424 = vmul.f32 %v1380, 0.09090909
      %v1425 = vmul.f32 %v1381, 0.09090909
      %v1426 = vmul.f32 %v1382, 0.09090909
      %v1427 = vmul.f32 %v1383, 0.09090909
      %v1428 = vmul.f32 %v1384, 0.09090909
      %v1429 = vmul.f32 %v1385, 0.09090909
      %v1430 = vmul.f32 %v1386, 0.09090909
      %v1431 = vmul.f32 %v1387, 0.09090909
      %v1432 = vmul.f32 %v1388, 0.09090909
      %v1433 = vmul.f32 %v1389, 0.09090909
      %v1434 = vmul.f32 %v1390, 0.09090909
      %v1435 = vmul.f32 %v1391, 0.09090909
      %v1436 = vmul.f32 %v1392, 0.09090909
      %v1437 = vmul.f32 %v1393, 0.09090909
      %v1438 = vmul.f32 %v1394, 0.09090909
      %v1439 = vmul.f32 %v1395, 0.09090909
      %v1440 = vmul.f32 %v1396, 0.09090909
      %v1441 = vmul.f32 %v1397, 0.09090909
      %v1442 = vmul.f32 %v1398, 0.09090909
      %v1443 = vmul.f32 %v1399, 0.09090909
      %v1444 = vmul.f32 %v1400, 0.09090909
      %v1445 = vmul.f32 %v1401, 0.09090909
      %v1446 = vmul.f32 %v1402, 0.09090909
      %v1447 = vmul.f32 %v1403, 0.09090909
      %v1448 = vmul.f32 %v1404, 0.09090909
      %v1449 = vmul.f32 %v1405, 0.09090909
      %v1450 = vmul.f32 %v1406, 0.09090909
      %v1451 = vmul.f32 %v1407, 0.09090909
      %v1452 = vmul.f32 %v1408, 0.09090909
      %v1453 = vmul.f32 %v1409, 0.09090909
      %v1454 = vmul.f32 %v1410, 0.09090909
      %v1455 = vmul.f32 %v1411, 0.09090909
      %v1456 = vfloor.f32 %v1412
      %v1457 = vfloor.f32 %v1413
      %v1458 = vfloor.f32 %v1414
      %v1459 = vfloor.f32 %v1415
      %v1460 = vfloor.f32 %v1416
      %v1461 = vfloor.f32 %v1417
      %v1462 = vfloor.f32 %v1418
      %v1463 = vfloor.f32 %v1419
      %v1464 = vfloor.f32 %v1420
      %v1465 = vfloor.f32 %v1421
      %v1466 = vfloor.f32 %v1422
      %v1467 = vfloor.f32 %v1423
      %v1468 = vfloor.f32 %v1424
      %v1469 = vfloor.f32 %v1425
      %v1470 = vfloor.f32 %v1426
      %v1471 = vfloor.f32 %v1427
      %v1472 = vfloor.f32 %v1428
      %v1473 = vfloor.f32 %v1429
      %v1474 = vfloor.f32 %v1430
      %v1475 = vfloor.f32 %v1431
      %v1476 = vfloor.f32 %v1432
      %v1477 = vfloor.f32 %v1433
      %v1478 = vfloor.f32 %v1434
      %v1479 = vfloor.f32 %v1435
      %v1480 = vfloor.f32 %v1436
      %v1481 = vfloor.f32 %v1437
      %v1482 = vfloor.f32 %v1438
      %v1483 = vfloor.f32 %v1439
      %v1484 = vfloor.f32 %v1440
      %v1485 = vfloor.f32 %v1441
      %v1486 = vfloor.f32 %v1442
      %v1487 = vfloor.f32 %v1443
      %v1488 = vfloor.f32 %v1444
      %v1489 = vfloor.f32 %v1445
      %v1490 = vfloor.f32 %v1446
      %v1491 = vfloor.f32 %v1447
      %v1492 = vfloor.f32 %v1448
      %v1493 = vfloor.f32 %v1449
      %v1494 = vfloor.f32 %v1450
      %v1495 = vfloor.f32 %v1451
      %v1496 = vfloor.f32 %v1452
      %v1497 = vfloor.f32 %v1453
      %v1498 = vfloor.f32 %v1454
      %v1499 = vfloor.f32 %v1455
      %vm1500 = vcmp.eq.f32.partialorder %v1456, %v1240
      %vm1501 = vcmp.eq.f32.partialorder %v1456, %v1241
      %vm1502 = vcmp.eq.f32.partialorder %v1456, %v1242
      %vm1503 = vcmp.eq.f32.partialorder %v1457, %v1240
      %vm1504 = vcmp.eq.f32.partialorder %v1457, %v1241
      %vm1505 = vcmp.eq.f32.partialorder %v1457, %v1242
      %vm1506 = vcmp.eq.f32.partialorder %v1458, %v1240
      %vm1507 = vcmp.eq.f32.partialorder %v1458, %v1241
      %vm1508 = vcmp.eq.f32.partialorder %v1458, %v1242
      %vm1509 = vcmp.eq.f32.partialorder %v1459, %v1240
      %vm1510 = vcmp.eq.f32.partialorder %v1459, %v1241
      %vm1511 = vcmp.eq.f32.partialorder %v1459, %v1242
      %vm1512 = vcmp.eq.f32.partialorder %v1460, %v1240
      %vm1513 = vcmp.eq.f32.partialorder %v1460, %v1241
      %vm1514 = vcmp.eq.f32.partialorder %v1460, %v1242
      %vm1515 = vcmp.eq.f32.partialorder %v1461, %v1240
      %vm1516 = vcmp.eq.f32.partialorder %v1461, %v1241
      %vm1517 = vcmp.eq.f32.partialorder %v1461, %v1242
      %vm1518 = vcmp.eq.f32.partialorder %v1462, %v1240
      %vm1519 = vcmp.eq.f32.partialorder %v1462, %v1241
      %vm1520 = vcmp.eq.f32.partialorder %v1462, %v1242
      %vm1521 = vcmp.eq.f32.partialorder %v1463, %v1240
      %vm1522 = vcmp.eq.f32.partialorder %v1463, %v1241
      %vm1523 = vcmp.eq.f32.partialorder %v1463, %v1242
      %vm1524 = vcmp.eq.f32.partialorder %v1464, %v1240
      %vm1525 = vcmp.eq.f32.partialorder %v1464, %v1241
      %vm1526 = vcmp.eq.f32.partialorder %v1464, %v1242
      %vm1527 = vcmp.eq.f32.partialorder %v1465, %v1240
      %vm1528 = vcmp.eq.f32.partialorder %v1465, %v1241
      %vm1529 = vcmp.eq.f32.partialorder %v1465, %v1242
      %vm1530 = vcmp.eq.f32.partialorder %v1466, %v1240
      %vm1531 = vcmp.eq.f32.partialorder %v1466, %v1241
      %vm1532 = vcmp.eq.f32.partialorder %v1466, %v1242
      %vm1533 = vcmp.eq.f32.partialorder %v1467, %v1240
      %vm1534 = vcmp.eq.f32.partialorder %v1467, %v1241
      %vm1535 = vcmp.eq.f32.partialorder %v1467, %v1242
      %vm1536 = vcmp.eq.f32.partialorder %v1468, %v1240
      %vm1537 = vcmp.eq.f32.partialorder %v1468, %v1241
      %vm1538 = vcmp.eq.f32.partialorder %v1468, %v1242
      %vm1539 = vcmp.eq.f32.partialorder %v1469, %v1240
      %vm1540 = vcmp.eq.f32.partialorder %v1469, %v1241
      %vm1541 = vcmp.eq.f32.partialorder %v1469, %v1242
      %vm1542 = vcmp.eq.f32.partialorder %v1470, %v1240
      %vm1543 = vcmp.eq.f32.partialorder %v1470, %v1241
      %vm1544 = vcmp.eq.f32.partialorder %v1470, %v1242
      %vm1545 = vcmp.eq.f32.partialorder %v1471, %v1240
      %vm1546 = vcmp.eq.f32.partialorder %v1471, %v1241
      %vm1547 = vcmp.eq.f32.partialorder %v1471, %v1242
      %vm1548 = vcmp.eq.f32.partialorder %v1472, %v1240
      %vm1549 = vcmp.eq.f32.partialorder %v1472, %v1241
      %vm1550 = vcmp.eq.f32.partialorder %v1472, %v1242
      %vm1551 = vcmp.eq.f32.partialorder %v1473, %v1240
      %vm1552 = vcmp.eq.f32.partialorder %v1473, %v1241
      %vm1553 = vcmp.eq.f32.partialorder %v1473, %v1242
      %vm1554 = vcmp.eq.f32.partialorder %v1474, %v1240
      %vm1555 = vcmp.eq.f32.partialorder %v1474, %v1241
      %vm1556 = vcmp.eq.f32.partialorder %v1474, %v1242
      %vm1557 = vcmp.eq.f32.partialorder %v1475, %v1240
      %vm1558 = vcmp.eq.f32.partialorder %v1475, %v1241
      %vm1559 = vcmp.eq.f32.partialorder %v1475, %v1242
      %vm1560 = vcmp.eq.f32.partialorder %v1476, %v1240
      %vm1561 = vcmp.eq.f32.partialorder %v1476, %v1241
      %vm1562 = vcmp.eq.f32.partialorder %v1476, %v1242
      %vm1563 = vcmp.eq.f32.partialorder %v1477, %v1240
      %vm1564 = vcmp.eq.f32.partialorder %v1477, %v1241
      %vm1565 = vcmp.eq.f32.partialorder %v1477, %v1242
      %vm1566 = vcmp.eq.f32.partialorder %v1478, %v1240
      %vm1567 = vcmp.eq.f32.partialorder %v1478, %v1241
      %vm1568 = vcmp.eq.f32.partialorder %v1478, %v1242
      %vm1569 = vcmp.eq.f32.partialorder %v1479, %v1240
      %vm1570 = vcmp.eq.f32.partialorder %v1479, %v1241
      %vm1571 = vcmp.eq.f32.partialorder %v1479, %v1242
      %vm1572 = vcmp.eq.f32.partialorder %v1480, %v1240
      %vm1573 = vcmp.eq.f32.partialorder %v1480, %v1241
      %vm1574 = vcmp.eq.f32.partialorder %v1480, %v1242
      %vm1575 = vcmp.eq.f32.partialorder %v1481, %v1240
      %vm1576 = vcmp.eq.f32.partialorder %v1481, %v1241
      %vm1577 = vcmp.eq.f32.partialorder %v1481, %v1242
      %vm1578 = vcmp.eq.f32.partialorder %v1482, %v1240
      %vm1579 = vcmp.eq.f32.partialorder %v1482, %v1241
      %vm1580 = vcmp.eq.f32.partialorder %v1482, %v1242
      %vm1581 = vcmp.eq.f32.partialorder %v1483, %v1240
      %vm1582 = vcmp.eq.f32.partialorder %v1483, %v1241
      %vm1583 = vcmp.eq.f32.partialorder %v1483, %v1242
      %vm1584 = vcmp.eq.f32.partialorder %v1484, %v1240
      %vm1585 = vcmp.eq.f32.partialorder %v1484, %v1241
      %vm1586 = vcmp.eq.f32.partialorder %v1484, %v1242
      %vm1587 = vcmp.eq.f32.partialorder %v1485, %v1240
      %vm1588 = vcmp.eq.f32.partialorder %v1485, %v1241
      %vm1589 = vcmp.eq.f32.partialorder %v1485, %v1242
      %vm1590 = vcmp.eq.f32.partialorder %v1486, %v1240
      %vm1591 = vcmp.eq.f32.partialorder %v1486, %v1241
      %vm1592 = vcmp.eq.f32.partialorder %v1486, %v1242
      %vm1593 = vcmp.eq.f32.partialorder %v1487, %v1240
      %vm1594 = vcmp.eq.f32.partialorder %v1487, %v1241
      %vm1595 = vcmp.eq.f32.partialorder %v1487, %v1242
      %vm1596 = vcmp.eq.f32.partialorder %v1488, %v1240
      %vm1597 = vcmp.eq.f32.partialorder %v1488, %v1241
      %vm1598 = vcmp.eq.f32.partialorder %v1488, %v1242
      %vm1599 = vcmp.eq.f32.partialorder %v1489, %v1240
      %vm1600 = vcmp.eq.f32.partialorder %v1489, %v1241
      %vm1601 = vcmp.eq.f32.partialorder %v1489, %v1242
      %vm1602 = vcmp.eq.f32.partialorder %v1490, %v1240
      %vm1603 = vcmp.eq.f32.partialorder %v1490, %v1241
      %vm1604 = vcmp.eq.f32.partialorder %v1490, %v1242
      %vm1605 = vcmp.eq.f32.partialorder %v1491, %v1240
      %vm1606 = vcmp.eq.f32.partialorder %v1491, %v1241
      %vm1607 = vcmp.eq.f32.partialorder %v1491, %v1242
      %vm1608 = vcmp.eq.f32.partialorder %v1492, %v1240
      %vm1609 = vcmp.eq.f32.partialorder %v1492, %v1241
      %vm1610 = vcmp.eq.f32.partialorder %v1492, %v1242
      %vm1611 = vcmp.eq.f32.partialorder %v1493, %v1240
      %vm1612 = vcmp.eq.f32.partialorder %v1493, %v1241
      %vm1613 = vcmp.eq.f32.partialorder %v1493, %v1242
      %vm1614 = vcmp.eq.f32.partialorder %v1494, %v1240
      %vm1615 = vcmp.eq.f32.partialorder %v1494, %v1241
      %vm1616 = vcmp.eq.f32.partialorder %v1494, %v1242
      %vm1617 = vcmp.eq.f32.partialorder %v1495, %v1240
      %vm1618 = vcmp.eq.f32.partialorder %v1495, %v1241
      %vm1619 = vcmp.eq.f32.partialorder %v1495, %v1242
      %vm1620 = vcmp.eq.f32.partialorder %v1496, %v1240
      %vm1621 = vcmp.eq.f32.partialorder %v1496, %v1241
      %vm1622 = vcmp.eq.f32.partialorder %v1496, %v1242
      %vm1623 = vcmp.eq.f32.partialorder %v1497, %v1240
      %vm1624 = vcmp.eq.f32.partialorder %v1497, %v1241
      %vm1625 = vcmp.eq.f32.partialorder %v1497, %v1242
      %vm1626 = vcmp.eq.f32.partialorder %v1498, %v1240
      %vm1627 = vcmp.eq.f32.partialorder %v1498, %v1241
      %vm1628 = vcmp.eq.f32.partialorder %v1498, %v1242
      %vm1629 = vcmp.eq.f32.partialorder %v1499, %v1240
      %vm1630 = vcmp.eq.f32.partialorder %v1499, %v1241
      %vm1631 = vcmp.eq.f32.partialorder %v1499, %v1242
      %v1632 = vsel %vm1500, 1, 0
      %v1633 = vsel %vm1501, 1, 0
      %v1634 = vsel %vm1502, 1, 0
      %v1635 = vsel %vm1503, 1, 0
      %v1636 = vsel %vm1504, 1, 0
      %v1637 = vsel %vm1505, 1, 0
      %v1638 = vsel %vm1506, 1, 0
      %v1639 = vsel %vm1507, 1, 0
      %v1640 = vsel %vm1508, 1, 0
      %v1641 = vsel %vm1509, 1, 0
      %v1642 = vsel %vm1510, 1, 0
      %v1643 = vsel %vm1511, 1, 0
      %v1644 = vsel %vm1512, 1, 0
      %v1645 = vsel %vm1513, 1, 0
      %v1646 = vsel %vm1514, 1, 0
      %v1647 = vsel %vm1515, 1, 0
      %v1648 = vsel %vm1516, 1, 0
      %v1649 = vsel %vm1517, 1, 0
      %v1650 = vsel %vm1518, 1, 0
      %v1651 = vsel %vm1519, 1, 0
      %v1652 = vsel %vm1520, 1, 0
      %v1653 = vsel %vm1521, 1, 0
      %v1654 = vsel %vm1522, 1, 0
      %v1655 = vsel %vm1523, 1, 0
      %v1656 = vsel %vm1524, 1, 0
      %v1657 = vsel %vm1525, 1, 0
      %v1658 = vsel %vm1526, 1, 0
      %v1659 = vsel %vm1527, 1, 0
      %v1660 = vsel %vm1528, 1, 0
      %v1661 = vsel %vm1529, 1, 0
      %v1662 = vsel %vm1530, 1, 0
      %v1663 = vsel %vm1531, 1, 0
      %v1664 = vsel %vm1532, 1, 0
      %v1665 = vsel %vm1533, 1, 0
      %v1666 = vsel %vm1534, 1, 0
      %v1667 = vsel %vm1535, 1, 0
      %v1668 = vsel %vm1536, 1, 0
      %v1669 = vsel %vm1537, 1, 0
      %v1670 = vsel %vm1538, 1, 0
      %v1671 = vsel %vm1539, 1, 0
      %v1672 = vsel %vm1540, 1, 0
      %v1673 = vsel %vm1541, 1, 0
      %v1674 = vsel %vm1542, 1, 0
      %v1675 = vsel %vm1543, 1, 0
      %v1676 = vsel %vm1544, 1, 0
      %v1677 = vsel %vm1545, 1, 0
      %v1678 = vsel %vm1546, 1, 0
      %v1679 = vsel %vm1547, 1, 0
      %v1680 = vsel %vm1548, 1, 0
      %v1681 = vsel %vm1549, 1, 0
      %v1682 = vsel %vm1550, 1, 0
      %v1683 = vsel %vm1551, 1, 0
      %v1684 = vsel %vm1552, 1, 0
      %v1685 = vsel %vm1553, 1, 0
      %v1686 = vsel %vm1554, 1, 0
      %v1687 = vsel %vm1555, 1, 0
      %v1688 = vsel %vm1556, 1, 0
      %v1689 = vsel %vm1557, 1, 0
      %v1690 = vsel %vm1558, 1, 0
      %v1691 = vsel %vm1559, 1, 0
      %v1692 = vsel %vm1560, 1, 0
      %v1693 = vsel %vm1561, 1, 0
      %v1694 = vsel %vm1562, 1, 0
      %v1695 = vsel %vm1563, 1, 0
      %v1696 = vsel %vm1564, 1, 0
      %v1697 = vsel %vm1565, 1, 0
      %v1698 = vsel %vm1566, 1, 0
      %v1699 = vsel %vm1567, 1, 0
      %v1700 = vsel %vm1568, 1, 0
      %v1701 = vsel %vm1569, 1, 0
      %v1702 = vsel %vm1570, 1, 0
      %v1703 = vsel %vm1571, 1, 0
      %v1704 = vsel %vm1572, 1, 0
      %v1705 = vsel %vm1573, 1, 0
      %v1706 = vsel %vm1574, 1, 0
      %v1707 = vsel %vm1575, 1, 0
      %v1708 = vsel %vm1576, 1, 0
      %v1709 = vsel %vm1577, 1, 0
      %v1710 = vsel %vm1578, 1, 0
      %v1711 = vsel %vm1579, 1, 0
      %v1712 = vsel %vm1580, 1, 0
      %v1713 = vsel %vm1581, 1, 0
      %v1714 = vsel %vm1582, 1, 0
      %v1715 = vsel %vm1583, 1, 0
      %v1716 = vsel %vm1584, 1, 0
      %v1717 = vsel %vm1585, 1, 0
      %v1718 = vsel %vm1586, 1, 0
      %v1719 = vsel %vm1587, 1, 0
      %v1720 = vsel %vm1588, 1, 0
      %v1721 = vsel %vm1589, 1, 0
      %v1722 = vsel %vm1590, 1, 0
      %v1723 = vsel %vm1591, 1, 0
      %v1724 = vsel %vm1592, 1, 0
      %v1725 = vsel %vm1593, 1, 0
      %v1726 = vsel %vm1594, 1, 0
      %v1727 = vsel %vm1595, 1, 0
      %v1728 = vsel %vm1596, 1, 0
      %v1729 = vsel %vm1597, 1, 0
      %v1730 = vsel %vm1598, 1, 0
      %v1731 = vsel %vm1599, 1, 0
      %v1732 = vsel %vm1600, 1, 0
      %v1733 = vsel %vm1601, 1, 0
      %v1734 = vsel %vm1602, 1, 0
      %v1735 = vsel %vm1603, 1, 0
      %v1736 = vsel %vm1604, 1, 0
      %v1737 = vsel %vm1605, 1, 0
      %v1738 = vsel %vm1606, 1, 0
      %v1739 = vsel %vm1607, 1, 0
      %v1740 = vsel %vm1608, 1, 0
      %v1741 = vsel %vm1609, 1, 0
      %v1742 = vsel %vm1610, 1, 0
      %v1743 = vsel %vm1611, 1, 0
      %v1744 = vsel %vm1612, 1, 0
      %v1745 = vsel %vm1613, 1, 0
      %v1746 = vsel %vm1614, 1, 0
      %v1747 = vsel %vm1615, 1, 0
      %v1748 = vsel %vm1616, 1, 0
      %v1749 = vsel %vm1617, 1, 0
      %v1750 = vsel %vm1618, 1, 0
      %v1751 = vsel %vm1619, 1, 0
      %v1752 = vsel %vm1620, 1, 0
      %v1753 = vsel %vm1621, 1, 0
      %v1754 = vsel %vm1622, 1, 0
      %v1755 = vsel %vm1623, 1, 0
      %v1756 = vsel %vm1624, 1, 0
      %v1757 = vsel %vm1625, 1, 0
      %v1758 = vsel %vm1626, 1, 0
      %v1759 = vsel %vm1627, 1, 0
      %v1760 = vsel %vm1628, 1, 0
      %v1761 = vsel %vm1629, 1, 0
      %v1762 = vsel %vm1630, 1, 0
      %v1763 = vsel %vm1631, 1, 0
      %v1764 = vcvt.s32.f32 %v1632
      %v1765 = vcvt.s32.f32 %v1633
      %v1766 = vcvt.s32.f32 %v1634
      %v1767 = vcvt.s32.f32 %v1635
      %v1768 = vcvt.s32.f32 %v1636
      %v1769 = vcvt.s32.f32 %v1637
      %v1770 = vcvt.s32.f32 %v1638
      %v1771 = vcvt.s32.f32 %v1639
      %v1772 = vcvt.s32.f32 %v1640
      %v1773 = vcvt.s32.f32 %v1641
      %v1774 = vcvt.s32.f32 %v1642
      %v1775 = vcvt.s32.f32 %v1643
      %v1776 = vcvt.s32.f32 %v1644
      %v1777 = vcvt.s32.f32 %v1645
      %v1778 = vcvt.s32.f32 %v1646
      %v1779 = vcvt.s32.f32 %v1647
      %v1780 = vcvt.s32.f32 %v1648
      %v1781 = vcvt.s32.f32 %v1649
      %v1782 = vcvt.s32.f32 %v1650
      %v1783 = vcvt.s32.f32 %v1651
      %v1784 = vcvt.s32.f32 %v1652
      %v1785 = vcvt.s32.f32 %v1653
      %v1786 = vcvt.s32.f32 %v1654
      %v1787 = vcvt.s32.f32 %v1655
      %v1788 = vcvt.s32.f32 %v1656
      %v1789 = vcvt.s32.f32 %v1657
      %v1790 = vcvt.s32.f32 %v1658
      %v1791 = vcvt.s32.f32 %v1659
      %v1792 = vcvt.s32.f32 %v1660
      %v1793 = vcvt.s32.f32 %v1661
      %v1794 = vcvt.s32.f32 %v1662
      %v1795 = vcvt.s32.f32 %v1663
      %v1796 = vcvt.s32.f32 %v1664
      %v1797 = vcvt.s32.f32 %v1665
      %v1798 = vcvt.s32.f32 %v1666
      %v1799 = vcvt.s32.f32 %v1667
      %v1800 = vcvt.s32.f32 %v1668
      %v1801 = vcvt.s32.f32 %v1669
      %v1802 = vcvt.s32.f32 %v1670
      %v1803 = vcvt.s32.f32 %v1671
      %v1804 = vcvt.s32.f32 %v1672
      %v1805 = vcvt.s32.f32 %v1673
      %v1806 = vcvt.s32.f32 %v1674
      %v1807 = vcvt.s32.f32 %v1675
      %v1808 = vcvt.s32.f32 %v1676
      %v1809 = vcvt.s32.f32 %v1677
      %v1810 = vcvt.s32.f32 %v1678
      %v1811 = vcvt.s32.f32 %v1679
      %v1812 = vcvt.s32.f32 %v1680
      %v1813 = vcvt.s32.f32 %v1681
      %v1814 = vcvt.s32.f32 %v1682
      %v1815 = vcvt.s32.f32 %v1683
      %v1816 = vcvt.s32.f32 %v1684
      %v1817 = vcvt.s32.f32 %v1685
      %v1818 = vcvt.s32.f32 %v1686
      %v1819 = vcvt.s32.f32 %v1687
      %v1820 = vcvt.s32.f32 %v1688
      %v1821 = vcvt.s32.f32 %v1689
      %v1822 = vcvt.s32.f32 %v1690
      %v1823 = vcvt.s32.f32 %v1691
      %v1824 = vcvt.s32.f32 %v1692
      %v1825 = vcvt.s32.f32 %v1693
      %v1826 = vcvt.s32.f32 %v1694
      %v1827 = vcvt.s32.f32 %v1695
      %v1828 = vcvt.s32.f32 %v1696
      %v1829 = vcvt.s32.f32 %v1697
      %v1830 = vcvt.s32.f32 %v1698
      %v1831 = vcvt.s32.f32 %v1699
      %v1832 = vcvt.s32.f32 %v1700
      %v1833 = vcvt.s32.f32 %v1701
      %v1834 = vcvt.s32.f32 %v1702
      %v1835 = vcvt.s32.f32 %v1703
      %v1836 = vcvt.s32.f32 %v1704
      %v1837 = vcvt.s32.f32 %v1705
      %v1838 = vcvt.s32.f32 %v1706
      %v1839 = vcvt.s32.f32 %v1707
      %v1840 = vcvt.s32.f32 %v1708
      %v1841 = vcvt.s32.f32 %v1709
      %v1842 = vcvt.s32.f32 %v1710
      %v1843 = vcvt.s32.f32 %v1711
      %v1844 = vcvt.s32.f32 %v1712
      %v1845 = vcvt.s32.f32 %v1713
      %v1846 = vcvt.s32.f32 %v1714
      %v1847 = vcvt.s32.f32 %v1715
      %v1848 = vcvt.s32.f32 %v1716
      %v1849 = vcvt.s32.f32 %v1717
      %v1850 = vcvt.s32.f32 %v1718
      %v1851 = vcvt.s32.f32 %v1719
      %v1852 = vcvt.s32.f32 %v1720
      %v1853 = vcvt.s32.f32 %v1721
      %v1854 = vcvt.s32.f32 %v1722
      %v1855 = vcvt.s32.f32 %v1723
      %v1856 = vcvt.s32.f32 %v1724
      %v1857 = vcvt.s32.f32 %v1725
      %v1858 = vcvt.s32.f32 %v1726
      %v1859 = vcvt.s32.f32 %v1727
      %v1860 = vcvt.s32.f32 %v1728
      %v1861 = vcvt.s32.f32 %v1729
      %v1862 = vcvt.s32.f32 %v1730
      %v1863 = vcvt.s32.f32 %v1731
      %v1864 = vcvt.s32.f32 %v1732
      %v1865 = vcvt.s32.f32 %v1733
      %v1866 = vcvt.s32.f32 %v1734
      %v1867 = vcvt.s32.f32 %v1735
      %v1868 = vcvt.s32.f32 %v1736
      %v1869 = vcvt.s32.f32 %v1737
      %v1870 = vcvt.s32.f32 %v1738
      %v1871 = vcvt.s32.f32 %v1739
      %v1872 = vcvt.s32.f32 %v1740
      %v1873 = vcvt.s32.f32 %v1741
      %v1874 = vcvt.s32.f32 %v1742
      %v1875 = vcvt.s32.f32 %v1743
      %v1876 = vcvt.s32.f32 %v1744
      %v1877 = vcvt.s32.f32 %v1745
      %v1878 = vcvt.s32.f32 %v1746
      %v1879 = vcvt.s32.f32 %v1747
      %v1880 = vcvt.s32.f32 %v1748
      %v1881 = vcvt.s32.f32 %v1749
      %v1882 = vcvt.s32.f32 %v1750
      %v1883 = vcvt.s32.f32 %v1751
      %v1884 = vcvt.s32.f32 %v1752
      %v1885 = vcvt.s32.f32 %v1753
      %v1886 = vcvt.s32.f32 %v1754
      %v1887 = vcvt.s32.f32 %v1755
      %v1888 = vcvt.s32.f32 %v1756
      %v1889 = vcvt.s32.f32 %v1757
      %v1890 = vcvt.s32.f32 %v1758
      %v1891 = vcvt.s32.f32 %v1759
      %v1892 = vcvt.s32.f32 %v1760
      %v1893 = vcvt.s32.f32 %v1761
      %v1894 = vcvt.s32.f32 %v1762
      %v1895 = vcvt.s32.f32 %v1763
      %vm1896 = vcmask 261120
      %v1898 = vsel %vm1896, %v1226, 0
      %1900 = vmatprep.subr.mxu0 0.0
      %1901 = vmatpush1.msra.mxu0 0.0
      %1902 = vmatprep.subr.mxu0 0.0
      %1903 = vmatpush1.msra.mxu0 0.0
      %1904 = vmatprep.subr.mxu0 0.0
      %1905 = vmatpush1.msra.mxu0 0.0
      %1906 = vmatprep.subr.mxu0 0.0
      %1907 = vmatpush1.msra.mxu0 0.0
      %1908 = vmatprep.subr.mxu0 0.0
      %1909 = vmatpush1.msra.mxu0 0.0
      %1910 = vmatprep.subr.mxu0 0.0
      %1911 = vmatpush1.msra.mxu0 0.0
      %1912 = vmatprep.subr.mxu0 0.0
      %1913 = vmatpush1.msra.mxu0 0.0
      %1914 = vmatprep.subr.mxu0 0.0
      %1915 = vmatpush1.msra.mxu0 0.0
      %1916 = vmatprep.subr.mxu0 0.0
      %1917 = vmatpush1.msra.mxu0 0.0
      %1918 = vmatprep.subr.mxu0 0.0
      %1919 = vmatpush1.msra.mxu0 0.0
      %1920 = vmatprep.subr.mxu0 0.0
      %1921 = vmatpush1.msra.mxu0 0.0
      %1922 = vmatprep.subr.mxu0 0.0
      %1923 = vmatpush1.msra.mxu0 0.0
      %1924 = vmatprep.subr.mxu0 %v1286
      %1925 = vmatpush1.msra.mxu0 %v1285
      %1926 = vmatprep.subr.mxu0 %v1283
      %1927 = vmatpush1.msra.mxu0 %v1282
      %1928 = vmatprep.subr.mxu0 %v1280
      %1929 = vmatpush1.msra.mxu0 %v1279
      %1930 = vmatprep.subr.mxu0 %v1277
      %1931 = vmatpush1.msra.mxu0 %v1276
      %1932 = vmatprep.subr.mxu0 0.0
      %1933 = vmatpush2.msra.mxu0 0.0
      %1934 = vmatprep.subr.mxu0 0.0
      %1935 = vmatpush2.msra.mxu0 0.0
      %1936 = vmatprep.subr.mxu0 0.0
      %1937 = vmatpush2.msra.mxu0 0.0
      %1938 = vmatprep.subr.mxu0 0.0
      %1939 = vmatpush2.msra.mxu0 0.0
      %1940 = vmatprep.subr.mxu0 0.0
      %1941 = vmatpush2.msra.mxu0 0.0
      %1942 = vmatprep.subr.mxu0 0.0
      %1943 = vmatpush2.msra.mxu0 0.0
      %1944 = vmatprep.subr.mxu0 0.0
      %1945 = vmatpush2.msra.mxu0 0.0
      %1946 = vmatprep.subr.mxu0 0.0
      %1947 = vmatpush2.msra.mxu0 0.0
      %1948 = vmatprep.subr.mxu0 0.0
      %1949 = vmatpush2.msra.mxu0 0.0
      %1950 = vmatprep.subr.mxu0 0.0
      %1951 = vmatpush2.msra.mxu0 0.0
      %1952 = vmatprep.subr.mxu0 0.0
      %1953 = vmatpush2.msra.mxu0 0.0
      %1954 = vmatprep.subr.mxu0 0.0
      %1955 = vmatpush2.msra.mxu0 0.0
      %1956 = vmatprep.subr.mxu0 0.0
      %1957 = vmatpush2.msra.mxu0 0.0
      %1958 = vmatprep.subr.mxu0 0.0
      %1959 = vmatpush2.msra.mxu0 0.0
      %1960 = vmatprep.subr.mxu0 0.0
      %1961 = vmatpush2.msra.mxu0 0.0
      %1962 = vmatprep.subr.mxu0 0.0
      %1963 = vmatpush2.msra.mxu0 0.0
      %1964 = vmatprep.mubr.f32.mxu0 0.0
      %1965 = vmatmul.mubr.f32.gmra.mxu0 %v1898
      %v1966 = vpop.f32.mrf.mxu0
      %v1967 = vadd.f32 0.0, %v1966
      %v1968 = vpop.f32.mrf.mxu0
      %v1969 = vadd.f32 0.0, %v1968
      %1970 = vdwg.mxu0
      %1971 = vmatprep.subr.mxu0 0.0
      %1972 = vmatpush1.msra.mxu0 0.0
      %1973 = vmatprep.subr.mxu0 0.0
      %1974 = vmatpush1.msra.mxu0 0.0
      %1975 = vmatprep.subr.mxu0 0.0
      %1976 = vmatpush1.msra.mxu0 0.0
      %1977 = vmatprep.subr.mxu0 0.0
      %1978 = vmatpush1.msra.mxu0 0.0
      %1979 = vmatprep.subr.mxu0 0.0
      %1980 = vmatpush1.msra.mxu0 0.0
      %1981 = vmatprep.subr.mxu0 0.0
      %1982 = vmatpush1.msra.mxu0 0.0
      %1983 = vmatprep.subr.mxu0 0.0
      %1984 = vmatpush1.msra.mxu0 0.0
      %1985 = vmatprep.subr.mxu0 0.0
      %1986 = vmatpush1.msra.mxu0 0.0
      %1987 = vmatprep.subr.mxu0 0.0
      %1988 = vmatpush1.msra.mxu0 0.0
      %1989 = vmatprep.subr.mxu0 0.0
      %1990 = vmatpush1.msra.mxu0 0.0
      %1991 = vmatprep.subr.mxu0 0.0
      %1992 = vmatpush1.msra.mxu0 0.0
      %1993 = vmatprep.subr.mxu0 0.0
      %1994 = vmatpush1.msra.mxu0 0.0
      %1995 = vmatprep.subr.mxu0 0.0
      %1996 = vmatpush1.msra.mxu0 %v1287
      %1997 = vmatprep.subr.mxu0 0.0
      %1998 = vmatpush1.msra.mxu0 %v1284
      %1999 = vmatprep.subr.mxu0 0.0
      %2000 = vmatpush1.msra.mxu0 %v1281
      %2001 = vmatprep.subr.mxu0 0.0
      %2002 = vmatpush1.msra.mxu0 %v1278
      %2003 = vmatprep.subr.mxu0 0.0
      %2004 = vmatpush2.msra.mxu0 0.0
      %2005 = vmatprep.subr.mxu0 0.0
      %2006 = vmatpush2.msra.mxu0 0.0
      %2007 = vmatprep.subr.mxu0 0.0
      %2008 = vmatpush2.msra.mxu0 0.0
      %2009 = vmatprep.subr.mxu0 0.0
      %2010 = vmatpush2.msra.mxu0 0.0
      %2011 = vmatprep.subr.mxu0 0.0
      %2012 = vmatpush2.msra.mxu0 0.0
      %2013 = vmatprep.subr.mxu0 0.0
      %2014 = vmatpush2.msra.mxu0 0.0
      %2015 = vmatprep.subr.mxu0 0.0
      %2016 = vmatpush2.msra.mxu0 0.0
      %2017 = vmatprep.subr.mxu0 0.0
      %2018 = vmatpush2.msra.mxu0 0.0
      %2019 = vmatprep.subr.mxu0 0.0
      %2020 = vmatpush2.msra.mxu0 0.0
      %2021 = vmatprep.subr.mxu0 0.0
      %2022 = vmatpush2.msra.mxu0 0.0
      %2023 = vmatprep.subr.mxu0 0.0
      %2024 = vmatpush2.msra.mxu0 0.0
      %2025 = vmatprep.subr.mxu0 0.0
      %2026 = vmatpush2.msra.mxu0 0.0
      %2027 = vmatprep.subr.mxu0 0.0
      %2028 = vmatpush2.msra.mxu0 0.0
      %2029 = vmatprep.subr.mxu0 0.0
      %2030 = vmatpush2.msra.mxu0 0.0
      %2031 = vmatprep.subr.mxu0 0.0
      %2032 = vmatpush2.msra.mxu0 0.0
      %2033 = vmatprep.subr.mxu0 0.0
      %2034 = vmatpush2.msra.mxu0 0.0
      %2035 = vmatprep.mubr.f32.mxu0 0.0
      %2036 = vmatmul.mubr.f32.gmra.mxu0 %v1898
      %v2037 = vpop.f32.mrf.mxu0
      %v2038 = vadd.f32 0.0, %v2037
      %v2039 = vpop.f32.mrf.mxu0
      %2040 = vdwg.mxu0
      %v2041 = vlaneseq
      %v2042 = vshrl.u32 %v2041, 7
      %v2043 = vsub.s32 3, %v2042
      %v2044 = vrot.slane %v276, %v2043
      %v2045 = vlaneseq
      %v2046 = vshrl.u32 %v2045, 7
      %v2047 = vsub.s32 3, %v2046
      %v2048 = vrot.slane %v277, %v2047
      %v2049 = vlaneseq
      %v2050 = vshrl.u32 %v2049, 7
      %v2051 = vsub.s32 3, %v2050
      %v2052 = vrot.slane %v278, %v2051
      %v2053 = vsub.f32 %v2044, %v1967
      %v2054 = vsub.f32 %v2048, %v1969
      %v2055 = vsub.f32 %v2052, %v2038
      %v2056 = vmul.f32 %v2053, %v2053
      %v2057 = vmul.f32 %v2054, %v2054
      %v2058 = vmul.f32 %v2055, %v2055
      %v2059 = vmul.f32 %v2056, -200.0
      %v2060 = vmul.f32 %v2057, -200.0
      %v2061 = vmul.f32 %v2058, -200.0
      %v2062 = vmul.f32 %v2059, 1.442695
      %v2063 = vpow.pop %v2062
      %v2064 = vmul.f32 %v2060, 1.442695
      %v2065 = vpow.pop %v2064
      %v2066 = vmul.f32 %v2061, 1.442695
      %v2067 = vpow.pop %v2066
      %v2068 = vrot.slane %v2063, 4
      %v2069 = vadd.f32 %v2063, %v2068
      %v2070 = vrot.slane %v2069, 2
      %v2071 = vadd.f32 %v2069, %v2070
      %v2072 = vrot.slane %v2071, 1
      %v2073 = vadd.f32 %v2071, %v2072
      %v2074 = vrot.slane %v2065, 4
      %v2075 = vadd.f32 %v2065, %v2074
      %v2076 = vrot.slane %v2075, 2
      %v2077 = vadd.f32 %v2075, %v2076
      %v2078 = vrot.slane %v2077, 1
      %v2079 = vadd.f32 %v2077, %v2078
      %vm2080 = vcmask 785408
      %v2081 = vsel %vm2080, %v2067, 0.0
      %v2082 = vrot.slane %v2081, 4
      %v2083 = vadd.f32 %v2081, %v2082
      %v2084 = vrot.slane %v2083, 2
      %v2085 = vadd.f32 %v2083, %v2084
      %v2086 = vrot.slane %v2085, 1
      %v2087 = vadd.f32 %v2085, %v2086
      %v2089 = vsel %vm2080, %v2087, 0
      %2091 = vmatprep.subr.mxu0 %v1810
      %2092 = vmatpush1.msra.mxu0 %v1809
      %2093 = vmatprep.subr.mxu0 %v1807
      %2094 = vmatpush1.msra.mxu0 %v1806
      %2095 = vmatprep.subr.mxu0 %v1804
      %2096 = vmatpush1.msra.mxu0 %v1803
      %2097 = vmatprep.subr.mxu0 %v1801
      %2098 = vmatpush1.msra.mxu0 %v1800
      %2099 = vmatprep.subr.mxu0 %v1798
      %2100 = vmatpush1.msra.mxu0 %v1797
      %2101 = vmatprep.subr.mxu0 %v1795
      %2102 = vmatpush1.msra.mxu0 %v1794
      %2103 = vmatprep.subr.mxu0 %v1792
      %2104 = vmatpush1.msra.mxu0 %v1791
      %2105 = vmatprep.subr.mxu0 %v1789
      %2106 = vmatpush1.msra.mxu0 %v1788
      %2107 = vmatprep.subr.mxu0 %v1786
      %2108 = vmatpush1.msra.mxu0 %v1785
      %2109 = vmatprep.subr.mxu0 %v1783
      %2110 = vmatpush1.msra.mxu0 %v1782
      %2111 = vmatprep.subr.mxu0 %v1780
      %2112 = vmatpush1.msra.mxu0 %v1779
      %2113 = vmatprep.subr.mxu0 %v1777
      %2114 = vmatpush1.msra.mxu0 %v1776
      %2115 = vmatprep.subr.mxu0 %v1774
      %2116 = vmatpush1.msra.mxu0 %v1773
      %2117 = vmatprep.subr.mxu0 %v1771
      %2118 = vmatpush1.msra.mxu0 %v1770
      %2119 = vmatprep.subr.mxu0 %v1768
      %2120 = vmatpush1.msra.mxu0 %v1767
      %2121 = vmatprep.subr.mxu0 %v1765
      %2122 = vmatpush1.msra.mxu0 %v1764
      %2123 = vmatprep.subr.mxu0 %v1858
      %2124 = vmatpush2.msra.mxu0 %v1857
      %2125 = vmatprep.subr.mxu0 %v1855
      %2126 = vmatpush2.msra.mxu0 %v1854
      %2127 = vmatprep.subr.mxu0 %v1852
      %2128 = vmatpush2.msra.mxu0 %v1851
      %2129 = vmatprep.subr.mxu0 %v1849
      %2130 = vmatpush2.msra.mxu0 %v1848
      %2131 = vmatprep.subr.mxu0 %v1846
      %2132 = vmatpush2.msra.mxu0 %v1845
      %2133 = vmatprep.subr.mxu0 %v1843
      %2134 = vmatpush2.msra.mxu0 %v1842
      %2135 = vmatprep.subr.mxu0 %v1840
      %2136 = vmatpush2.msra.mxu0 %v1839
      %2137 = vmatprep.subr.mxu0 %v1837
      %2138 = vmatpush2.msra.mxu0 %v1836
      %2139 = vmatprep.subr.mxu0 %v1834
      %2140 = vmatpush2.msra.mxu0 %v1833
      %2141 = vmatprep.subr.mxu0 %v1831
      %2142 = vmatpush2.msra.mxu0 %v1830
      %2143 = vmatprep.subr.mxu0 %v1828
      %2144 = vmatpush2.msra.mxu0 %v1827
      %2145 = vmatprep.subr.mxu0 %v1825
      %2146 = vmatpush2.msra.mxu0 %v1824
      %2147 = vmatprep.subr.mxu0 %v1822
      %2148 = vmatpush2.msra.mxu0 %v1821
      %2149 = vmatprep.subr.mxu0 %v1819
      %2150 = vmatpush2.msra.mxu0 %v1818
      %2151 = vmatprep.subr.mxu0 %v1816
      %2152 = vmatpush2.msra.mxu0 %v1815
      %2153 = vmatprep.subr.mxu0 %v1813
      %2154 = vmatpush2.msra.mxu0 %v1812
      %2155 = vmatprep.mubr.f32.mxu0 %v2079
      %2156 = vmatmul.mubr.f32.gmra.mxu0 %v2073
      %v2157 = vpop.f32.mrf.mxu0
      %v2158 = vadd.f32 1e-12, %v2157
      %v2159 = vpop.f32.mrf.mxu0
      %v2160 = vadd.f32 1e-12, %v2159
      %2161 = vdwg.mxu0
      %2162 = vmatprep.subr.mxu0 0.0
      %2163 = vmatpush1.msra.mxu0 0.0
      %2164 = vmatprep.subr.mxu0 0.0
      %2165 = vmatpush1.msra.mxu0 0.0
      %2166 = vmatprep.subr.mxu0 0.0
      %2167 = vmatpush1.msra.mxu0 0.0
      %2168 = vmatprep.subr.mxu0 0.0
      %2169 = vmatpush1.msra.mxu0 0.0
      %2170 = vmatprep.subr.mxu0 %v1894
      %2171 = vmatpush1.msra.mxu0 %v1893
      %2172 = vmatprep.subr.mxu0 %v1891
      %2173 = vmatpush1.msra.mxu0 %v1890
      %2174 = vmatprep.subr.mxu0 %v1888
      %2175 = vmatpush1.msra.mxu0 %v1887
      %2176 = vmatprep.subr.mxu0 %v1885
      %2177 = vmatpush1.msra.mxu0 %v1884
      %2178 = vmatprep.subr.mxu0 %v1882
      %2179 = vmatpush1.msra.mxu0 %v1881
      %2180 = vmatprep.subr.mxu0 %v1879
      %2181 = vmatpush1.msra.mxu0 %v1878
      %2182 = vmatprep.subr.mxu0 %v1876
      %2183 = vmatpush1.msra.mxu0 %v1875
      %2184 = vmatprep.subr.mxu0 %v1873
      %2185 = vmatpush1.msra.mxu0 %v1872
      %2186 = vmatprep.subr.mxu0 %v1870
      %2187 = vmatpush1.msra.mxu0 %v1869
      %2188 = vmatprep.subr.mxu0 %v1867
      %2189 = vmatpush1.msra.mxu0 %v1866
      %2190 = vmatprep.subr.mxu0 %v1864
      %2191 = vmatpush1.msra.mxu0 %v1863
      %2192 = vmatprep.subr.mxu0 %v1861
      %2193 = vmatpush1.msra.mxu0 %v1860
      %2194 = vmatprep.subr.mxu0 0.0
      %2195 = vmatpush2.msra.mxu0 0.0
      %2196 = vmatprep.subr.mxu0 0.0
      %2197 = vmatpush2.msra.mxu0 0.0
      %2198 = vmatprep.subr.mxu0 0.0
      %2199 = vmatpush2.msra.mxu0 0.0
      %2200 = vmatprep.subr.mxu0 0.0
      %2201 = vmatpush2.msra.mxu0 0.0
      %2202 = vmatprep.subr.mxu0 0.0
      %2203 = vmatpush2.msra.mxu0 0.0
      %2204 = vmatprep.subr.mxu0 0.0
      %2205 = vmatpush2.msra.mxu0 0.0
      %2206 = vmatprep.subr.mxu0 0.0
      %2207 = vmatpush2.msra.mxu0 0.0
      %2208 = vmatprep.subr.mxu0 0.0
      %2209 = vmatpush2.msra.mxu0 0.0
      %2210 = vmatprep.subr.mxu0 0.0
      %2211 = vmatpush2.msra.mxu0 0.0
      %2212 = vmatprep.subr.mxu0 0.0
      %2213 = vmatpush2.msra.mxu0 0.0
      %2214 = vmatprep.subr.mxu0 0.0
      %2215 = vmatpush2.msra.mxu0 0.0
      %2216 = vmatprep.subr.mxu0 0.0
      %2217 = vmatpush2.msra.mxu0 0.0
      %2218 = vmatprep.subr.mxu0 0.0
      %2219 = vmatpush2.msra.mxu0 0.0
      %2220 = vmatprep.subr.mxu0 0.0
      %2221 = vmatpush2.msra.mxu0 0.0
      %2222 = vmatprep.subr.mxu0 0.0
      %2223 = vmatpush2.msra.mxu0 0.0
      %2224 = vmatprep.subr.mxu0 0.0
      %2225 = vmatpush2.msra.mxu0 0.0
      %2226 = vmatprep.mubr.f32.mxu0 0.0
      %2227 = vmatmul.mubr.f32.gmra.mxu0 %v2089
      %v2228 = vpop.f32.mrf.mxu0
      %v2229 = vadd.f32 %v2158, %v2228
      %v2230 = vpop.f32.mrf.mxu0
      %v2231 = vadd.f32 %v2160, %v2230
      %2232 = vdwg.mxu0
      %2233 = vmatprep.subr.mxu0 0.0
      %2234 = vmatpush1.msra.mxu0 %v1811
      %2235 = vmatprep.subr.mxu0 0.0
      %2236 = vmatpush1.msra.mxu0 %v1808
      %2237 = vmatprep.subr.mxu0 0.0
      %2238 = vmatpush1.msra.mxu0 %v1805
      %2239 = vmatprep.subr.mxu0 0.0
      %2240 = vmatpush1.msra.mxu0 %v1802
      %2241 = vmatprep.subr.mxu0 0.0
      %2242 = vmatpush1.msra.mxu0 %v1799
      %2243 = vmatprep.subr.mxu0 0.0
      %2244 = vmatpush1.msra.mxu0 %v1796
      %2245 = vmatprep.subr.mxu0 0.0
      %2246 = vmatpush1.msra.mxu0 %v1793
      %2247 = vmatprep.subr.mxu0 0.0
      %2248 = vmatpush1.msra.mxu0 %v1790
      %2249 = vmatprep.subr.mxu0 0.0
      %2250 = vmatpush1.msra.mxu0 %v1787
      %2251 = vmatprep.subr.mxu0 0.0
      %2252 = vmatpush1.msra.mxu0 %v1784
      %2253 = vmatprep.subr.mxu0 0.0
      %2254 = vmatpush1.msra.mxu0 %v1781
      %2255 = vmatprep.subr.mxu0 0.0
      %2256 = vmatpush1.msra.mxu0 %v1778
      %2257 = vmatprep.subr.mxu0 0.0
      %2258 = vmatpush1.msra.mxu0 %v1775
      %2259 = vmatprep.subr.mxu0 0.0
      %2260 = vmatpush1.msra.mxu0 %v1772
      %2261 = vmatprep.subr.mxu0 0.0
      %2262 = vmatpush1.msra.mxu0 %v1769
      %2263 = vmatprep.subr.mxu0 0.0
      %2264 = vmatpush1.msra.mxu0 %v1766
      %2265 = vmatprep.subr.mxu0 0.0
      %2266 = vmatpush2.msra.mxu0 %v1859
      %2267 = vmatprep.subr.mxu0 0.0
      %2268 = vmatpush2.msra.mxu0 %v1856
      %2269 = vmatprep.subr.mxu0 0.0
      %2270 = vmatpush2.msra.mxu0 %v1853
      %2271 = vmatprep.subr.mxu0 0.0
      %2272 = vmatpush2.msra.mxu0 %v1850
      %2273 = vmatprep.subr.mxu0 0.0
      %2274 = vmatpush2.msra.mxu0 %v1847
      %2275 = vmatprep.subr.mxu0 0.0
      %2276 = vmatpush2.msra.mxu0 %v1844
      %2277 = vmatprep.subr.mxu0 0.0
      %2278 = vmatpush2.msra.mxu0 %v1841
      %2279 = vmatprep.subr.mxu0 0.0
      %2280 = vmatpush2.msra.mxu0 %v1838
      %2281 = vmatprep.subr.mxu0 0.0
      %2282 = vmatpush2.msra.mxu0 %v1835
      %2283 = vmatprep.subr.mxu0 0.0
      %2284 = vmatpush2.msra.mxu0 %v1832
      %2285 = vmatprep.subr.mxu0 0.0
      %2286 = vmatpush2.msra.mxu0 %v1829
      %2287 = vmatprep.subr.mxu0 0.0
      %2288 = vmatpush2.msra.mxu0 %v1826
      %2289 = vmatprep.subr.mxu0 0.0
      %2290 = vmatpush2.msra.mxu0 %v1823
      %2291 = vmatprep.subr.mxu0 0.0
      %2292 = vmatpush2.msra.mxu0 %v1820
      %2293 = vmatprep.subr.mxu0 0.0
      %2294 = vmatpush2.msra.mxu0 %v1817
      %2295 = vmatprep.subr.mxu0 0.0
      %2296 = vmatpush2.msra.mxu0 %v1814
      %2297 = vmatprep.mubr.f32.mxu0 %v2079
      %2298 = vmatmul.mubr.f32.gmra.mxu0 %v2073
      %v2299 = vpop.f32.mrf.mxu0
      %v2300 = vadd.f32 1e-12, %v2299
      %v2301 = vpop.f32.mrf.mxu0
      %2302 = vdwg.mxu0
      %2303 = vmatprep.subr.mxu0 0.0
      %2304 = vmatpush1.msra.mxu0 0.0
      %2305 = vmatprep.subr.mxu0 0.0
      %2306 = vmatpush1.msra.mxu0 0.0
      %2307 = vmatprep.subr.mxu0 0.0
      %2308 = vmatpush1.msra.mxu0 0.0
      %2309 = vmatprep.subr.mxu0 0.0
      %2310 = vmatpush1.msra.mxu0 0.0
      %2311 = vmatprep.subr.mxu0 0.0
      %2312 = vmatpush1.msra.mxu0 %v1895
      %2313 = vmatprep.subr.mxu0 0.0
      %2314 = vmatpush1.msra.mxu0 %v1892
      %2315 = vmatprep.subr.mxu0 0.0
      %2316 = vmatpush1.msra.mxu0 %v1889
      %2317 = vmatprep.subr.mxu0 0.0
      %2318 = vmatpush1.msra.mxu0 %v1886
      %2319 = vmatprep.subr.mxu0 0.0
      %2320 = vmatpush1.msra.mxu0 %v1883
      %2321 = vmatprep.subr.mxu0 0.0
      %2322 = vmatpush1.msra.mxu0 %v1880
      %2323 = vmatprep.subr.mxu0 0.0
      %2324 = vmatpush1.msra.mxu0 %v1877
      %2325 = vmatprep.subr.mxu0 0.0
      %2326 = vmatpush1.msra.mxu0 %v1874
      %2327 = vmatprep.subr.mxu0 0.0
      %2328 = vmatpush1.msra.mxu0 %v1871
      %2329 = vmatprep.subr.mxu0 0.0
      %2330 = vmatpush1.msra.mxu0 %v1868
      %2331 = vmatprep.subr.mxu0 0.0
      %2332 = vmatpush1.msra.mxu0 %v1865
      %2333 = vmatprep.subr.mxu0 0.0
      %2334 = vmatpush1.msra.mxu0 %v1862
      %2335 = vmatprep.subr.mxu0 0.0
      %2336 = vmatpush2.msra.mxu0 0.0
      %2337 = vmatprep.subr.mxu0 0.0
      %2338 = vmatpush2.msra.mxu0 0.0
      %2339 = vmatprep.subr.mxu0 0.0
      %2340 = vmatpush2.msra.mxu0 0.0
      %2341 = vmatprep.subr.mxu0 0.0
      %2342 = vmatpush2.msra.mxu0 0.0
      %2343 = vmatprep.subr.mxu0 0.0
      %2344 = vmatpush2.msra.mxu0 0.0
      %2345 = vmatprep.subr.mxu0 0.0
      %2346 = vmatpush2.msra.mxu0 0.0
      %2347 = vmatprep.subr.mxu0 0.0
      %2348 = vmatpush2.msra.mxu0 0.0
      %2349 = vmatprep.subr.mxu0 0.0
      %2350 = vmatpush2.msra.mxu0 0.0
      %2351 = vmatprep.subr.mxu0 0.0
      %2352 = vmatpush2.msra.mxu0 0.0
      %2353 = vmatprep.subr.mxu0 0.0
      %2354 = vmatpush2.msra.mxu0 0.0
      %2355 = vmatprep.subr.mxu0 0.0
      %2356 = vmatpush2.msra.mxu0 0.0
      %2357 = vmatprep.subr.mxu0 0.0
      %2358 = vmatpush2.msra.mxu0 0.0
      %2359 = vmatprep.subr.mxu0 0.0
      %2360 = vmatpush2.msra.mxu0 0.0
      %2361 = vmatprep.subr.mxu0 0.0
      %2362 = vmatpush2.msra.mxu0 0.0
      %2363 = vmatprep.subr.mxu0 0.0
      %2364 = vmatpush2.msra.mxu0 0.0
      %2365 = vmatprep.subr.mxu0 0.0
      %2366 = vmatpush2.msra.mxu0 0.0
      %2367 = vmatprep.mubr.f32.mxu0 0.0
      %2368 = vmatmul.mubr.f32.gmra.mxu0 %v2089
      %v2369 = vpop.f32.mrf.mxu0
      %v2370 = vadd.f32 %v2300, %v2369
      %v2371 = vpop.f32.mrf.mxu0
      %2372 = vdwg.mxu0
      %v2373 = vrcp.pop %v2229
      %v2374 = vmul.f32 %v2073, %v2373
      %v2375 = vrcp.pop %v2231
      %v2376 = vmul.f32 %v2079, %v2375
      %v2377 = vrcp.pop %v2370
      %v2378 = vmul.f32 %v2087, %v2377
      %v2379 = vpack.c.bf16 %v2374, %v2374
      %v2380 = vpack.c.bf16 %v2376, %v2376
      %v2381 = vpack.c.bf16 %v2378, %v2378
      %v2382 = vld [vmem:[%s4] sm:$0xff]
      %v2383 = vld [vmem:[%s4 + $0x8] sm:$0xf]
      %v2384 = vld [vmem:[%s4 + $0xc] sm:$0xff]
      %v2385 = vld [vmem:[%s4 + $0x14] sm:$0xf]
      %v2386 = vld [vmem:[%s4 + $0x18] sm:$0xff]
      %v2387 = vld [vmem:[%s4 + $0x20] sm:$0xf]
      %v2388 = vld [vmem:[%s4 + $0x24] sm:$0xff]
      %v2389 = vld [vmem:[%s4 + $0x2c] sm:$0xf]
      %v2390 = vld [vmem:[%s4 + $0x30] sm:$0xff]
      %v2391 = vld [vmem:[%s4 + $0x38] sm:$0xf]
      %v2392 = vld [vmem:[%s4 + $0x3c] sm:$0xff]
      %v2393 = vld [vmem:[%s4 + $0x44] sm:$0xf]
      %v2394 = vld [vmem:[%s4 + $0x48] sm:$0xff]
      %v2395 = vld [vmem:[%s4 + $0x50] sm:$0xf]
      %v2396 = vld [vmem:[%s4 + $0x54] sm:$0xff]
      %v2397 = vld [vmem:[%s4 + $0x5c] sm:$0xf]
      %v2398 = vld [vmem:[%s4 + $0x60] sm:$0xff]
      %v2399 = vld [vmem:[%s4 + $0x68] sm:$0xf]
      %v2400 = vld [vmem:[%s4 + $0x6c] sm:$0xff]
      %v2401 = vld [vmem:[%s4 + $0x74] sm:$0xf]
      %v2402 = vld [vmem:[%s4 + $0x78] sm:$0xff]
      %v2403 = vld [vmem:[%s4 + $0x80] sm:$0xf]
      %v2404 = vld [vmem:[%s4 + $0x84] sm:$0xff]
      %v2405 = vld [vmem:[%s4 + $0x8c] sm:$0xf]
      %v2406 = vld [vmem:[%s4 + $0x90] sm:$0xff]
      %v2407 = vld [vmem:[%s4 + $0x98] sm:$0xf]
      %v2408 = vld [vmem:[%s4 + $0x9c] sm:$0xff]
      %v2409 = vld [vmem:[%s4 + $0xa4] sm:$0xf]
      %v2410 = vld [vmem:[%s4 + $0xa8] sm:$0xff]
      %v2411 = vld [vmem:[%s4 + $0xb0] sm:$0xf]
      %v2412 = vld [vmem:[%s4 + $0xb4] sm:$0xff]
      %v2413 = vld [vmem:[%s4 + $0xbc] sm:$0xf]
      %v2414 = vld [vmem:[%s4 + $0xc0] sm:$0xff]
      %v2415 = vld [vmem:[%s4 + $0xc8] sm:$0xf]
      %v2416 = vld [vmem:[%s4 + $0xcc] sm:$0xff]
      %v2417 = vld [vmem:[%s4 + $0xd4] sm:$0xf]
      %v2418 = vld [vmem:[%s4 + $0xd8] sm:$0xff]
      %v2419 = vld [vmem:[%s4 + $0xe0] sm:$0xf]
      %v2420 = vld [vmem:[%s4 + $0xe4] sm:$0xff]
      %v2421 = vld [vmem:[%s4 + $0xec] sm:$0xf]
      %v2422 = vld [vmem:[%s4 + $0xf0] sm:$0xff]
      %v2423 = vld [vmem:[%s4 + $0xf8] sm:$0xf]
      %v2424 = vld [vmem:[%s4 + $0xfc] sm:$0xff]
      %v2425 = vld [vmem:[%s4 + $0x104] sm:$0xf]
      %v2426 = vld [vmem:[%s4 + $0x108] sm:$0xff]
      %v2427 = vld [vmem:[%s4 + $0x110] sm:$0xf]
      %v2428 = vld [vmem:[%s4 + $0x114] sm:$0xff]
      %v2429 = vld [vmem:[%s4 + $0x11c] sm:$0xf]
      %v2430 = vld [vmem:[%s4 + $0x120] sm:$0xff]
      %v2431 = vld [vmem:[%s4 + $0x128] sm:$0xf]
      %v2432 = vld [vmem:[%s4 + $0x12c] sm:$0xff]
      %v2433 = vld [vmem:[%s4 + $0x134] sm:$0xf]
      %v2434 = vld [vmem:[%s4 + $0x138] sm:$0xff]
      %v2435 = vld [vmem:[%s4 + $0x140] sm:$0xf]
      %v2436 = vld [vmem:[%s4 + $0x144] sm:$0xff]
      %v2437 = vld [vmem:[%s4 + $0x14c] sm:$0xf]
      %v2438 = vld [vmem:[%s4 + $0x150] sm:$0xff]
      %v2439 = vld [vmem:[%s4 + $0x158] sm:$0xf]
      %v2440 = vld [vmem:[%s4 + $0x15c] sm:$0xff]
      %v2441 = vld [vmem:[%s4 + $0x164] sm:$0xf]
      %v2442 = vld [vmem:[%s4 + $0x168] sm:$0xff]
      %v2443 = vld [vmem:[%s4 + $0x170] sm:$0xf]
      %v2444 = vld [vmem:[%s4 + $0x174] sm:$0xff]
      %v2445 = vld [vmem:[%s4 + $0x17c] sm:$0xf]
      %v2446 = vld [vmem:[%s4 + $0x180] sm:$0xff]
      %v2447 = vld [vmem:[%s4 + $0x188] sm:$0xf]
      %v2448 = vld [vmem:[%s4 + $0x18c] sm:$0xff]
      %v2449 = vld [vmem:[%s4 + $0x194] sm:$0xf]
      %v2450 = vld [vmem:[%s4 + $0x198] sm:$0xff]
      %v2451 = vld [vmem:[%s4 + $0x1a0] sm:$0xf]
      %v2452 = vld [vmem:[%s4 + $0x1a4] sm:$0xff]
      %v2453 = vld [vmem:[%s4 + $0x1ac] sm:$0xf]
      %v2454 = vld [vmem:[%s4 + $0x1b0] sm:$0xff]
      %v2455 = vld [vmem:[%s4 + $0x1b8] sm:$0xf]
      %v2456 = vld [vmem:[%s4 + $0x1bc] sm:$0xff]
      %v2457 = vld [vmem:[%s4 + $0x1c4] sm:$0xf]
      %v2458 = vld [vmem:[%s4 + $0x1c8] sm:$0xff]
      %v2459 = vld [vmem:[%s4 + $0x1d0] sm:$0xf]
      %v2460 = vld [vmem:[%s4 + $0x1d4] sm:$0xff]
      %v2461 = vld [vmem:[%s4 + $0x1dc] sm:$0xf]
      %v2462 = vld [vmem:[%s4 + $0x1e0] sm:$0xff]
      %v2463 = vld [vmem:[%s4 + $0x1e8] sm:$0xf]
      %v2464 = vld [vmem:[%s4 + $0x1ec] sm:$0xff]
      %v2465 = vld [vmem:[%s4 + $0x1f4] sm:$0xf]
      %v2466 = vld [vmem:[%s4 + $0x1f8] sm:$0xff]
      %v2467 = vld [vmem:[%s4 + $0x200] sm:$0xf]
      %v2468 = vld [vmem:[%s4 + $0x204] sm:$0xff]
      %v2469 = vld [vmem:[%s4 + $0x20c] sm:$0xf]
      %v2558 = vunpack.c.l.b16 %v2382
      %v2559 = vunpack.c.h.b16 %v2382
      %v2560 = vunpack.c.l.b16 %v2383
      %v2561 = vunpack.c.l.b16 %v2384
      %v2562 = vunpack.c.h.b16 %v2384
      %v2563 = vunpack.c.l.b16 %v2385
      %v2564 = vunpack.c.l.b16 %v2386
      %v2565 = vunpack.c.h.b16 %v2386
      %v2566 = vunpack.c.l.b16 %v2387
      %v2567 = vunpack.c.l.b16 %v2388
      %v2568 = vunpack.c.h.b16 %v2388
      %v2569 = vunpack.c.l.b16 %v2389
      %v2570 = vunpack.c.l.b16 %v2390
      %v2571 = vunpack.c.h.b16 %v2390
      %v2572 = vunpack.c.l.b16 %v2391
      %v2573 = vunpack.c.l.b16 %v2392
      %v2574 = vunpack.c.h.b16 %v2392
      %v2575 = vunpack.c.l.b16 %v2393
      %v2576 = vunpack.c.l.b16 %v2394
      %v2577 = vunpack.c.h.b16 %v2394
      %v2578 = vunpack.c.l.b16 %v2395
      %v2579 = vunpack.c.l.b16 %v2396
      %v2580 = vunpack.c.h.b16 %v2396
      %v2581 = vunpack.c.l.b16 %v2397
      %v2582 = vunpack.c.l.b16 %v2398
      %v2583 = vunpack.c.h.b16 %v2398
      %v2584 = vunpack.c.l.b16 %v2399
      %v2585 = vunpack.c.l.b16 %v2400
      %v2586 = vunpack.c.h.b16 %v2400
      %v2587 = vunpack.c.l.b16 %v2401
      %v2588 = vunpack.c.l.b16 %v2402
      %v2589 = vunpack.c.h.b16 %v2402
      %v2590 = vunpack.c.l.b16 %v2403
      %v2591 = vunpack.c.l.b16 %v2404
      %v2592 = vunpack.c.h.b16 %v2404
      %v2593 = vunpack.c.l.b16 %v2405
      %v2594 = vunpack.c.l.b16 %v2406
      %v2595 = vunpack.c.h.b16 %v2406
      %v2596 = vunpack.c.l.b16 %v2407
      %v2597 = vunpack.c.l.b16 %v2408
      %v2598 = vunpack.c.h.b16 %v2408
      %v2599 = vunpack.c.l.b16 %v2409
      %v2600 = vunpack.c.l.b16 %v2410
      %v2601 = vunpack.c.h.b16 %v2410
      %v2602 = vunpack.c.l.b16 %v2411
      %v2603 = vunpack.c.l.b16 %v2412
      %v2604 = vunpack.c.h.b16 %v2412
      %v2605 = vunpack.c.l.b16 %v2413
      %v2606 = vunpack.c.l.b16 %v2414
      %v2607 = vunpack.c.h.b16 %v2414
      %v2608 = vunpack.c.l.b16 %v2415
      %v2609 = vunpack.c.l.b16 %v2416
      %v2610 = vunpack.c.h.b16 %v2416
      %v2611 = vunpack.c.l.b16 %v2417
      %v2612 = vunpack.c.l.b16 %v2418
      %v2613 = vunpack.c.h.b16 %v2418
      %v2614 = vunpack.c.l.b16 %v2419
      %v2615 = vunpack.c.l.b16 %v2420
      %v2616 = vunpack.c.h.b16 %v2420
      %v2617 = vunpack.c.l.b16 %v2421
      %v2618 = vunpack.c.l.b16 %v2422
      %v2619 = vunpack.c.h.b16 %v2422
      %v2620 = vunpack.c.l.b16 %v2423
      %v2621 = vunpack.c.l.b16 %v2424
      %v2622 = vunpack.c.h.b16 %v2424
      %v2623 = vunpack.c.l.b16 %v2425
      %v2624 = vunpack.c.l.b16 %v2426
      %v2625 = vunpack.c.h.b16 %v2426
      %v2626 = vunpack.c.l.b16 %v2427
      %v2627 = vunpack.c.l.b16 %v2428
      %v2628 = vunpack.c.h.b16 %v2428
      %v2629 = vunpack.c.l.b16 %v2429
      %v2630 = vunpack.c.l.b16 %v2430
      %v2631 = vunpack.c.h.b16 %v2430
      %v2632 = vunpack.c.l.b16 %v2431
      %v2633 = vunpack.c.l.b16 %v2432
      %v2634 = vunpack.c.h.b16 %v2432
      %v2635 = vunpack.c.l.b16 %v2433
      %v2636 = vunpack.c.l.b16 %v2434
      %v2637 = vunpack.c.h.b16 %v2434
      %v2638 = vunpack.c.l.b16 %v2435
      %v2639 = vunpack.c.l.b16 %v2436
      %v2640 = vunpack.c.h.b16 %v2436
      %v2641 = vunpack.c.l.b16 %v2437
      %v2642 = vunpack.c.l.b16 %v2438
      %v2643 = vunpack.c.h.b16 %v2438
      %v2644 = vunpack.c.l.b16 %v2439
      %v2645 = vunpack.c.l.b16 %v2440
      %v2646 = vunpack.c.h.b16 %v2440
      %v2647 = vunpack.c.l.b16 %v2441
      %v2648 = vunpack.c.l.b16 %v2442
      %v2649 = vunpack.c.h.b16 %v2442
      %v2650 = vunpack.c.l.b16 %v2443
      %v2651 = vunpack.c.l.b16 %v2444
      %v2652 = vunpack.c.h.b16 %v2444
      %v2653 = vunpack.c.l.b16 %v2445
      %v2654 = vunpack.c.l.b16 %v2446
      %v2655 = vunpack.c.h.b16 %v2446
      %v2656 = vunpack.c.l.b16 %v2447
      %v2657 = vunpack.c.l.b16 %v2448
      %v2658 = vunpack.c.h.b16 %v2448
      %v2659 = vunpack.c.l.b16 %v2449
      %v2660 = vunpack.c.l.b16 %v2450
      %v2661 = vunpack.c.h.b16 %v2450
      %v2662 = vunpack.c.l.b16 %v2451
      %v2663 = vunpack.c.l.b16 %v2452
      %v2664 = vunpack.c.h.b16 %v2452
      %v2665 = vunpack.c.l.b16 %v2453
      %v2666 = vunpack.c.l.b16 %v2454
      %v2667 = vunpack.c.h.b16 %v2454
      %v2668 = vunpack.c.l.b16 %v2455
      %v2669 = vunpack.c.l.b16 %v2456
      %v2670 = vunpack.c.h.b16 %v2456
      %v2671 = vunpack.c.l.b16 %v2457
      %v2672 = vunpack.c.l.b16 %v2458
      %v2673 = vunpack.c.h.b16 %v2458
      %v2674 = vunpack.c.l.b16 %v2459
      %v2675 = vunpack.c.l.b16 %v2460
      %v2676 = vunpack.c.h.b16 %v2460
      %v2677 = vunpack.c.l.b16 %v2461
      %v2678 = vunpack.c.l.b16 %v2462
      %v2679 = vunpack.c.h.b16 %v2462
      %v2680 = vunpack.c.l.b16 %v2463
      %v2681 = vunpack.c.l.b16 %v2464
      %v2682 = vunpack.c.h.b16 %v2464
      %v2683 = vunpack.c.l.b16 %v2465
      %v2684 = vunpack.c.l.b16 %v2466
      %v2685 = vunpack.c.h.b16 %v2466
      %v2686 = vunpack.c.l.b16 %v2467
      %v2687 = vunpack.c.l.b16 %v2468
      %v2688 = vunpack.c.h.b16 %v2468
      %v2689 = vunpack.c.l.b16 %v2469
      %v2690 = vpack.c.b16 %v2561, %v2558
      %v2691 = vpack.c.b16 %v2562, %v2559
      %v2692 = vpack.c.b16 %v2563, %v2560
      %v2693 = vpack.c.b16 %v2567, %v2564
      %v2694 = vpack.c.b16 %v2568, %v2565
      %v2695 = vpack.c.b16 %v2569, %v2566
      %v2696 = vpack.c.b16 %v2573, %v2570
      %v2697 = vpack.c.b16 %v2574, %v2571
      %v2698 = vpack.c.b16 %v2575, %v2572
      %v2699 = vpack.c.b16 %v2579, %v2576
      %v2700 = vpack.c.b16 %v2580, %v2577
      %v2701 = vpack.c.b16 %v2581, %v2578
      %v2702 = vpack.c.b16 %v2585, %v2582
      %v2703 = vpack.c.b16 %v2586, %v2583
      %v2704 = vpack.c.b16 %v2587, %v2584
      %v2705 = vpack.c.b16 %v2591, %v2588
      %v2706 = vpack.c.b16 %v2592, %v2589
      %v2707 = vpack.c.b16 %v2593, %v2590
      %v2708 = vpack.c.b16 %v2597, %v2594
      %v2709 = vpack.c.b16 %v2598, %v2595
      %v2710 = vpack.c.b16 %v2599, %v2596
      %v2711 = vpack.c.b16 %v2603, %v2600
      %v2712 = vpack.c.b16 %v2604, %v2601
      %v2713 = vpack.c.b16 %v2605, %v2602
      %v2714 = vpack.c.b16 %v2609, %v2606
      %v2715 = vpack.c.b16 %v2610, %v2607
      %v2716 = vpack.c.b16 %v2611, %v2608
      %v2717 = vpack.c.b16 %v2615, %v2612
      %v2718 = vpack.c.b16 %v2616, %v2613
      %v2719 = vpack.c.b16 %v2617, %v2614
      %v2720 = vpack.c.b16 %v2621, %v2618
      %v2721 = vpack.c.b16 %v2622, %v2619
      %v2722 = vpack.c.b16 %v2623, %v2620
      %v2723 = vpack.c.b16 %v2627, %v2624
      %v2724 = vpack.c.b16 %v2628, %v2625
      %v2725 = vpack.c.b16 %v2629, %v2626
      %v2726 = vpack.c.b16 %v2633, %v2630
      %v2727 = vpack.c.b16 %v2634, %v2631
      %v2728 = vpack.c.b16 %v2635, %v2632
      %v2729 = vpack.c.b16 %v2639, %v2636
      %v2730 = vpack.c.b16 %v2640, %v2637
      %v2731 = vpack.c.b16 %v2641, %v2638
      %v2732 = vpack.c.b16 %v2645, %v2642
      %v2733 = vpack.c.b16 %v2646, %v2643
      %v2734 = vpack.c.b16 %v2647, %v2644
      %v2735 = vpack.c.b16 %v2651, %v2648
      %v2736 = vpack.c.b16 %v2652, %v2649
      %v2737 = vpack.c.b16 %v2653, %v2650
      %v2738 = vpack.c.b16 %v2657, %v2654
      %v2739 = vpack.c.b16 %v2658, %v2655
      %v2740 = vpack.c.b16 %v2659, %v2656
      %v2741 = vpack.c.b16 %v2663, %v2660
      %v2742 = vpack.c.b16 %v2664, %v2661
      %v2743 = vpack.c.b16 %v2665, %v2662
      %v2744 = vpack.c.b16 %v2669, %v2666
      %v2745 = vpack.c.b16 %v2670, %v2667
      %v2746 = vpack.c.b16 %v2671, %v2668
      %v2747 = vpack.c.b16 %v2675, %v2672
      %v2748 = vpack.c.b16 %v2676, %v2673
      %v2749 = vpack.c.b16 %v2677, %v2674
      %v2750 = vpack.c.b16 %v2681, %v2678
      %v2751 = vpack.c.b16 %v2682, %v2679
      %v2752 = vpack.c.b16 %v2683, %v2680
      %v2753 = vpack.c.b16 %v2687, %v2684
      %v2754 = vpack.c.b16 %v2688, %v2685
      %v2755 = vpack.c.b16 %v2689, %v2686
      %v2825 = vrot.slane %v276, 4
      %v2826 = vrot.slane %v277, 4
      %v2827 = vrot.slane %v278, 4
      %v2832 = vsel %vm2080, %v2381, 0
      %2834 = vmatprep.subr.bf16.mxu0 %v2712
      %2835 = vmatpush1.bf16.msra.mxu0 %v2711
      %2836 = vmatprep.subr.bf16.mxu0 %v2709
      %2837 = vmatpush1.bf16.msra.mxu0 %v2708
      %2838 = vmatprep.subr.bf16.mxu0 %v2706
      %2839 = vmatpush1.bf16.msra.mxu0 %v2705
      %2840 = vmatprep.subr.bf16.mxu0 %v2703
      %2841 = vmatpush1.bf16.msra.mxu0 %v2702
      %2842 = vmatprep.subr.bf16.mxu0 %v2700
      %2843 = vmatpush1.bf16.msra.mxu0 %v2699
      %2844 = vmatprep.subr.bf16.mxu0 %v2697
      %2845 = vmatpush1.bf16.msra.mxu0 %v2696
      %2846 = vmatprep.subr.bf16.mxu0 %v2694
      %2847 = vmatpush1.bf16.msra.mxu0 %v2693
      %2848 = vmatprep.subr.bf16.mxu0 %v2691
      %2849 = vmatpush1.bf16.msra.mxu0 %v2690
      %2850 = vmatprep.subr.bf16.mxu0 %v2736
      %2851 = vmatpush2.bf16.msra.mxu0 %v2735
      %2852 = vmatprep.subr.bf16.mxu0 %v2733
      %2853 = vmatpush2.bf16.msra.mxu0 %v2732
      %2854 = vmatprep.subr.bf16.mxu0 %v2730
      %2855 = vmatpush2.bf16.msra.mxu0 %v2729
      %2856 = vmatprep.subr.bf16.mxu0 %v2727
      %2857 = vmatpush2.bf16.msra.mxu0 %v2726
      %2858 = vmatprep.subr.bf16.mxu0 %v2724
      %2859 = vmatpush2.bf16.msra.mxu0 %v2723
      %2860 = vmatprep.subr.bf16.mxu0 %v2721
      %2861 = vmatpush2.bf16.msra.mxu0 %v2720
      %2862 = vmatprep.subr.bf16.mxu0 %v2718
      %2863 = vmatpush2.bf16.msra.mxu0 %v2717
      %2864 = vmatprep.subr.bf16.mxu0 %v2715
      %2865 = vmatpush2.bf16.msra.mxu0 %v2714
      %2866 = vmatprep.mubr.bf16.mxu0 %v2380
      %2867 = vmatmul.mubr.bf16.gmra.mxu0 %v2379
      %v2868 = vpop.f32.mrf.mxu0
      %v2869 = vadd.f32 %v2825, %v2868
      %v2870 = vpop.f32.mrf.mxu0
      %v2871 = vadd.f32 %v2826, %v2870
      %v2872 = vpop.f32.mrf.mxu0
      %v2873 = vpop.f32.mrf.mxu0
      %2874 = vdwg.mxu0
      %2875 = vmatprep.subr.bf16.mxu0 0
      %2876 = vmatpush1.bf16.msra.mxu0 0
      %2877 = vmatprep.subr.bf16.mxu0 0
      %2878 = vmatpush1.bf16.msra.mxu0 0
      %2879 = vmatprep.subr.bf16.mxu0 %v2754
      %2880 = vmatpush1.bf16.msra.mxu0 %v2753
      %2881 = vmatprep.subr.bf16.mxu0 %v2751
      %2882 = vmatpush1.bf16.msra.mxu0 %v2750
      %2883 = vmatprep.subr.bf16.mxu0 %v2748
      %2884 = vmatpush1.bf16.msra.mxu0 %v2747
      %2885 = vmatprep.subr.bf16.mxu0 %v2745
      %2886 = vmatpush1.bf16.msra.mxu0 %v2744
      %2887 = vmatprep.subr.bf16.mxu0 %v2742
      %2888 = vmatpush1.bf16.msra.mxu0 %v2741
      %2889 = vmatprep.subr.bf16.mxu0 %v2739
      %2890 = vmatpush1.bf16.msra.mxu0 %v2738
      %2891 = vmatprep.subr.bf16.mxu0 0
      %2892 = vmatpush2.bf16.msra.mxu0 0
      %2893 = vmatprep.subr.bf16.mxu0 0
      %2894 = vmatpush2.bf16.msra.mxu0 0
      %2895 = vmatprep.subr.bf16.mxu0 0
      %2896 = vmatpush2.bf16.msra.mxu0 0
      %2897 = vmatprep.subr.bf16.mxu0 0
      %2898 = vmatpush2.bf16.msra.mxu0 0
      %2899 = vmatprep.subr.bf16.mxu0 0
      %2900 = vmatpush2.bf16.msra.mxu0 0
      %2901 = vmatprep.subr.bf16.mxu0 0
      %2902 = vmatpush2.bf16.msra.mxu0 0
      %2903 = vmatprep.subr.bf16.mxu0 0
      %2904 = vmatpush2.bf16.msra.mxu0 0
      %2905 = vmatprep.subr.bf16.mxu0 0
      %2906 = vmatpush2.bf16.msra.mxu0 0
      %2907 = vmatprep.mubr.bf16.mxu0 0
      %2908 = vmatmul.mubr.bf16.gmra.mxu0 %v2832
      %v2909 = vpop.f32.mrf.mxu0
      %v2910 = vadd.f32 %v2869, %v2909
      %v2911 = vpop.f32.mrf.mxu0
      %v2912 = vadd.f32 %v2871, %v2911
      %v2913 = vpop.f32.mrf.mxu0
      %v2914 = vpop.f32.mrf.mxu0
      %2915 = vdwg.mxu0
      %2916 = vmatprep.subr.bf16.mxu0 0
      %2917 = vmatpush1.bf16.msra.mxu0 %v2713
      %2918 = vmatprep.subr.bf16.mxu0 0
      %2919 = vmatpush1.bf16.msra.mxu0 %v2710
      %2920 = vmatprep.subr.bf16.mxu0 0
      %2921 = vmatpush1.bf16.msra.mxu0 %v2707
      %2922 = vmatprep.subr.bf16.mxu0 0
      %2923 = vmatpush1.bf16.msra.mxu0 %v2704
      %2924 = vmatprep.subr.bf16.mxu0 0
      %2925 = vmatpush1.bf16.msra.mxu0 %v2701
      %2926 = vmatprep.subr.bf16.mxu0 0
      %2927 = vmatpush1.bf16.msra.mxu0 %v2698
      %2928 = vmatprep.subr.bf16.mxu0 0
      %2929 = vmatpush1.bf16.msra.mxu0 %v2695
      %2930 = vmatprep.subr.bf16.mxu0 0
      %2931 = vmatpush1.bf16.msra.mxu0 %v2692
      %2932 = vmatprep.subr.bf16.mxu0 0
      %2933 = vmatpush2.bf16.msra.mxu0 %v2737
      %2934 = vmatprep.subr.bf16.mxu0 0
      %2935 = vmatpush2.bf16.msra.mxu0 %v2734
      %2936 = vmatprep.subr.bf16.mxu0 0
      %2937 = vmatpush2.bf16.msra.mxu0 %v2731
      %2938 = vmatprep.subr.bf16.mxu0 0
      %2939 = vmatpush2.bf16.msra.mxu0 %v2728
      %2940 = vmatprep.subr.bf16.mxu0 0
      %2941 = vmatpush2.bf16.msra.mxu0 %v2725
      %2942 = vmatprep.subr.bf16.mxu0 0
      %2943 = vmatpush2.bf16.msra.mxu0 %v2722
      %2944 = vmatprep.subr.bf16.mxu0 0
      %2945 = vmatpush2.bf16.msra.mxu0 %v2719
      %2946 = vmatprep.subr.bf16.mxu0 0
      %2947 = vmatpush2.bf16.msra.mxu0 %v2716
      %2948 = vmatprep.mubr.bf16.mxu0 %v2380
      %2949 = vmatmul.mubr.bf16.gmra.mxu0 %v2379
      %v2950 = vpop.f32.mrf.mxu0
      %v2951 = vadd.f32 %v2827, %v2950
      %v2952 = vpop.f32.mrf.mxu0
      %v2953 = vpop.f32.mrf.mxu0
      %v2954 = vpop.f32.mrf.mxu0
      %2955 = vdwg.mxu0
      %2956 = vmatprep.subr.bf16.mxu0 0
      %2957 = vmatpush1.bf16.msra.mxu0 0
      %2958 = vmatprep.subr.bf16.mxu0 0
      %2959 = vmatpush1.bf16.msra.mxu0 0
      %2960 = vmatprep.subr.bf16.mxu0 0
      %2961 = vmatpush1.bf16.msra.mxu0 %v2755
      %2962 = vmatprep.subr.bf16.mxu0 0
      %2963 = vmatpush1.bf16.msra.mxu0 %v2752
      %2964 = vmatprep.subr.bf16.mxu0 0
      %2965 = vmatpush1.bf16.msra.mxu0 %v2749
      %2966 = vmatprep.subr.bf16.mxu0 0
      %2967 = vmatpush1.bf16.msra.mxu0 %v2746
      %2968 = vmatprep.subr.bf16.mxu0 0
      %2969 = vmatpush1.bf16.msra.mxu0 %v2743
      %2970 = vmatprep.subr.bf16.mxu0 0
      %2971 = vmatpush1.bf16.msra.mxu0 %v2740
      %2972 = vmatprep.subr.bf16.mxu0 0
      %2973 = vmatpush2.bf16.msra.mxu0 0
      %2974 = vmatprep.subr.bf16.mxu0 0
      %2975 = vmatpush2.bf16.msra.mxu0 0
      %2976 = vmatprep.subr.bf16.mxu0 0
      %2977 = vmatpush2.bf16.msra.mxu0 0
      %2978 = vmatprep.subr.bf16.mxu0 0
      %2979 = vmatpush2.bf16.msra.mxu0 0
      %2980 = vmatprep.subr.bf16.mxu0 0
      %2981 = vmatpush2.bf16.msra.mxu0 0
      %2982 = vmatprep.subr.bf16.mxu0 0
      %2983 = vmatpush2.bf16.msra.mxu0 0
      %2984 = vmatprep.subr.bf16.mxu0 0
      %2985 = vmatpush2.bf16.msra.mxu0 0
      %2986 = vmatprep.subr.bf16.mxu0 0
      %2987 = vmatpush2.bf16.msra.mxu0 0
      %2988 = vmatprep.mubr.bf16.mxu0 0
      %2989 = vmatmul.mubr.bf16.gmra.mxu0 %v2832
      %v2990 = vpop.f32.mrf.mxu0
      %v2991 = vadd.f32 %v2951, %v2990
      %v2992 = vpop.f32.mrf.mxu0
      %v2993 = vpop.f32.mrf.mxu0
      %v2994 = vpop.f32.mrf.mxu0
      %2995 = vdwg.mxu0
      %v2996 = vmax.f32 %v2910, 0.0
      %v2997 = vmax.f32 %v2912, 0.0
      %v2998 = vmax.f32 %v2991, 0.0
      %v2999 = vpack.c.bf16 %v2996, %v2996
      %v3000 = vpack.c.bf16 %v2997, %v2997
      %v3001 = vpack.c.bf16 %v2998, %v2998
      %v3002 = vld [vmem:[%s5] sm:$0xff]
      %v3003 = vld [vmem:[%s5 + $0x8] sm:$0xff]
      %v3004 = vld [vmem:[%s5 + $0x10] sm:$0xff]
      %v3005 = vld [vmem:[%s5 + $0x18] sm:$0xff]
      %v3006 = vld [vmem:[%s5 + $0x20] sm:$0xff]
      %v3007 = vld [vmem:[%s5 + $0x28] sm:$0xff]
      %v3008 = vld [vmem:[%s5 + $0x30] sm:$0xff]
      %v3009 = vld [vmem:[%s5 + $0x38] sm:$0xff]
      %v3010 = vld [vmem:[%s5 + $0x40] sm:$0xff]
      %v3011 = vld [vmem:[%s5 + $0x48] sm:$0xff]
      %v3012 = vld [vmem:[%s5 + $0x50] sm:$0xff]
      %v3013 = vld [vmem:[%s5 + $0x58] sm:$0xff]
      %v3014 = vld [vmem:[%s5 + $0x60] sm:$0xff]
      %v3015 = vld [vmem:[%s5 + $0x68] sm:$0xff]
      %v3016 = vld [vmem:[%s5 + $0x70] sm:$0xff]
      %v3017 = vld [vmem:[%s5 + $0x78] sm:$0xff]
      %v3018 = vld [vmem:[%s5 + $0x80] sm:$0xff]
      %v3019 = vld [vmem:[%s5 + $0x88] sm:$0xff]
      %v3020 = vld [vmem:[%s5 + $0x90] sm:$0xff]
      %v3021 = vld [vmem:[%s5 + $0x98] sm:$0xff]
      %v3022 = vld [vmem:[%s5 + $0xa0] sm:$0xff]
      %v3023 = vld [vmem:[%s5 + $0xa8] sm:$0xff]
      %v3024 = vld [vmem:[%s5 + $0xb0] sm:$0xff]
      %v3025 = vld [vmem:[%s5 + $0xb8] sm:$0xff]
      %v3026 = vld [vmem:[%s5 + $0xc0] sm:$0xff]
      %v3027 = vld [vmem:[%s5 + $0xc8] sm:$0xff]
      %v3028 = vld [vmem:[%s5 + $0xd0] sm:$0xff]
      %v3029 = vld [vmem:[%s5 + $0xd8] sm:$0xff]
      %v3030 = vld [vmem:[%s5 + $0xe0] sm:$0xff]
      %v3031 = vld [vmem:[%s5 + $0xe8] sm:$0xff]
      %v3032 = vld [vmem:[%s5 + $0xf0] sm:$0xff]
      %v3033 = vld [vmem:[%s5 + $0xf8] sm:$0xff]
      %v3034 = vld [vmem:[%s5 + $0x100] sm:$0xff]
      %v3035 = vld [vmem:[%s5 + $0x108] sm:$0xff]
      %v3036 = vld [vmem:[%s5 + $0x110] sm:$0xff]
      %v3037 = vld [vmem:[%s5 + $0x118] sm:$0xff]
      %v3038 = vld [vmem:[%s5 + $0x120] sm:$0xff]
      %v3039 = vld [vmem:[%s5 + $0x128] sm:$0xff]
      %v3040 = vld [vmem:[%s5 + $0x130] sm:$0xff]
      %v3041 = vld [vmem:[%s5 + $0x138] sm:$0xff]
      %v3042 = vld [vmem:[%s5 + $0x140] sm:$0xff]
      %v3043 = vld [vmem:[%s5 + $0x148] sm:$0xff]
      %v3044 = vld [vmem:[%s5 + $0x150] sm:$0xff]
      %v3045 = vld [vmem:[%s5 + $0x158] sm:$0xff]
      %v3046 = vld [vmem:[%s5 + $0x160] sm:$0xff]
      %v3047 = vld [vmem:[%s5 + $0x168] sm:$0xff]
      %v3048 = vld [vmem:[%s5 + $0x170] sm:$0xff]
      %v3049 = vld [vmem:[%s5 + $0x178] sm:$0xff]
      %v3098 = vunpack.c.l.b16 %v3002
      %v3099 = vunpack.c.h.b16 %v3002
      %v3100 = vunpack.c.l.b16 %v3003
      %v3101 = vunpack.c.h.b16 %v3003
      %v3102 = vunpack.c.l.b16 %v3004
      %v3103 = vunpack.c.h.b16 %v3004
      %v3104 = vunpack.c.l.b16 %v3005
      %v3105 = vunpack.c.h.b16 %v3005
      %v3106 = vunpack.c.l.b16 %v3006
      %v3107 = vunpack.c.h.b16 %v3006
      %v3108 = vunpack.c.l.b16 %v3007
      %v3109 = vunpack.c.h.b16 %v3007
      %v3110 = vunpack.c.l.b16 %v3008
      %v3111 = vunpack.c.h.b16 %v3008
      %v3112 = vunpack.c.l.b16 %v3009
      %v3113 = vunpack.c.h.b16 %v3009
      %v3114 = vunpack.c.l.b16 %v3010
      %v3115 = vunpack.c.h.b16 %v3010
      %v3116 = vunpack.c.l.b16 %v3011
      %v3117 = vunpack.c.h.b16 %v3011
      %v3118 = vunpack.c.l.b16 %v3012
      %v3119 = vunpack.c.h.b16 %v3012
      %v3120 = vunpack.c.l.b16 %v3013
      %v3121 = vunpack.c.h.b16 %v3013
      %v3122 = vunpack.c.l.b16 %v3014
      %v3123 = vunpack.c.h.b16 %v3014
      %v3124 = vunpack.c.l.b16 %v3015
      %v3125 = vunpack.c.h.b16 %v3015
      %v3126 = vunpack.c.l.b16 %v3016
      %v3127 = vunpack.c.h.b16 %v3016
      %v3128 = vunpack.c.l.b16 %v3017
      %v3129 = vunpack.c.h.b16 %v3017
      %v3130 = vunpack.c.l.b16 %v3018
      %v3131 = vunpack.c.h.b16 %v3018
      %v3132 = vunpack.c.l.b16 %v3019
      %v3133 = vunpack.c.h.b16 %v3019
      %v3134 = vunpack.c.l.b16 %v3020
      %v3135 = vunpack.c.h.b16 %v3020
      %v3136 = vunpack.c.l.b16 %v3021
      %v3137 = vunpack.c.h.b16 %v3021
      %v3138 = vunpack.c.l.b16 %v3022
      %v3139 = vunpack.c.h.b16 %v3022
      %v3140 = vunpack.c.l.b16 %v3023
      %v3141 = vunpack.c.h.b16 %v3023
      %v3142 = vunpack.c.l.b16 %v3024
      %v3143 = vunpack.c.h.b16 %v3024
      %v3144 = vunpack.c.l.b16 %v3025
      %v3145 = vunpack.c.h.b16 %v3025
      %v3146 = vunpack.c.l.b16 %v3026
      %v3147 = vunpack.c.h.b16 %v3026
      %v3148 = vunpack.c.l.b16 %v3027
      %v3149 = vunpack.c.h.b16 %v3027
      %v3150 = vunpack.c.l.b16 %v3028
      %v3151 = vunpack.c.h.b16 %v3028
      %v3152 = vunpack.c.l.b16 %v3029
      %v3153 = vunpack.c.h.b16 %v3029
      %v3154 = vunpack.c.l.b16 %v3030
      %v3155 = vunpack.c.h.b16 %v3030
      %v3156 = vunpack.c.l.b16 %v3031
      %v3157 = vunpack.c.h.b16 %v3031
      %v3158 = vunpack.c.l.b16 %v3032
      %v3159 = vunpack.c.h.b16 %v3032
      %v3160 = vunpack.c.l.b16 %v3033
      %v3161 = vunpack.c.h.b16 %v3033
      %v3162 = vunpack.c.l.b16 %v3034
      %v3163 = vunpack.c.h.b16 %v3034
      %v3164 = vunpack.c.l.b16 %v3035
      %v3165 = vunpack.c.h.b16 %v3035
      %v3166 = vunpack.c.l.b16 %v3036
      %v3167 = vunpack.c.h.b16 %v3036
      %v3168 = vunpack.c.l.b16 %v3037
      %v3169 = vunpack.c.h.b16 %v3037
      %v3170 = vunpack.c.l.b16 %v3038
      %v3171 = vunpack.c.h.b16 %v3038
      %v3172 = vunpack.c.l.b16 %v3039
      %v3173 = vunpack.c.h.b16 %v3039
      %v3174 = vunpack.c.l.b16 %v3040
      %v3175 = vunpack.c.h.b16 %v3040
      %v3176 = vunpack.c.l.b16 %v3041
      %v3177 = vunpack.c.h.b16 %v3041
      %v3178 = vunpack.c.l.b16 %v3042
      %v3179 = vunpack.c.h.b16 %v3042
      %v3180 = vunpack.c.l.b16 %v3043
      %v3181 = vunpack.c.h.b16 %v3043
      %v3182 = vunpack.c.l.b16 %v3044
      %v3183 = vunpack.c.h.b16 %v3044
      %v3184 = vunpack.c.l.b16 %v3045
      %v3185 = vunpack.c.h.b16 %v3045
      %v3186 = vunpack.c.l.b16 %v3046
      %v3187 = vunpack.c.h.b16 %v3046
      %v3188 = vunpack.c.l.b16 %v3047
      %v3189 = vunpack.c.h.b16 %v3047
      %v3190 = vunpack.c.l.b16 %v3048
      %v3191 = vunpack.c.h.b16 %v3048
      %v3192 = vunpack.c.l.b16 %v3049
      %v3193 = vunpack.c.h.b16 %v3049
      %v3194 = vpack.c.b16 %v3100, %v3098
      %v3195 = vpack.c.b16 %v3101, %v3099
      %v3196 = vpack.c.b16 %v3104, %v3102
      %v3197 = vpack.c.b16 %v3105, %v3103
      %v3198 = vpack.c.b16 %v3108, %v3106
      %v3199 = vpack.c.b16 %v3109, %v3107
      %v3200 = vpack.c.b16 %v3112, %v3110
      %v3201 = vpack.c.b16 %v3113, %v3111
      %v3202 = vpack.c.b16 %v3116, %v3114
      %v3203 = vpack.c.b16 %v3117, %v3115
      %v3204 = vpack.c.b16 %v3120, %v3118
      %v3205 = vpack.c.b16 %v3121, %v3119
      %v3206 = vpack.c.b16 %v3124, %v3122
      %v3207 = vpack.c.b16 %v3125, %v3123
      %v3208 = vpack.c.b16 %v3128, %v3126
      %v3209 = vpack.c.b16 %v3129, %v3127
      %v3210 = vpack.c.b16 %v3132, %v3130
      %v3211 = vpack.c.b16 %v3133, %v3131
      %v3212 = vpack.c.b16 %v3136, %v3134
      %v3213 = vpack.c.b16 %v3137, %v3135
      %v3214 = vpack.c.b16 %v3140, %v3138
      %v3215 = vpack.c.b16 %v3141, %v3139
      %v3216 = vpack.c.b16 %v3144, %v3142
      %v3217 = vpack.c.b16 %v3145, %v3143
      %v3218 = vpack.c.b16 %v3148, %v3146
      %v3219 = vpack.c.b16 %v3149, %v3147
      %v3220 = vpack.c.b16 %v3152, %v3150
      %v3221 = vpack.c.b16 %v3153, %v3151
      %v3222 = vpack.c.b16 %v3156, %v3154
      %v3223 = vpack.c.b16 %v3157, %v3155
      %v3224 = vpack.c.b16 %v3160, %v3158
      %v3225 = vpack.c.b16 %v3161, %v3159
      %v3226 = vpack.c.b16 %v3164, %v3162
      %v3227 = vpack.c.b16 %v3165, %v3163
      %v3228 = vpack.c.b16 %v3168, %v3166
      %v3229 = vpack.c.b16 %v3169, %v3167
      %v3230 = vpack.c.b16 %v3172, %v3170
      %v3231 = vpack.c.b16 %v3173, %v3171
      %v3232 = vpack.c.b16 %v3176, %v3174
      %v3233 = vpack.c.b16 %v3177, %v3175
      %v3234 = vpack.c.b16 %v3180, %v3178
      %v3235 = vpack.c.b16 %v3181, %v3179
      %v3236 = vpack.c.b16 %v3184, %v3182
      %v3237 = vpack.c.b16 %v3185, %v3183
      %v3238 = vpack.c.b16 %v3188, %v3186
      %v3239 = vpack.c.b16 %v3189, %v3187
      %v3240 = vpack.c.b16 %v3192, %v3190
      %v3241 = vpack.c.b16 %v3193, %v3191
      %v3290 = vrot.slane %v276, 5
      %v3291 = vrot.slane %v277, 5
      %3294 = vmatprep.subr.bf16.mxu0 %v3209
      %3295 = vmatpush1.bf16.msra.mxu0 %v3208
      %3296 = vmatprep.subr.bf16.mxu0 %v3207
      %3297 = vmatpush1.bf16.msra.mxu0 %v3206
      %3298 = vmatprep.subr.bf16.mxu0 %v3205
      %3299 = vmatpush1.bf16.msra.mxu0 %v3204
      %3300 = vmatprep.subr.bf16.mxu0 %v3203
      %3301 = vmatpush1.bf16.msra.mxu0 %v3202
      %3302 = vmatprep.subr.bf16.mxu0 %v3201
      %3303 = vmatpush1.bf16.msra.mxu0 %v3200
      %3304 = vmatprep.subr.bf16.mxu0 %v3199
      %3305 = vmatpush1.bf16.msra.mxu0 %v3198
      %3306 = vmatprep.subr.bf16.mxu0 %v3197
      %3307 = vmatpush1.bf16.msra.mxu0 %v3196
      %3308 = vmatprep.subr.bf16.mxu0 %v3195
      %3309 = vmatpush1.bf16.msra.mxu0 %v3194
      %3310 = vmatprep.subr.bf16.mxu0 %v3225
      %3311 = vmatpush2.bf16.msra.mxu0 %v3224
      %3312 = vmatprep.subr.bf16.mxu0 %v3223
      %3313 = vmatpush2.bf16.msra.mxu0 %v3222
      %3314 = vmatprep.subr.bf16.mxu0 %v3221
      %3315 = vmatpush2.bf16.msra.mxu0 %v3220
      %3316 = vmatprep.subr.bf16.mxu0 %v3219
      %3317 = vmatpush2.bf16.msra.mxu0 %v3218
      %3318 = vmatprep.subr.bf16.mxu0 %v3217
      %3319 = vmatpush2.bf16.msra.mxu0 %v3216
      %3320 = vmatprep.subr.bf16.mxu0 %v3215
      %3321 = vmatpush2.bf16.msra.mxu0 %v3214
      %3322 = vmatprep.subr.bf16.mxu0 %v3213
      %3323 = vmatpush2.bf16.msra.mxu0 %v3212
      %3324 = vmatprep.subr.bf16.mxu0 %v3211
      %3325 = vmatpush2.bf16.msra.mxu0 %v3210
      %3326 = vmatprep.mubr.bf16.mxu0 %v3000
      %3327 = vmatmul.mubr.bf16.gmra.mxu0 %v2999
      %v3328 = vpop.f32.mrf.mxu0
      %v3329 = vadd.f32 %v3290, %v3328
      %v3330 = vpop.f32.mrf.mxu0
      %v3331 = vadd.f32 %v3291, %v3330
      %v3332 = vpop.f32.mrf.mxu0
      %v3333 = vpop.f32.mrf.mxu0
      %3334 = vdwg.mxu0
      %3335 = vmatprep.subr.bf16.mxu0 %v3241
      %3336 = vmatpush1.bf16.msra.mxu0 %v3240
      %3337 = vmatprep.subr.bf16.mxu0 %v3239
      %3338 = vmatpush1.bf16.msra.mxu0 %v3238
      %3339 = vmatprep.subr.bf16.mxu0 %v3237
      %3340 = vmatpush1.bf16.msra.mxu0 %v3236
      %3341 = vmatprep.subr.bf16.mxu0 %v3235
      %3342 = vmatpush1.bf16.msra.mxu0 %v3234
      %3343 = vmatprep.subr.bf16.mxu0 %v3233
      %3344 = vmatpush1.bf16.msra.mxu0 %v3232
      %3345 = vmatprep.subr.bf16.mxu0 %v3231
      %3346 = vmatpush1.bf16.msra.mxu0 %v3230
      %3347 = vmatprep.subr.bf16.mxu0 %v3229
      %3348 = vmatpush1.bf16.msra.mxu0 %v3228
      %3349 = vmatprep.subr.bf16.mxu0 %v3227
      %3350 = vmatpush1.bf16.msra.mxu0 %v3226
      %3351 = vmatprep.subr.bf16.mxu0 0
      %3352 = vmatpush2.bf16.msra.mxu0 0
      %3353 = vmatprep.subr.bf16.mxu0 0
      %3354 = vmatpush2.bf16.msra.mxu0 0
      %3355 = vmatprep.subr.bf16.mxu0 0
      %3356 = vmatpush2.bf16.msra.mxu0 0
      %3357 = vmatprep.subr.bf16.mxu0 0
      %3358 = vmatpush2.bf16.msra.mxu0 0
      %3359 = vmatprep.subr.bf16.mxu0 0
      %3360 = vmatpush2.bf16.msra.mxu0 0
      %3361 = vmatprep.subr.bf16.mxu0 0
      %3362 = vmatpush2.bf16.msra.mxu0 0
      %3363 = vmatprep.subr.bf16.mxu0 0
      %3364 = vmatpush2.bf16.msra.mxu0 0
      %3365 = vmatprep.subr.bf16.mxu0 0
      %3366 = vmatpush2.bf16.msra.mxu0 0
      %3367 = vmatprep.mubr.bf16.mxu0 0
      %3368 = vmatmul.mubr.bf16.gmra.mxu0 %v3001
      %v3369 = vpop.f32.mrf.mxu0
      %v3370 = vadd.f32 %v3329, %v3369
      %v3371 = vpop.f32.mrf.mxu0
      %v3372 = vadd.f32 %v3331, %v3371
      %v3373 = vpop.f32.mrf.mxu0
      %v3374 = vpop.f32.mrf.mxu0
      %3375 = vdwg.mxu0
      %v3376 = vmax.f32 %v3370, 0.0
      %v3377 = vmax.f32 %v3372, 0.0
      %v3378 = vpack.c.bf16 %v3376, %v3376
      %v3379 = vpack.c.bf16 %v3377, %v3377
      %v3380 = vld [vmem:[%s6] sm:$0xf]
      %v3381 = vld [vmem:[%s6 + $0x4] sm:$0xf]
      %v3382 = vld [vmem:[%s6 + $0x8] sm:$0xf]
      %v3383 = vld [vmem:[%s6 + $0xc] sm:$0xf]
      %v3384 = vld [vmem:[%s6 + $0x10] sm:$0xf]
      %v3385 = vld [vmem:[%s6 + $0x14] sm:$0xf]
      %v3386 = vld [vmem:[%s6 + $0x18] sm:$0xf]
      %v3387 = vld [vmem:[%s6 + $0x1c] sm:$0xf]
      %v3388 = vld [vmem:[%s6 + $0x20] sm:$0xf]
      %v3389 = vld [vmem:[%s6 + $0x24] sm:$0xf]
      %v3390 = vld [vmem:[%s6 + $0x28] sm:$0xf]
      %v3391 = vld [vmem:[%s6 + $0x2c] sm:$0xf]
      %v3392 = vld [vmem:[%s6 + $0x30] sm:$0xf]
      %v3393 = vld [vmem:[%s6 + $0x34] sm:$0xf]
      %v3394 = vld [vmem:[%s6 + $0x38] sm:$0xf]
      %v3395 = vld [vmem:[%s6 + $0x3c] sm:$0xf]
      %v3396 = vld [vmem:[%s6 + $0x40] sm:$0xf]
      %v3397 = vld [vmem:[%s6 + $0x44] sm:$0xf]
      %v3398 = vld [vmem:[%s6 + $0x48] sm:$0xf]
      %v3399 = vld [vmem:[%s6 + $0x4c] sm:$0xf]
      %v3400 = vld [vmem:[%s6 + $0x50] sm:$0xf]
      %v3401 = vld [vmem:[%s6 + $0x54] sm:$0xf]
      %v3402 = vld [vmem:[%s6 + $0x58] sm:$0xf]
      %v3403 = vld [vmem:[%s6 + $0x5c] sm:$0xf]
      %v3428 = vunpack.c.l.b16 %v3380
      %v3429 = vunpack.c.l.b16 %v3381
      %v3430 = vunpack.c.l.b16 %v3382
      %v3431 = vunpack.c.l.b16 %v3383
      %v3432 = vunpack.c.l.b16 %v3384
      %v3433 = vunpack.c.l.b16 %v3385
      %v3434 = vunpack.c.l.b16 %v3386
      %v3435 = vunpack.c.l.b16 %v3387
      %v3436 = vunpack.c.l.b16 %v3388
      %v3437 = vunpack.c.l.b16 %v3389
      %v3438 = vunpack.c.l.b16 %v3390
      %v3439 = vunpack.c.l.b16 %v3391
      %v3440 = vunpack.c.l.b16 %v3392
      %v3441 = vunpack.c.l.b16 %v3393
      %v3442 = vunpack.c.l.b16 %v3394
      %v3443 = vunpack.c.l.b16 %v3395
      %v3444 = vunpack.c.l.b16 %v3396
      %v3445 = vunpack.c.l.b16 %v3397
      %v3446 = vunpack.c.l.b16 %v3398
      %v3447 = vunpack.c.l.b16 %v3399
      %v3448 = vunpack.c.l.b16 %v3400
      %v3449 = vunpack.c.l.b16 %v3401
      %v3450 = vunpack.c.l.b16 %v3402
      %v3451 = vunpack.c.l.b16 %v3403
      %v3452 = vpack.c.b16 %v3429, %v3428
      %v3453 = vpack.c.b16 %v3431, %v3430
      %v3454 = vpack.c.b16 %v3433, %v3432
      %v3455 = vpack.c.b16 %v3435, %v3434
      %v3456 = vpack.c.b16 %v3437, %v3436
      %v3457 = vpack.c.b16 %v3439, %v3438
      %v3458 = vpack.c.b16 %v3441, %v3440
      %v3459 = vpack.c.b16 %v3443, %v3442
      %v3460 = vpack.c.b16 %v3445, %v3444
      %v3461 = vpack.c.b16 %v3447, %v3446
      %v3462 = vpack.c.b16 %v3449, %v3448
      %v3463 = vpack.c.b16 %v3451, %v3450
      %v3476 = vrot.slane %v276, 6
      %vm3478 = vcmask 523264
      %v3480 = vsel %vm3478, %v3379, 0
      %3482 = vmatprep.subr.bf16.mxu0 0
      %3483 = vmatpush1.bf16.msra.mxu0 %v3459
      %3484 = vmatprep.subr.bf16.mxu0 0
      %3485 = vmatpush1.bf16.msra.mxu0 %v3458
      %3486 = vmatprep.subr.bf16.mxu0 0
      %3487 = vmatpush1.bf16.msra.mxu0 %v3457
      %3488 = vmatprep.subr.bf16.mxu0 0
      %3489 = vmatpush1.bf16.msra.mxu0 %v3456
      %3490 = vmatprep.subr.bf16.mxu0 0
      %3491 = vmatpush1.bf16.msra.mxu0 %v3455
      %3492 = vmatprep.subr.bf16.mxu0 0
      %3493 = vmatpush1.bf16.msra.mxu0 %v3454
      %3494 = vmatprep.subr.bf16.mxu0 0
      %3495 = vmatpush1.bf16.msra.mxu0 %v3453
      %3496 = vmatprep.subr.bf16.mxu0 0
      %3497 = vmatpush1.bf16.msra.mxu0 %v3452
      %3498 = vmatprep.subr.bf16.mxu0 0
      %3499 = vmatpush2.bf16.msra.mxu0 0
      %3500 = vmatprep.subr.bf16.mxu0 0
      %3501 = vmatpush2.bf16.msra.mxu0 0
      %3502 = vmatprep.subr.bf16.mxu0 0
      %3503 = vmatpush2.bf16.msra.mxu0 0
      %3504 = vmatprep.subr.bf16.mxu0 0
      %3505 = vmatpush2.bf16.msra.mxu0 0
      %3506 = vmatprep.subr.bf16.mxu0 0
      %3507 = vmatpush2.bf16.msra.mxu0 %v3463
      %3508 = vmatprep.subr.bf16.mxu0 0
      %3509 = vmatpush2.bf16.msra.mxu0 %v3462
      %3510 = vmatprep.subr.bf16.mxu0 0
      %3511 = vmatpush2.bf16.msra.mxu0 %v3461
      %3512 = vmatprep.subr.bf16.mxu0 0
      %3513 = vmatpush2.bf16.msra.mxu0 %v3460
      %3514 = vmatprep.mubr.bf16.mxu0 %v3480
      %3515 = vmatmul.mubr.bf16.gmra.mxu0 %v3378
      %v3516 = vpop.f32.mrf.mxu0
      %v3517 = vadd.f32 %v3476, %v3516
      %v3518 = vpop.f32.mrf.mxu0
      %v3519 = vpop.f32.mrf.mxu0
      %v3520 = vpop.f32.mrf.mxu0
      %3521 = vdwg.mxu0
      %3522 = vst [vmem:[%s274] sm:$0x1] %v3517
      %p3523 = scmp.lt.s32.totalorder %s18, 1
      %s3524 = scalar_select %p3523, %s18, 1
      %s3525 = scalar_lea.vmem %s7, %s3524
      // Predicated region
      $region49: #{model_forward.1} parent=47 // pred_check
        %p3526 = pneg %p188
      $region50: #{model_forward.1} parent=47 // pred_check_branch
        %3528 = sbr.rel (%p3526) target = $region52
      $region51: #{model_forward.1} parent=47 // pred_region
        _
      $region52: #{model_forward.1} parent=47 // pred_fallthru
        _
    $region48: #{model_forward.1} parent=5 // pred_fallthru
      _
    %p3529 = scmp.le.s32.totalorder 2, %s13
    // Predicated region
    $region53: #{model_forward.1} parent=5 // pred_check
      %p3530 = pneg %p3529
    $region54: #{model_forward.1} parent=5 // pred_check_branch
      %3532 = sbr.rel (%p3530) target = $region56
    $region55: #{model_forward.1} parent=5 // pred_region
      %s3533 = ssub.s32 %s13, 2
      // Predicated region
      $region57: #{model_forward.1} parent=55 // pred_check
        %p3534 = pneg %p194
      $region58: #{model_forward.1} parent=55 // pred_check_branch
        %3536 = sbr.rel (%p3534) target = $region60
      $region59: #{model_forward.1} parent=55 // pred_region
        %p3537 = scmp.lt.s32.totalorder %s19, 1
        %s3538 = scalar_select %p3537, %s19, 1
        %s3539 = scalar_lea.vmem %s7, %s3538
      $region60: #{model_forward.1} parent=55 // pred_fallthru
        _
    $region56: #{model_forward.1} parent=5 // pred_fallthru
      _
  $region6: #{model_forward.1} parent=0 // loop_footer
    %s17 = sadd.s32 1, %s13
  $region7: #{model_forward.1} parent=0 // loop_footer_branch
    %12 = sbr.rel target = $region3
  $region8: #{model_forward.1} parent=0 // loop_exit
    _

</llo_original>
